<compile_context>
chip_gen: v7x
topology: tpu7x:2x2x1
jax: 0.10.0
libtpu: 0.0.40
codegen_flags: <defaults>
</compile_context>

<pallas_src>
import jax
import jax.numpy as jnp
from jax.experimental import pallas as pl
from jax.experimental.pallas import tpu as pltpu

HIDDEN = 256


def actor_kernel(scale_ref,
                 x_ref,
                 w1_ref, b1_ref,
                 w2_ref, b2_ref,
                 w3_ref, b3_ref,
                 w4_ref, b4_ref,
                 w5_ref, b5_ref,
                 out_ref):
    scale = scale_ref[0, 0]                       # max_action, read from SMEM

    def linear(x, w_ref, b_ref):
        # bf16 MXU inputs, f32 accumulation, f32 bias add.
        return jnp.dot(x.astype(jnp.bfloat16),
                       w_ref[...].astype(jnp.bfloat16),
                       preferred_element_type=jnp.float32) + b_ref[...]

    a = jnp.maximum(linear(x_ref[...], w1_ref, b1_ref), 0.0)
    a = jnp.maximum(linear(a, w2_ref, b2_ref), 0.0)
    a = jnp.maximum(linear(a, w3_ref, b3_ref), 0.0)
    a = jnp.maximum(linear(a, w4_ref, b4_ref), 0.0)
    # Final layer: Linear + tanh (EUP), scaled by max_action.
    out_ref[...] = (scale * jnp.tanh(linear(a, w5_ref, b5_ref))).astype(out_ref.dtype)


def _round_up(x, m):
    return ((x + m - 1) // m) * m


def _choose_tile_b(B, max_tile=2048):
    """Batch tile: as large as possible (amortize grid-step overhead), but keep
    >=2 tiles when B allows so the "parallel" axis shards across both v7x
    TensorCores; multiples of 256 for the v6e/v7x MXU."""
    if B <= 256:
        return B                                   # single full-extent tile (always legal)
    return min(max_tile, _round_up(pl.cdiv(B, 2), 256))


def _resident_spec(arr):
    """Full-array block with a constant index -> fetched once, stays VMEM-resident
    across batch tiles; single-buffered since the block never changes."""
    try:
        return pl.BlockSpec(arr.shape, lambda i: (0, 0),
                            pipeline_mode=pl.Buffered(1))
    except (TypeError, AttributeError):            # older jax without pipeline_mode
        return pl.BlockSpec(arr.shape, lambda i: (0, 0))


def actor_forward(state, params, max_action, *, max_tile_b=2048):
    """state: [B, state_dim] float32 -> action: [B, action_dim] float32."""
    B, state_dim = state.shape
    action_dim = params["w5"].shape[1]

    # Lane-dense output path: pad the last layer to a multiple of 128 lanes so
    # output stores are unmasked; slice back to action_dim below.
    n_out = _round_up(action_dim, 128)
    w5, b5 = params["w5"], params["b5"]
    if n_out != action_dim:
        w5 = jnp.pad(w5, ((0, 0), (0, n_out - action_dim)))
        b5 = jnp.pad(b5, ((0, 0), (0, n_out - action_dim)))

    tile_b = _choose_tile_b(B, max_tile_b)
    grid = (pl.cdiv(B, tile_b),)

    # max_action as a runtime (1,1) SMEM scalar -> no recompile when it changes.
    scale = jnp.asarray(max_action, jnp.float32).reshape(1, 1)

    weight_args = (
        params["w1"], params["b1"],
        params["w2"], params["b2"],
        params["w3"], params["b3"],
        params["w4"], params["b4"],
        w5, b5,
    )

    in_specs = [
        pl.BlockSpec((1, 1), lambda i: (0, 0),
                     memory_space=pltpu.MemorySpace.SMEM),       # max_action
        pl.BlockSpec((tile_b, state_dim), lambda i: (i, 0)),     # state tile
    ] + [_resident_spec(a) for a in weight_args]

    out_padded = pl.pallas_call(
        actor_kernel,
        out_shape=jax.ShapeDtypeStruct((B, n_out), jnp.float32),
        grid=grid,
        in_specs=in_specs,
        out_specs=pl.BlockSpec((tile_b, n_out), lambda i: (i, 0)),
        compiler_params=pltpu.CompilerParams(
            dimension_semantics=("parallel",)),
    )(scale, state, *weight_args)

    return out_padded[:, :action_dim]


def init_actor_params(key, state_dim, action_dim):
    """Deterministic init mimicking PyTorch nn.Linear (uniform +/- 1/sqrt(fan_in)).

    Weights are stored [in, out] in float32 (f32 fidelity vs the PyTorch Actor;
    they are cast to bf16 only at the MXU inputs inside the kernel). Biases are
    f32 and kept 2D [1, out] for clean broadcasting.
    """
    dims = [(state_dim, HIDDEN), (HIDDEN, HIDDEN), (HIDDEN, HIDDEN),
            (HIDDEN, HIDDEN), (HIDDEN, action_dim)]
    params = {}
    keys = jax.random.split(key, 2 * len(dims))
    for i, (fan_in, fan_out) in enumerate(dims):
        bound = 1.0 / jnp.sqrt(jnp.float32(fan_in))
        w = jax.random.uniform(keys[2 * i], (fan_in, fan_out), jnp.float32,
                               -bound, bound)
        b = jax.random.uniform(keys[2 * i + 1], (1, fan_out), jnp.float32,
                               -bound, bound)
        params[f"w{i+1}"] = w
        params[f"b{i+1}"] = b
    return params


def actor_reference(state, params, max_action):
    """Pure-JAX reference with the same bf16-MXU-input / f32-accumulate numerics."""
    def lin(x, w, b):
        return jnp.dot(x.astype(jnp.bfloat16), w.astype(jnp.bfloat16),
                       preferred_element_type=jnp.float32) + b
    a = jnp.maximum(lin(state, params["w1"], params["b1"]), 0.0)
    a = jnp.maximum(lin(a, params["w2"], params["b2"]), 0.0)
    a = jnp.maximum(lin(a, params["w3"], params["b3"]), 0.0)
    a = jnp.maximum(lin(a, params["w4"], params["b4"]), 0.0)
    return max_action * jnp.tanh(lin(a, params["w5"], params["b5"]))


if __name__ == "__main__":
    key = jax.random.PRNGKey(0)
    k_param, k_state = jax.random.split(key)

    state_dim = 16
    action_dim = 8
    max_action = 2.0

    params = init_actor_params(k_param, state_dim, action_dim)

    # Batch large enough to exercise the two-tile "parallel" grid (tile_b=512).
    batch = 1024
    state = jax.random.normal(k_state, (batch, state_dim), jnp.float32)
    out = jax.block_until_ready(actor_forward(state, params, max_action))
    ref = actor_reference(state, params, max_action)
    assert out.shape == (batch, action_dim)
    assert bool(jnp.allclose(out, ref, atol=2e-2, rtol=2e-2)), "mismatch vs reference"
    assert bool(jnp.all(jnp.abs(out) <= max_action + 1e-6)), "tanh scaling violated"

    # Small ragged batch: single full-extent tile path (B not a multiple of 8).
    state_s = jax.random.normal(jax.random.PRNGKey(1), (10, state_dim), jnp.float32)
    out_s = jax.block_until_ready(actor_forward(state_s, params, max_action))
    ref_s = actor_reference(state_s, params, max_action)
    assert out_s.shape == (10, action_dim)
    assert bool(jnp.allclose(out_s, ref_s, atol=2e-2, rtol=2e-2)), "mismatch (small batch)"

    print("KERNEL_OK")
</pallas_src>

<mosaic_0001>
module attributes {stable_mosaic.version = 11 : i64} {
  func.func @actor_kernel(%arg0: i32, %arg1: memref<1x1xf32, #tpu.memory_space<smem>>, %arg2: memref<512x16xf32, #tpu.memory_space<vmem>>, %arg3: memref<16x256xf32, #tpu.memory_space<vmem>>, %arg4: memref<1x256xf32, #tpu.memory_space<vmem>>, %arg5: memref<256x256xf32, #tpu.memory_space<vmem>>, %arg6: memref<1x256xf32, #tpu.memory_space<vmem>>, %arg7: memref<256x256xf32, #tpu.memory_space<vmem>>, %arg8: memref<1x256xf32, #tpu.memory_space<vmem>>, %arg9: memref<256x256xf32, #tpu.memory_space<vmem>>, %arg10: memref<1x256xf32, #tpu.memory_space<vmem>>, %arg11: memref<256x128xf32, #tpu.memory_space<vmem>>, %arg12: memref<1x128xf32, #tpu.memory_space<vmem>>, %arg13: memref<512x128xf32, #tpu.memory_space<vmem>>) attributes {dimension_semantics = [#tpu.dimension_semantics<parallel>], iteration_bounds = array<i64: 2>, scalar_prefetch = 0 : i64, scratch_operands = 0 : i64, tpu.core_type = #tpu.core_type<tc>, window_params = [{transform_indices = @transform_0, window_bounds = array<i64: 1, 1>}, {transform_indices = @transform_1, window_bounds = array<i64: 512, 16>}, {pipeline_mode = #tpu.pipeline_mode<synchronous>, transform_indices = @transform_2, window_bounds = array<i64: 16, 256>}, {pipeline_mode = #tpu.pipeline_mode<synchronous>, transform_indices = @transform_3, window_bounds = array<i64: 1, 256>}, {pipeline_mode = #tpu.pipeline_mode<synchronous>, transform_indices = @transform_4, window_bounds = array<i64: 256, 256>}, {pipeline_mode = #tpu.pipeline_mode<synchronous>, transform_indices = @transform_5, window_bounds = array<i64: 1, 256>}, {pipeline_mode = #tpu.pipeline_mode<synchronous>, transform_indices = @transform_6, window_bounds = array<i64: 256, 256>}, {pipeline_mode = #tpu.pipeline_mode<synchronous>, transform_indices = @transform_7, window_bounds = array<i64: 1, 256>}, {pipeline_mode = #tpu.pipeline_mode<synchronous>, transform_indices = @transform_8, window_bounds = array<i64: 256, 256>}, {pipeline_mode = #tpu.pipeline_mode<synchronous>, transform_indices = @transform_9, window_bounds = array<i64: 1, 256>}, {pipeline_mode = #tpu.pipeline_mode<synchronous>, transform_indices = @transform_10, window_bounds = array<i64: 256, 128>}, {pipeline_mode = #tpu.pipeline_mode<synchronous>, transform_indices = @transform_11, window_bounds = array<i64: 1, 128>}, {transform_indices = @transform_12, window_bounds = array<i64: 512, 128>}]} {
    %c0 = arith.constant 0 : index
    %c0_0 = arith.constant 0 : index
    %0 = memref.load %arg1[%c0, %c0_0] : memref<1x1xf32, #tpu.memory_space<smem>>
    %c0_1 = arith.constant 0 : index
    %c0_2 = arith.constant 0 : index
    %1 = vector.load %arg2[%c0_1, %c0_2] : memref<512x16xf32, #tpu.memory_space<vmem>>, vector<512x16xf32>
    %2 = arith.truncf %1 : vector<512x16xf32> to vector<512x16xbf16>
    %c0_3 = arith.constant 0 : index
    %c0_4 = arith.constant 0 : index
    %3 = vector.load %arg3[%c0_3, %c0_4] : memref<16x256xf32, #tpu.memory_space<vmem>>, vector<16x256xf32>
    %4 = arith.truncf %3 : vector<16x256xf32> to vector<16x256xbf16>
    %cst = arith.constant dense<0.000000e+00> : vector<512x256xf32>
    %5 = tpu.matmul %2, %4, %cst {dimension_numbers = #tpu.dot_dimension_numbers<[1], [0], [0], [1], [0, 0, 1, 1], [], []>} : vector<512x16xbf16>, vector<16x256xbf16>, vector<512x256xf32> -> vector<512x256xf32>
    %c0_5 = arith.constant 0 : index
    %c0_6 = arith.constant 0 : index
    %6 = vector.load %arg4[%c0_5, %c0_6] : memref<1x256xf32, #tpu.memory_space<vmem>>, vector<1x256xf32>
    %7 = vector.broadcast %6 : vector<1x256xf32> to vector<512x256xf32>
    %8 = arith.addf %5, %7 : vector<512x256xf32>
    %cst_7 = arith.constant 0.000000e+00 : f32
    %9 = vector.broadcast %cst_7 : f32 to vector<512x256xf32>
    %10 = arith.maximumf %8, %9 : vector<512x256xf32>
    %11 = arith.truncf %10 : vector<512x256xf32> to vector<512x256xbf16>
    %c0_8 = arith.constant 0 : index
    %c0_9 = arith.constant 0 : index
    %12 = vector.load %arg5[%c0_8, %c0_9] : memref<256x256xf32, #tpu.memory_space<vmem>>, vector<256x256xf32>
    %13 = arith.truncf %12 : vector<256x256xf32> to vector<256x256xbf16>
    %cst_10 = arith.constant dense<0.000000e+00> : vector<512x256xf32>
    %14 = tpu.matmul %11, %13, %cst_10 {dimension_numbers = #tpu.dot_dimension_numbers<[1], [0], [0], [1], [0, 0, 1, 1], [], []>} : vector<512x256xbf16>, vector<256x256xbf16>, vector<512x256xf32> -> vector<512x256xf32>
    %c0_11 = arith.constant 0 : index
    %c0_12 = arith.constant 0 : index
    %15 = vector.load %arg6[%c0_11, %c0_12] : memref<1x256xf32, #tpu.memory_space<vmem>>, vector<1x256xf32>
    %16 = vector.broadcast %15 : vector<1x256xf32> to vector<512x256xf32>
    %17 = arith.addf %14, %16 : vector<512x256xf32>
    %cst_13 = arith.constant 0.000000e+00 : f32
    %18 = vector.broadcast %cst_13 : f32 to vector<512x256xf32>
    %19 = arith.maximumf %17, %18 : vector<512x256xf32>
    %20 = arith.truncf %19 : vector<512x256xf32> to vector<512x256xbf16>
    %c0_14 = arith.constant 0 : index
    %c0_15 = arith.constant 0 : index
    %21 = vector.load %arg7[%c0_14, %c0_15] : memref<256x256xf32, #tpu.memory_space<vmem>>, vector<256x256xf32>
    %22 = arith.truncf %21 : vector<256x256xf32> to vector<256x256xbf16>
    %cst_16 = arith.constant dense<0.000000e+00> : vector<512x256xf32>
    %23 = tpu.matmul %20, %22, %cst_16 {dimension_numbers = #tpu.dot_dimension_numbers<[1], [0], [0], [1], [0, 0, 1, 1], [], []>} : vector<512x256xbf16>, vector<256x256xbf16>, vector<512x256xf32> -> vector<512x256xf32>
    %c0_17 = arith.constant 0 : index
    %c0_18 = arith.constant 0 : index
    %24 = vector.load %arg8[%c0_17, %c0_18] : memref<1x256xf32, #tpu.memory_space<vmem>>, vector<1x256xf32>
    %25 = vector.broadcast %24 : vector<1x256xf32> to vector<512x256xf32>
    %26 = arith.addf %23, %25 : vector<512x256xf32>
    %cst_19 = arith.constant 0.000000e+00 : f32
    %27 = vector.broadcast %cst_19 : f32 to vector<512x256xf32>
    %28 = arith.maximumf %26, %27 : vector<512x256xf32>
    %29 = arith.truncf %28 : vector<512x256xf32> to vector<512x256xbf16>
    %c0_20 = arith.constant 0 : index
    %c0_21 = arith.constant 0 : index
    %30 = vector.load %arg9[%c0_20, %c0_21] : memref<256x256xf32, #tpu.memory_space<vmem>>, vector<256x256xf32>
    %31 = arith.truncf %30 : vector<256x256xf32> to vector<256x256xbf16>
    %cst_22 = arith.constant dense<0.000000e+00> : vector<512x256xf32>
    %32 = tpu.matmul %29, %31, %cst_22 {dimension_numbers = #tpu.dot_dimension_numbers<[1], [0], [0], [1], [0, 0, 1, 1], [], []>} : vector<512x256xbf16>, vector<256x256xbf16>, vector<512x256xf32> -> vector<512x256xf32>
    %c0_23 = arith.constant 0 : index
    %c0_24 = arith.constant 0 : index
    %33 = vector.load %arg10[%c0_23, %c0_24] : memref<1x256xf32, #tpu.memory_space<vmem>>, vector<1x256xf32>
    %34 = vector.broadcast %33 : vector<1x256xf32> to vector<512x256xf32>
    %35 = arith.addf %32, %34 : vector<512x256xf32>
    %cst_25 = arith.constant 0.000000e+00 : f32
    %36 = vector.broadcast %cst_25 : f32 to vector<512x256xf32>
    %37 = arith.maximumf %35, %36 : vector<512x256xf32>
    %38 = arith.truncf %37 : vector<512x256xf32> to vector<512x256xbf16>
    %c0_26 = arith.constant 0 : index
    %c0_27 = arith.constant 0 : index
    %39 = vector.load %arg11[%c0_26, %c0_27] : memref<256x128xf32, #tpu.memory_space<vmem>>, vector<256x128xf32>
    %40 = arith.truncf %39 : vector<256x128xf32> to vector<256x128xbf16>
    %cst_28 = arith.constant dense<0.000000e+00> : vector<512x128xf32>
    %41 = tpu.matmul %38, %40, %cst_28 {dimension_numbers = #tpu.dot_dimension_numbers<[1], [0], [0], [1], [0, 0, 1, 1], [], []>} : vector<512x256xbf16>, vector<256x128xbf16>, vector<512x128xf32> -> vector<512x128xf32>
    %c0_29 = arith.constant 0 : index
    %c0_30 = arith.constant 0 : index
    %42 = vector.load %arg12[%c0_29, %c0_30] : memref<1x128xf32, #tpu.memory_space<vmem>>, vector<1x128xf32>
    %43 = vector.broadcast %42 : vector<1x128xf32> to vector<512x128xf32>
    %44 = arith.addf %41, %43 : vector<512x128xf32>
    %45 = math.tanh %44 : vector<512x128xf32>
    %46 = vector.broadcast %0 : f32 to vector<512x128xf32>
    %47 = arith.mulf %46, %45 : vector<512x128xf32>
    %c0_31 = arith.constant 0 : index
    %c0_32 = arith.constant 0 : index
    %48 = vector.load %arg13[%c0_31, %c0_32] : memref<512x128xf32, #tpu.memory_space<vmem>>, vector<512x128xf32>
    tpu.vector_store %arg13[%c0_31, %c0_32], %47 {strides = array<i32>} : memref<512x128xf32, #tpu.memory_space<vmem>>, vector<512x128xf32>,
    return
  }
  func.func @transform_0(%arg0: i32) -> (i32, i32) {
    %c0_i32 = arith.constant 0 : i32
    %c0_i32_0 = arith.constant 0 : i32
    %c0_i32_1 = arith.constant 0 : i32
    return %c0_i32, %c0_i32_0 : i32, i32
  }
  func.func @transform_1(%arg0: i32) -> (i32, i32) {
    %c0_i32 = arith.constant 0 : i32
    %c0_i32_0 = arith.constant 0 : i32
    return %arg0, %c0_i32 : i32, i32
  }
  func.func @transform_2(%arg0: i32) -> (i32, i32) {
    %c0_i32 = arith.constant 0 : i32
    %c0_i32_0 = arith.constant 0 : i32
    %c0_i32_1 = arith.constant 0 : i32
    return %c0_i32, %c0_i32_0 : i32, i32
  }
  func.func @transform_3(%arg0: i32) -> (i32, i32) {
    %c0_i32 = arith.constant 0 : i32
    %c0_i32_0 = arith.constant 0 : i32
    %c0_i32_1 = arith.constant 0 : i32
    return %c0_i32, %c0_i32_0 : i32, i32
  }
  func.func @transform_4(%arg0: i32) -> (i32, i32) {
    %c0_i32 = arith.constant 0 : i32
    %c0_i32_0 = arith.constant 0 : i32
    %c0_i32_1 = arith.constant 0 : i32
    return %c0_i32, %c0_i32_0 : i32, i32
  }
  func.func @transform_5(%arg0: i32) -> (i32, i32) {
    %c0_i32 = arith.constant 0 : i32
    %c0_i32_0 = arith.constant 0 : i32
    %c0_i32_1 = arith.constant 0 : i32
    return %c0_i32, %c0_i32_0 : i32, i32
  }
  func.func @transform_6(%arg0: i32) -> (i32, i32) {
    %c0_i32 = arith.constant 0 : i32
    %c0_i32_0 = arith.constant 0 : i32
    %c0_i32_1 = arith.constant 0 : i32
    return %c0_i32, %c0_i32_0 : i32, i32
  }
  func.func @transform_7(%arg0: i32) -> (i32, i32) {
    %c0_i32 = arith.constant 0 : i32
    %c0_i32_0 = arith.constant 0 : i32
    %c0_i32_1 = arith.constant 0 : i32
    return %c0_i32, %c0_i32_0 : i32, i32
  }
  func.func @transform_8(%arg0: i32) -> (i32, i32) {
    %c0_i32 = arith.constant 0 : i32
    %c0_i32_0 = arith.constant 0 : i32
    %c0_i32_1 = arith.constant 0 : i32
    return %c0_i32, %c0_i32_0 : i32, i32
  }
  func.func @transform_9(%arg0: i32) -> (i32, i32) {
    %c0_i32 = arith.constant 0 : i32
    %c0_i32_0 = arith.constant 0 : i32
    %c0_i32_1 = arith.constant 0 : i32
    return %c0_i32, %c0_i32_0 : i32, i32
  }
  func.func @transform_10(%arg0: i32) -> (i32, i32) {
    %c0_i32 = arith.constant 0 : i32
    %c0_i32_0 = arith.constant 0 : i32
    %c0_i32_1 = arith.constant 0 : i32
    return %c0_i32, %c0_i32_0 : i32, i32
  }
  func.func @transform_11(%arg0: i32) -> (i32, i32) {
    %c0_i32 = arith.constant 0 : i32
    %c0_i32_0 = arith.constant 0 : i32
    %c0_i32_1 = arith.constant 0 : i32
    return %c0_i32, %c0_i32_0 : i32, i32
  }
  func.func @transform_12(%arg0: i32) -> (i32, i32) {
    %c0_i32 = arith.constant 0 : i32
    %c0_i32_0 = arith.constant 0 : i32
    return %arg0, %c0_i32 : i32, i32
  }
}

</mosaic_0001>

<llo_original>
// kernel: tpu_custom_call.1
$region0: #{tpu_custom_call.1}
  #allocation0 [shape = 'u32[]', space=smem, size = 0x4, offset = 0x4, fixed_abs, tag = 'smem constant byte address 0x4 - core index']
  #allocation1 [shape = 'u32[144,128]{1,0:T(1,128)}', space=vmem, size = 0x12000, scoped, tag = 'internal scratch']
  #allocation2 [shape = 'f32[1,1]{1,0:T(1,128)S(6)}', space=smem, size = 0x200, scoped, tag = 'scoped memory for tpu_custom_call.1']
  %s0 = inlined_call_operand.<no memory space> [shape: f32[1,1], index: 0, kind: input, shape index: {}]
  %s1 = inlined_call_operand.vmem [shape: f32[1024,16], index: 1, kind: input, shape index: {}]
  %s2 = inlined_call_operand.vmem [shape: f32[16,256], index: 2, kind: input, shape index: {}]
  %s3 = inlined_call_operand.vmem [shape: f32[1,256], index: 3, kind: input, shape index: {}]
  %s4 = inlined_call_operand.vmem [shape: f32[256,256], index: 4, kind: input, shape index: {}]
  %s5 = inlined_call_operand.vmem [shape: f32[1,256], index: 5, kind: input, shape index: {}]
  %s6 = inlined_call_operand.vmem [shape: f32[256,256], index: 6, kind: input, shape index: {}]
  %s7 = inlined_call_operand.vmem [shape: f32[1,256], index: 7, kind: input, shape index: {}]
  %s8 = inlined_call_operand.hbm [shape: f32[256,256], index: 8, kind: input, shape index: {}]
  %s9 = inlined_call_operand.vmem [shape: f32[1,256], index: 9, kind: input, shape index: {}]
  %s10 = inlined_call_operand.hbm [shape: f32[256,128], index: 10, kind: input, shape index: {}]
  %s11 = inlined_call_operand.vmem [shape: f32[1,128], index: 11, kind: input, shape index: {}]
  %s12 = inlined_call_operand.hbm [shape: f32[1024,128], index: 12, kind: output, shape index: {}]
  %s13 = sld [smem:[#allocation0]]
  $region89: #{tpu_custom_call.1} parent=0
    _
  %s15 = ssub.s32 1, %s13
  %s16 = scalar_select 0, %s15, %s13
  %17 = sst [smem:[#allocation2]] %s0
  $region1: #{tpu_custom_call.1} parent=0
    #allocation3 [shape = 'u8[262144]{0}', space=vmem, size = 0x40000, scoped, tag = 'input window, operand 8, single buffered']
    #allocation4 [shape = 's32[2]{0}', space=sflag, size = 0x8, scoped, tag = 'scoped memory for tpu_custom_call.1']
    #allocation5 [shape = 's32[2]{0}', space=sflag, size = 0x8, scoped, tag = 'scoped memory for tpu_custom_call.1']
    #allocation6 [shape = 'u8[131072]{0}', space=vmem, size = 0x20000, scoped, tag = 'input window, operand 10, single buffered']
    #allocation7 [shape = 's32[1]{0}', space=sflag, size = 0x4, scoped, tag = 'scoped memory for tpu_custom_call.1']
    #allocation8 [shape = 'u8[524288]{0}', space=vmem, size = 0x80000, scoped, tag = 'output window, operand 0']
    %18 = vsyncpa [#allocation4], 0
    %19 = vsyncpa [#allocation7], 0
    %20 = vsyncpa [#allocation5], 0
    %s21 = scalar_lea.sflag [#allocation5], 1
    %22 = vsyncpa %s21, 0
    loop: start=0, step=1, limit=4
    $region2: #{tpu_custom_call.1} parent=1 // loop_pre_header
      _
    $region3: #{tpu_custom_call.1} parent=1 // loop_header
      %s24 = sphi 0, %s28
      %p25 = scmp.ge.s32.totalorder %s24, 4
      %s32 = sphi 0, %s32
      %s34 = sphi 0, %s32
      %s35 = sphi 0, %s34
      %s49 = sphi 0, %s35
      %s55 = sphi 0, %s57
      %s58 = sphi 0, %s55
      %s59 = sphi 0, %s58
      %s75 = sphi 0, %s59
      %s79 = sphi 0, %s79
      %s81 = sphi 0, %s79
      %s82 = sphi 0, %s81
      %s96 = sphi 0, %s82
      %s100 = sphi 0, %s100
      %s102 = sphi 0, %s100
      %s103 = sphi 0, %s102
      %s117 = sphi 0, %s103
      %s121 = sphi 0, %s121
      %s123 = sphi 0, %s121
      %s124 = sphi 0, %s123
      %s138 = sphi 0, %s124
      %s142 = sphi 0, %s142
      %s144 = sphi 0, %s142
      %s145 = sphi 0, %s144
      %s159 = sphi 0, %s145
      %s163 = sphi 0, %s163
      %s165 = sphi 0, %s163
      %s166 = sphi 0, %s165
      %s180 = sphi 0, %s166
      %s184 = sphi 0, %s184
      %s186 = sphi 0, %s184
      %s187 = sphi 0, %s186
      %s201 = sphi 0, %s187
      %s205 = sphi 0, %s205
      %s207 = sphi 0, %s205
      %s208 = sphi 0, %s207
      %s222 = sphi 0, %s208
      %s226 = sphi 0, %s226
      %s228 = sphi 0, %s226
      %s229 = sphi 0, %s228
      %s243 = sphi 0, %s229
      %s247 = sphi 0, %s247
      %s249 = sphi 0, %s247
      %s250 = sphi 0, %s249
      %s264 = sphi 0, %s250
      %s268 = sphi 0, %s268
      %s270 = sphi 0, %s268
      %s271 = sphi 0, %s270
      %s285 = sphi 0, %s271
      %s291 = sphi 0, %s293
      %s294 = sphi 0, %s291
      %s295 = sphi 0, %s294
      %s311 = sphi 0, %s295
    $region4: #{tpu_custom_call.1} parent=1 // loop_header_branch
      %27 = sbr.rel (%p25) target = $region8
    $region5: #{tpu_custom_call.1} parent=1 // loop_body
      %s29 = ssub.s32 %s24, 1
      %s30 = ssub.s32 %s24, 2
      %s31 = sadd.s32 %s24, 1
      %s33 = sadd.s32 %s32, 1
      %p36 = scmp.eq.s32.totalorder %s24, 1
      %p37 = scmp.ne.s32.totalorder %s32, %s34
      %p38 = scmp.eq.s32.totalorder %s24, 0
      %p39 = por %p37, %p38
      %p40 = scmp.ne.s32.totalorder %s32, %s34
      %p41 = scmp.eq.s32.totalorder %s29, 1
      %p42 = por %p40, %p41
      %p43 = scmp.ne.s32.totalorder %s34, %s35
      %p44 = scmp.eq.s32.totalorder %s29, 0
      %p45 = por %p43, %p44
      %p46 = scmp.ne.s32.totalorder %s34, %s35
      %p47 = scmp.eq.s32.totalorder %s30, 1
      %p48 = por %p46, %p47
      %p50 = scmp.ne.s32.totalorder %s35, %s49
      %p51 = scmp.eq.s32.totalorder %s30, 0
      %p52 = por %p50, %p51
      %s53 = ssub.s32 %s24, %s31
      %p54 = scmp.eq.s32.totalorder %s53, 0
      %s56 = sadd.s32 %s55, 1
      %s57 = scalar_select %p54, %s55, %s56
      %p60 = pneg %p54
      %p61 = scmp.eq.s32.totalorder %s24, 1
      %p62 = por %p60, %p61
      %p63 = scmp.ne.s32.totalorder %s55, %s58
      %p64 = scmp.eq.s32.totalorder %s24, 0
      %p65 = por %p63, %p64
      %p66 = scmp.ne.s32.totalorder %s55, %s58
      %p67 = scmp.eq.s32.totalorder %s29, 1
      %p68 = por %p66, %p67
      %p69 = scmp.ne.s32.totalorder %s58, %s59
      %p70 = scmp.eq.s32.totalorder %s29, 0
      %p71 = por %p69, %p70
      %p72 = scmp.ne.s32.totalorder %s58, %s59
      %p73 = scmp.eq.s32.totalorder %s30, 1
      %p74 = por %p72, %p73
      %p76 = scmp.ne.s32.totalorder %s59, %s75
      %p77 = scmp.eq.s32.totalorder %s30, 0
      %p78 = por %p76, %p77
      %s80 = sadd.s32 %s79, 1
      %p83 = scmp.eq.s32.totalorder %s24, 1
      %p84 = scmp.ne.s32.totalorder %s79, %s81
      %p85 = scmp.eq.s32.totalorder %s24, 0
      %p86 = por %p84, %p85
      %p87 = scmp.ne.s32.totalorder %s79, %s81
      %p88 = scmp.eq.s32.totalorder %s29, 1
      %p89 = por %p87, %p88
      %p90 = scmp.ne.s32.totalorder %s81, %s82
      %p91 = scmp.eq.s32.totalorder %s29, 0
      %p92 = por %p90, %p91
      %p93 = scmp.ne.s32.totalorder %s81, %s82
      %p94 = scmp.eq.s32.totalorder %s30, 1
      %p95 = por %p93, %p94
      %p97 = scmp.ne.s32.totalorder %s82, %s96
      %p98 = scmp.eq.s32.totalorder %s30, 0
      %p99 = por %p97, %p98
      %s101 = sadd.s32 %s100, 1
      %p104 = scmp.eq.s32.totalorder %s24, 1
      %p105 = scmp.ne.s32.totalorder %s100, %s102
      %p106 = scmp.eq.s32.totalorder %s24, 0
      %p107 = por %p105, %p106
      %p108 = scmp.ne.s32.totalorder %s100, %s102
      %p109 = scmp.eq.s32.totalorder %s29, 1
      %p110 = por %p108, %p109
      %p111 = scmp.ne.s32.totalorder %s102, %s103
      %p112 = scmp.eq.s32.totalorder %s29, 0
      %p113 = por %p111, %p112
      %p114 = scmp.ne.s32.totalorder %s102, %s103
      %p115 = scmp.eq.s32.totalorder %s30, 1
      %p116 = por %p114, %p115
      %p118 = scmp.ne.s32.totalorder %s103, %s117
      %p119 = scmp.eq.s32.totalorder %s30, 0
      %p120 = por %p118, %p119
      %s122 = sadd.s32 %s121, 1
      %p125 = scmp.eq.s32.totalorder %s24, 1
      %p126 = scmp.ne.s32.totalorder %s121, %s123
      %p127 = scmp.eq.s32.totalorder %s24, 0
      %p128 = por %p126, %p127
      %p129 = scmp.ne.s32.totalorder %s121, %s123
      %p130 = scmp.eq.s32.totalorder %s29, 1
      %p131 = por %p129, %p130
      %p132 = scmp.ne.s32.totalorder %s123, %s124
      %p133 = scmp.eq.s32.totalorder %s29, 0
      %p134 = por %p132, %p133
      %p135 = scmp.ne.s32.totalorder %s123, %s124
      %p136 = scmp.eq.s32.totalorder %s30, 1
      %p137 = por %p135, %p136
      %p139 = scmp.ne.s32.totalorder %s124, %s138
      %p140 = scmp.eq.s32.totalorder %s30, 0
      %p141 = por %p139, %p140
      %s143 = sadd.s32 %s142, 1
      %p146 = scmp.eq.s32.totalorder %s24, 1
      %p147 = scmp.ne.s32.totalorder %s142, %s144
      %p148 = scmp.eq.s32.totalorder %s24, 0
      %p149 = por %p147, %p148
      %p150 = scmp.ne.s32.totalorder %s142, %s144
      %p151 = scmp.eq.s32.totalorder %s29, 1
      %p152 = por %p150, %p151
      %p153 = scmp.ne.s32.totalorder %s144, %s145
      %p154 = scmp.eq.s32.totalorder %s29, 0
      %p155 = por %p153, %p154
      %p156 = scmp.ne.s32.totalorder %s144, %s145
      %p157 = scmp.eq.s32.totalorder %s30, 1
      %p158 = por %p156, %p157
      %p160 = scmp.ne.s32.totalorder %s145, %s159
      %p161 = scmp.eq.s32.totalorder %s30, 0
      %p162 = por %p160, %p161
      %s164 = sadd.s32 %s163, 1
      %p167 = scmp.eq.s32.totalorder %s24, 1
      %p168 = scmp.ne.s32.totalorder %s163, %s165
      %p169 = scmp.eq.s32.totalorder %s24, 0
      %p170 = por %p168, %p169
      %p171 = scmp.ne.s32.totalorder %s163, %s165
      %p172 = scmp.eq.s32.totalorder %s29, 1
      %p173 = por %p171, %p172
      %p174 = scmp.ne.s32.totalorder %s165, %s166
      %p175 = scmp.eq.s32.totalorder %s29, 0
      %p176 = por %p174, %p175
      %p177 = scmp.ne.s32.totalorder %s165, %s166
      %p178 = scmp.eq.s32.totalorder %s30, 1
      %p179 = por %p177, %p178
      %p181 = scmp.ne.s32.totalorder %s166, %s180
      %p182 = scmp.eq.s32.totalorder %s30, 0
      %p183 = por %p181, %p182
      %s185 = sadd.s32 %s184, 1
      %p188 = scmp.eq.s32.totalorder %s24, 1
      %p189 = scmp.ne.s32.totalorder %s184, %s186
      %p190 = scmp.eq.s32.totalorder %s24, 0
      %p191 = por %p189, %p190
      %p192 = scmp.ne.s32.totalorder %s184, %s186
      %p193 = scmp.eq.s32.totalorder %s29, 1
      %p194 = por %p192, %p193
      %p195 = scmp.ne.s32.totalorder %s186, %s187
      %p196 = scmp.eq.s32.totalorder %s29, 0
      %p197 = por %p195, %p196
      %p198 = scmp.ne.s32.totalorder %s186, %s187
      %p199 = scmp.eq.s32.totalorder %s30, 1
      %p200 = por %p198, %p199
      %p202 = scmp.ne.s32.totalorder %s187, %s201
      %p203 = scmp.eq.s32.totalorder %s30, 0
      %p204 = por %p202, %p203
      %s206 = sadd.s32 %s205, 1
      %p209 = scmp.eq.s32.totalorder %s24, 1
      %p210 = scmp.ne.s32.totalorder %s205, %s207
      %p211 = scmp.eq.s32.totalorder %s24, 0
      %p212 = por %p210, %p211
      %p213 = scmp.ne.s32.totalorder %s205, %s207
      %p214 = scmp.eq.s32.totalorder %s29, 1
      %p215 = por %p213, %p214
      %p216 = scmp.ne.s32.totalorder %s207, %s208
      %p217 = scmp.eq.s32.totalorder %s29, 0
      %p218 = por %p216, %p217
      %p219 = scmp.ne.s32.totalorder %s207, %s208
      %p220 = scmp.eq.s32.totalorder %s30, 1
      %p221 = por %p219, %p220
      %p223 = scmp.ne.s32.totalorder %s208, %s222
      %p224 = scmp.eq.s32.totalorder %s30, 0
      %p225 = por %p223, %p224
      %s227 = sadd.s32 %s226, 1
      %p230 = scmp.eq.s32.totalorder %s24, 1
      %p231 = scmp.ne.s32.totalorder %s226, %s228
      %p232 = scmp.eq.s32.totalorder %s24, 0
      %p233 = por %p231, %p232
      %p234 = scmp.ne.s32.totalorder %s226, %s228
      %p235 = scmp.eq.s32.totalorder %s29, 1
      %p236 = por %p234, %p235
      %p237 = scmp.ne.s32.totalorder %s228, %s229
      %p238 = scmp.eq.s32.totalorder %s29, 0
      %p239 = por %p237, %p238
      %p240 = scmp.ne.s32.totalorder %s228, %s229
      %p241 = scmp.eq.s32.totalorder %s30, 1
      %p242 = por %p240, %p241
      %p244 = scmp.ne.s32.totalorder %s229, %s243
      %p245 = scmp.eq.s32.totalorder %s30, 0
      %p246 = por %p244, %p245
      %s248 = sadd.s32 %s247, 1
      %p251 = scmp.eq.s32.totalorder %s24, 1
      %p252 = scmp.ne.s32.totalorder %s247, %s249
      %p253 = scmp.eq.s32.totalorder %s24, 0
      %p254 = por %p252, %p253
      %p255 = scmp.ne.s32.totalorder %s247, %s249
      %p256 = scmp.eq.s32.totalorder %s29, 1
      %p257 = por %p255, %p256
      %p258 = scmp.ne.s32.totalorder %s249, %s250
      %p259 = scmp.eq.s32.totalorder %s29, 0
      %p260 = por %p258, %p259
      %p261 = scmp.ne.s32.totalorder %s249, %s250
      %p262 = scmp.eq.s32.totalorder %s30, 1
      %p263 = por %p261, %p262
      %p265 = scmp.ne.s32.totalorder %s250, %s264
      %p266 = scmp.eq.s32.totalorder %s30, 0
      %p267 = por %p265, %p266
      %s269 = sadd.s32 %s268, 1
      %p272 = scmp.eq.s32.totalorder %s24, 1
      %p273 = scmp.ne.s32.totalorder %s268, %s270
      %p274 = scmp.eq.s32.totalorder %s24, 0
      %p275 = por %p273, %p274
      %p276 = scmp.ne.s32.totalorder %s268, %s270
      %p277 = scmp.eq.s32.totalorder %s29, 1
      %p278 = por %p276, %p277
      %p279 = scmp.ne.s32.totalorder %s270, %s271
      %p280 = scmp.eq.s32.totalorder %s29, 0
      %p281 = por %p279, %p280
      %p282 = scmp.ne.s32.totalorder %s270, %s271
      %p283 = scmp.eq.s32.totalorder %s30, 1
      %p284 = por %p282, %p283
      %p286 = scmp.ne.s32.totalorder %s271, %s285
      %p287 = scmp.eq.s32.totalorder %s30, 0
      %p288 = por %p286, %p287
      %s289 = ssub.s32 %s24, %s31
      %p290 = scmp.eq.s32.totalorder %s289, 0
      %s292 = sadd.s32 %s291, 1
      %s293 = scalar_select %p290, %s291, %s292
      %p296 = pneg %p290
      %p297 = scmp.eq.s32.totalorder %s24, 1
      %p298 = por %p296, %p297
      %p299 = scmp.ne.s32.totalorder %s291, %s294
      %p300 = scmp.eq.s32.totalorder %s24, 0
      %p301 = por %p299, %p300
      %p302 = scmp.ne.s32.totalorder %s291, %s294
      %p303 = scmp.eq.s32.totalorder %s29, 1
      %p304 = por %p302, %p303
      %p305 = scmp.ne.s32.totalorder %s294, %s295
      %p306 = scmp.eq.s32.totalorder %s29, 0
      %p307 = por %p305, %p306
      %p308 = scmp.ne.s32.totalorder %s294, %s295
      %p309 = scmp.eq.s32.totalorder %s30, 1
      %p310 = por %p308, %p309
      %p312 = scmp.ne.s32.totalorder %s295, %s311
      %p313 = scmp.eq.s32.totalorder %s30, 0
      %p314 = por %p312, %p313
      %p315 = scmp.le.s32.totalorder 1, %s24
      %p316 = scmp.lt.s32.totalorder %s24, 3
      %p317 = pnand %p315, %p316
      %p318 = pneg %p317
      // Predicated region
      $region9: #{tpu_custom_call.1} parent=5 // pred_check
        _
      $region10: #{tpu_custom_call.1} parent=5 // pred_check_branch
        %320 = sbr.rel (%p317) target = $region12
      $region11: #{tpu_custom_call.1} parent=5 // pred_region
        %s321 = ssub.s32 %s24, 1
        // Predicated region
        $region13: #{tpu_custom_call.1} parent=11 // pred_check
          %p322 = pneg %p45
        $region14: #{tpu_custom_call.1} parent=11 // pred_check_branch
          %324 = sbr.rel (%p322) target = $region16
        $region15: #{tpu_custom_call.1} parent=11 // pred_region
          _
        $region16: #{tpu_custom_call.1} parent=11 // pred_fallthru
          _
        // Predicated region
        $region17: #{tpu_custom_call.1} parent=11 // pred_check
          %p325 = pneg %p92
        $region18: #{tpu_custom_call.1} parent=11 // pred_check_branch
          %327 = sbr.rel (%p325) target = $region20
        $region19: #{tpu_custom_call.1} parent=11 // pred_region
          _
        $region20: #{tpu_custom_call.1} parent=11 // pred_fallthru
          _
        // Predicated region
        $region21: #{tpu_custom_call.1} parent=11 // pred_check
          %p328 = pneg %p113
        $region22: #{tpu_custom_call.1} parent=11 // pred_check_branch
          %330 = sbr.rel (%p328) target = $region24
        $region23: #{tpu_custom_call.1} parent=11 // pred_region
          _
        $region24: #{tpu_custom_call.1} parent=11 // pred_fallthru
          _
        // Predicated region
        $region25: #{tpu_custom_call.1} parent=11 // pred_check
          %p331 = pneg %p134
        $region26: #{tpu_custom_call.1} parent=11 // pred_check_branch
          %333 = sbr.rel (%p331) target = $region28
        $region27: #{tpu_custom_call.1} parent=11 // pred_region
          _
        $region28: #{tpu_custom_call.1} parent=11 // pred_fallthru
          _
        // Predicated region
        $region29: #{tpu_custom_call.1} parent=11 // pred_check
          %p334 = pneg %p155
        $region30: #{tpu_custom_call.1} parent=11 // pred_check_branch
          %336 = sbr.rel (%p334) target = $region32
        $region31: #{tpu_custom_call.1} parent=11 // pred_region
          _
        $region32: #{tpu_custom_call.1} parent=11 // pred_fallthru
          _
        // Predicated region
        $region33: #{tpu_custom_call.1} parent=11 // pred_check
          %p337 = pneg %p176
        $region34: #{tpu_custom_call.1} parent=11 // pred_check_branch
          %339 = sbr.rel (%p337) target = $region36
        $region35: #{tpu_custom_call.1} parent=11 // pred_region
          _
        $region36: #{tpu_custom_call.1} parent=11 // pred_fallthru
          _
        // Predicated region
        $region37: #{tpu_custom_call.1} parent=11 // pred_check
          %p340 = pneg %p197
        $region38: #{tpu_custom_call.1} parent=11 // pred_check_branch
          %342 = sbr.rel (%p340) target = $region40
        $region39: #{tpu_custom_call.1} parent=11 // pred_region
          _
        $region40: #{tpu_custom_call.1} parent=11 // pred_fallthru
          _
        // Predicated region
        $region41: #{tpu_custom_call.1} parent=11 // pred_check
          %p343 = pneg %p218
        $region42: #{tpu_custom_call.1} parent=11 // pred_check_branch
          %345 = sbr.rel (%p343) target = $region44
        $region43: #{tpu_custom_call.1} parent=11 // pred_region
          %s347 = ssub.s32 8192, 8192
          %348 = vsyncadd [#allocation4], %s347
          %s349 = sshll.u32 [#allocation3], 4
          %s350 = int_to_ptr.vmem [resolvable:$true] %s349
          %355 = dma.hbm_to_vmem [thread:$0]  %s8, 8192, %s350, [#allocation4], 256, 256, 16
        $region44: #{tpu_custom_call.1} parent=11 // pred_fallthru
          _
        // Predicated region
        $region45: #{tpu_custom_call.1} parent=11 // pred_check
          %p356 = pneg %p239
        $region46: #{tpu_custom_call.1} parent=11 // pred_check_branch
          %358 = sbr.rel (%p356) target = $region48
        $region47: #{tpu_custom_call.1} parent=11 // pred_region
          _
        $region48: #{tpu_custom_call.1} parent=11 // pred_fallthru
          _
        // Predicated region
        $region49: #{tpu_custom_call.1} parent=11 // pred_check
          %p359 = pneg %p260
        $region50: #{tpu_custom_call.1} parent=11 // pred_check_branch
          %361 = sbr.rel (%p359) target = $region52
        $region51: #{tpu_custom_call.1} parent=11 // pred_region
          %s363 = ssub.s32 4096, 4096
          %364 = vsyncadd [#allocation7], %s363
          %s365 = sshll.u32 [#allocation6], 4
          %s366 = int_to_ptr.vmem [resolvable:$true] %s365
          %371 = dma.hbm_to_vmem [thread:$0]  %s10, 4096, %s366, [#allocation7], 128, 128, 8
        $region52: #{tpu_custom_call.1} parent=11 // pred_fallthru
          _
        // Predicated region
        $region53: #{tpu_custom_call.1} parent=11 // pred_check
          %p372 = pneg %p281
        $region54: #{tpu_custom_call.1} parent=11 // pred_check_branch
          %374 = sbr.rel (%p372) target = $region56
        $region55: #{tpu_custom_call.1} parent=11 // pred_region
          _
        $region56: #{tpu_custom_call.1} parent=11 // pred_fallthru
          _
      $region12: #{tpu_custom_call.1} parent=5 // pred_fallthru
        _
      %p375 = scmp.lt.s32.totalorder %s24, 2
      // Predicated region
      $region57: #{tpu_custom_call.1} parent=5 // pred_check
        %p376 = pneg %p375
      $region58: #{tpu_custom_call.1} parent=5 // pred_check_branch
        %378 = sbr.rel (%p376) target = $region60
      $region59: #{tpu_custom_call.1} parent=5 // pred_region
        // Predicated region
        $region61: #{tpu_custom_call.1} parent=59 // pred_check
          %p379 = pneg %p65
        $region62: #{tpu_custom_call.1} parent=59 // pred_check_branch
          %381 = sbr.rel (%p379) target = $region64
        $region63: #{tpu_custom_call.1} parent=59 // pred_region
          %s382 = smul.u32 64, %s24
          %p383 = scmp.lt.s32.totalorder %s382, 127
          %s384 = scalar_select %p383, %s382, 127
          %s385 = smul.addr %s384, 8
          %s386 = scalar_lea.vmem %s1, %s385
          %s387 = smul.u32 64, %s24
        $region64: #{tpu_custom_call.1} parent=59 // pred_fallthru
          _
      $region60: #{tpu_custom_call.1} parent=5 // pred_fallthru
        _
      %p388 = scmp.le.s32.totalorder 1, %s24
      %p389 = scmp.lt.s32.totalorder %s24, 3
      %p390 = pnand %p388, %p389
      %p391 = pneg %p390
      // Predicated region
      $region65: #{tpu_custom_call.1} parent=5 // pred_check
        _
      $region66: #{tpu_custom_call.1} parent=5 // pred_check_branch
        %393 = sbr.rel (%p390) target = $region68
      $region67: #{tpu_custom_call.1} parent=5 // pred_region
        %s394 = ssub.s32 %s24, 1
        // Predicated region
        $region69: #{tpu_custom_call.1} parent=67 // pred_check
          %p395 = pneg %p218
        $region70: #{tpu_custom_call.1} parent=67 // pred_check_branch
          %397 = sbr.rel (%p395) target = $region72
        $region71: #{tpu_custom_call.1} parent=67 // pred_region
          %398 = dma.done [#allocation4], 8192
        $region72: #{tpu_custom_call.1} parent=67 // pred_fallthru
          _
        // Predicated region
        $region73: #{tpu_custom_call.1} parent=67 // pred_check
          %p399 = pneg %p260
        $region74: #{tpu_custom_call.1} parent=67 // pred_check_branch
          %401 = sbr.rel (%p399) target = $region76
        $region75: #{tpu_custom_call.1} parent=67 // pred_region
          %402 = dma.done [#allocation7], 4096
        $region76: #{tpu_custom_call.1} parent=67 // pred_fallthru
          _
        %p403 = pneg %p45
        %p404 = pneg %p42
        %s405 = smul.u32 64, %s29
        %p406 = scmp.lt.s32.totalorder %s405, 127
        %s407 = scalar_select %p406, %s405, 127
        %s408 = smul.addr %s407, 8
        %s409 = scalar_lea.vmem %s1, %s408
        %p410 = pneg %p71
        %p411 = pneg %p68
        %p412 = pneg %p92
        %p413 = pneg %p89
        %p414 = pneg %p113
        %p415 = pneg %p110
        %p416 = pneg %p134
        %p417 = pneg %p131
        %p418 = pneg %p155
        %p419 = pneg %p152
        %p420 = pneg %p176
        %p421 = pneg %p173
        %p422 = pneg %p197
        %p423 = pneg %p194
        %p424 = pneg %p218
        %p425 = pneg %p215
        %p426 = pneg %p239
        %p427 = pneg %p236
        %p428 = pneg %p260
        %p429 = pneg %p257
        %p430 = pneg %p281
        %p431 = pneg %p278
        %p432 = pneg %p307
        %p433 = pneg %p304
        %s434 = sand.u32 %s294, 1
        %s435 = scalar_lea.sflag [#allocation5], %s434
        %s436 = sand.u32 %s294, 1
        %s437 = smul.addr %s436, 512
        %s438 = scalar_lea.vmem [#allocation8], %s437
        %s439 = smul.u32 64, %s29
        %p440 = scmp.lt.s32.totalorder %s439, 127
        %s441 = scalar_select %p440, %s439, 127
        %s442 = smul.addr %s441, 8
        %s443 = scalar_lea.vmem %s1, %s442
        %s444 = smul.u32 64, %s29
        %s445 = smul.u32 64, %s29
        %s447 = sld [smem:[#allocation2]]
        %v448 = vld [vmem:[%s443] sm:$0xff]
        %v449 = vld [vmem:[%s443 + $0x8] sm:$0xff]
        %v450 = vld [vmem:[%s443 + $0x10] sm:$0xff]
        %v451 = vld [vmem:[%s443 + $0x18] sm:$0xff]
        %v452 = vld [vmem:[%s443 + $0x20] sm:$0xff]
        %v453 = vld [vmem:[%s443 + $0x28] sm:$0xff]
        %v454 = vld [vmem:[%s443 + $0x30] sm:$0xff]
        %v455 = vld [vmem:[%s443 + $0x38] sm:$0xff]
        %v456 = vld [vmem:[%s443 + $0x40] sm:$0xff]
        %v457 = vld [vmem:[%s443 + $0x48] sm:$0xff]
        %v458 = vld [vmem:[%s443 + $0x50] sm:$0xff]
        %v459 = vld [vmem:[%s443 + $0x58] sm:$0xff]
        %v460 = vld [vmem:[%s443 + $0x60] sm:$0xff]
        %v461 = vld [vmem:[%s443 + $0x68] sm:$0xff]
        %v462 = vld [vmem:[%s443 + $0x70] sm:$0xff]
        %v463 = vld [vmem:[%s443 + $0x78] sm:$0xff]
        %v464 = vld [vmem:[%s443 + $0x80] sm:$0xff]
        %v465 = vld [vmem:[%s443 + $0x88] sm:$0xff]
        %v466 = vld [vmem:[%s443 + $0x90] sm:$0xff]
        %v467 = vld [vmem:[%s443 + $0x98] sm:$0xff]
        %v468 = vld [vmem:[%s443 + $0xa0] sm:$0xff]
        %v469 = vld [vmem:[%s443 + $0xa8] sm:$0xff]
        %v470 = vld [vmem:[%s443 + $0xb0] sm:$0xff]
        %v471 = vld [vmem:[%s443 + $0xb8] sm:$0xff]
        %v472 = vld [vmem:[%s443 + $0xc0] sm:$0xff]
        %v473 = vld [vmem:[%s443 + $0xc8] sm:$0xff]
        %v474 = vld [vmem:[%s443 + $0xd0] sm:$0xff]
        %v475 = vld [vmem:[%s443 + $0xd8] sm:$0xff]
        %v476 = vld [vmem:[%s443 + $0xe0] sm:$0xff]
        %v477 = vld [vmem:[%s443 + $0xe8] sm:$0xff]
        %v478 = vld [vmem:[%s443 + $0xf0] sm:$0xff]
        %v479 = vld [vmem:[%s443 + $0xf8] sm:$0xff]
        %v480 = vld [vmem:[%s443 + $0x100] sm:$0xff]
        %v481 = vld [vmem:[%s443 + $0x108] sm:$0xff]
        %v482 = vld [vmem:[%s443 + $0x110] sm:$0xff]
        %v483 = vld [vmem:[%s443 + $0x118] sm:$0xff]
        %v484 = vld [vmem:[%s443 + $0x120] sm:$0xff]
        %v485 = vld [vmem:[%s443 + $0x128] sm:$0xff]
        %v486 = vld [vmem:[%s443 + $0x130] sm:$0xff]
        %v487 = vld [vmem:[%s443 + $0x138] sm:$0xff]
        %v488 = vld [vmem:[%s443 + $0x140] sm:$0xff]
        %v489 = vld [vmem:[%s443 + $0x148] sm:$0xff]
        %v490 = vld [vmem:[%s443 + $0x150] sm:$0xff]
        %v491 = vld [vmem:[%s443 + $0x158] sm:$0xff]
        %v492 = vld [vmem:[%s443 + $0x160] sm:$0xff]
        %v493 = vld [vmem:[%s443 + $0x168] sm:$0xff]
        %v494 = vld [vmem:[%s443 + $0x170] sm:$0xff]
        %v495 = vld [vmem:[%s443 + $0x178] sm:$0xff]
        %v496 = vld [vmem:[%s443 + $0x180] sm:$0xff]
        %v497 = vld [vmem:[%s443 + $0x188] sm:$0xff]
        %v498 = vld [vmem:[%s443 + $0x190] sm:$0xff]
        %v499 = vld [vmem:[%s443 + $0x198] sm:$0xff]
        %v500 = vld [vmem:[%s443 + $0x1a0] sm:$0xff]
        %v501 = vld [vmem:[%s443 + $0x1a8] sm:$0xff]
        %v502 = vld [vmem:[%s443 + $0x1b0] sm:$0xff]
        %v503 = vld [vmem:[%s443 + $0x1b8] sm:$0xff]
        %v504 = vld [vmem:[%s443 + $0x1c0] sm:$0xff]
        %v505 = vld [vmem:[%s443 + $0x1c8] sm:$0xff]
        %v506 = vld [vmem:[%s443 + $0x1d0] sm:$0xff]
        %v507 = vld [vmem:[%s443 + $0x1d8] sm:$0xff]
        %v508 = vld [vmem:[%s443 + $0x1e0] sm:$0xff]
        %v509 = vld [vmem:[%s443 + $0x1e8] sm:$0xff]
        %v510 = vld [vmem:[%s443 + $0x1f0] sm:$0xff]
        %v511 = vld [vmem:[%s443 + $0x1f8] sm:$0xff]
        %v512 = vpack.c.bf16 %v449, %v448
        %v513 = vpack.c.bf16 %v451, %v450
        %v514 = vpack.c.bf16 %v453, %v452
        %v515 = vpack.c.bf16 %v455, %v454
        %v516 = vpack.c.bf16 %v457, %v456
        %v517 = vpack.c.bf16 %v459, %v458
        %v518 = vpack.c.bf16 %v461, %v460
        %v519 = vpack.c.bf16 %v463, %v462
        %v520 = vpack.c.bf16 %v465, %v464
        %v521 = vpack.c.bf16 %v467, %v466
        %v522 = vpack.c.bf16 %v469, %v468
        %v523 = vpack.c.bf16 %v471, %v470
        %v524 = vpack.c.bf16 %v473, %v472
        %v525 = vpack.c.bf16 %v475, %v474
        %v526 = vpack.c.bf16 %v477, %v476
        %v527 = vpack.c.bf16 %v479, %v478
        %v528 = vpack.c.bf16 %v481, %v480
        %v529 = vpack.c.bf16 %v483, %v482
        %v530 = vpack.c.bf16 %v485, %v484
        %v531 = vpack.c.bf16 %v487, %v486
        %v532 = vpack.c.bf16 %v489, %v488
        %v533 = vpack.c.bf16 %v491, %v490
        %v534 = vpack.c.bf16 %v493, %v492
        %v535 = vpack.c.bf16 %v495, %v494
        %v536 = vpack.c.bf16 %v497, %v496
        %v537 = vpack.c.bf16 %v499, %v498
        %v538 = vpack.c.bf16 %v501, %v500
        %v539 = vpack.c.bf16 %v503, %v502
        %v540 = vpack.c.bf16 %v505, %v504
        %v541 = vpack.c.bf16 %v507, %v506
        %v542 = vpack.c.bf16 %v509, %v508
        %v543 = vpack.c.bf16 %v511, %v510
        %v544 = vld [vmem:[%s2] sm:$0xff]
        %v545 = vld [vmem:[%s2 + $0x8] sm:$0xff]
        %v546 = vld [vmem:[%s2 + $0x10] sm:$0xff]
        %v547 = vld [vmem:[%s2 + $0x18] sm:$0xff]
        %v548 = vpack.c.bf16 %v546, %v544
        %v549 = vpack.c.bf16 %v547, %v545
        %v550 = vld [vmem:[%s3] sm:$0x3]
        %v552 = vlaneseq
        %v553 = vshrl.u32 %v552, 7
        %v554 = vsub.s32 0, %v553
        %v555 = vrot.slane %v550, %v554
        %v556 = vlaneseq
        %v557 = vshrl.u32 %v556, 7
        %v558 = vsub.s32 1, %v557
        %v559 = vrot.slane %v550, %v558
        %vm562 = vcmask 130048
        %v564 = vsel %vm562, %v512, 0
        %v567 = vsel %vm562, %v513, 0
        %v570 = vsel %vm562, %v514, 0
        %v573 = vsel %vm562, %v515, 0
        %v576 = vsel %vm562, %v516, 0
        %v579 = vsel %vm562, %v517, 0
        %v582 = vsel %vm562, %v518, 0
        %v585 = vsel %vm562, %v519, 0
        %v588 = vsel %vm562, %v520, 0
        %v591 = vsel %vm562, %v521, 0
        %v594 = vsel %vm562, %v522, 0
        %v597 = vsel %vm562, %v523, 0
        %v600 = vsel %vm562, %v524, 0
        %v603 = vsel %vm562, %v525, 0
        %v606 = vsel %vm562, %v526, 0
        %v609 = vsel %vm562, %v527, 0
        %v612 = vsel %vm562, %v528, 0
        %v615 = vsel %vm562, %v529, 0
        %v618 = vsel %vm562, %v530, 0
        %v621 = vsel %vm562, %v531, 0
        %v624 = vsel %vm562, %v532, 0
        %v627 = vsel %vm562, %v533, 0
        %v630 = vsel %vm562, %v534, 0
        %v633 = vsel %vm562, %v535, 0
        %v636 = vsel %vm562, %v536, 0
        %v639 = vsel %vm562, %v537, 0
        %v642 = vsel %vm562, %v538, 0
        %v645 = vsel %vm562, %v539, 0
        %v648 = vsel %vm562, %v540, 0
        %v651 = vsel %vm562, %v541, 0
        %v654 = vsel %vm562, %v542, 0
        %v657 = vsel %vm562, %v543, 0
        %659 = vmatprep.subr.bf16.mxu0 %v549
        %660 = vmatpush1.bf16.msra.mxu0 %v548
        %661 = vmatprep.subr.bf16.mxu0 0
        %662 = vmatpush1.bf16.msra.mxu0 0
        %663 = vmatprep.subr.bf16.mxu0 0
        %664 = vmatpush1.bf16.msra.mxu0 0
        %665 = vmatprep.subr.bf16.mxu0 0
        %666 = vmatpush1.bf16.msra.mxu0 0
        %667 = vmatprep.subr.bf16.mxu0 0
        %668 = vmatpush1.bf16.msra.mxu0 0
        %669 = vmatprep.subr.bf16.mxu0 0
        %670 = vmatpush1.bf16.msra.mxu0 0
        %671 = vmatprep.subr.bf16.mxu0 0
        %672 = vmatpush1.bf16.msra.mxu0 0
        %673 = vmatprep.subr.bf16.mxu0 0
        %674 = vmatpush1.bf16.msra.mxu0 0
        %675 = vmatprep.subr.bf16.mxu0 0
        %676 = vmatpush1.bf16.msra.mxu0 0
        %677 = vmatprep.subr.bf16.mxu0 0
        %678 = vmatpush1.bf16.msra.mxu0 0
        %679 = vmatprep.subr.bf16.mxu0 0
        %680 = vmatpush1.bf16.msra.mxu0 0
        %681 = vmatprep.subr.bf16.mxu0 0
        %682 = vmatpush1.bf16.msra.mxu0 0
        %683 = vmatprep.subr.bf16.mxu0 0
        %684 = vmatpush1.bf16.msra.mxu0 0
        %685 = vmatprep.subr.bf16.mxu0 0
        %686 = vmatpush1.bf16.msra.mxu0 0
        %687 = vmatprep.subr.bf16.mxu0 0
        %688 = vmatpush1.bf16.msra.mxu0 0
        %689 = vmatprep.subr.bf16.mxu0 0
        %690 = vmatpush1.bf16.msra.mxu0 0
        %691 = vmatprep.mubr.bf16.mxu0 0
        %692 = vmatmul.mubr.bf16.gmra.mrb[0].mxu0 %v564
        %v693 = vpop.f32.mrb[0].mxu0
        %v694 = vadd.f32 %v555, %v693
        %v695 = vpop.f32.mrb[0].mxu0
        %v696 = vadd.f32 %v559, %v695
        %v697 = vpop.f32.mrb[0].mxu0
        %v698 = vadd.f32 %v555, %v697
        %v699 = vpop.f32.mrb[0].mxu0
        %v700 = vadd.f32 %v559, %v699
        %701 = vmatprep.mubr.bf16.mxu0 0
        %702 = vmatmul.mubr.bf16.gmra.mrb[0].mxu0 %v567
        %v703 = vpop.f32.mrb[0].mxu0
        %v704 = vadd.f32 %v555, %v703
        %v705 = vpop.f32.mrb[0].mxu0
        %v706 = vadd.f32 %v559, %v705
        %v707 = vpop.f32.mrb[0].mxu0
        %v708 = vadd.f32 %v555, %v707
        %v709 = vpop.f32.mrb[0].mxu0
        %v710 = vadd.f32 %v559, %v709
        %711 = vmatprep.mubr.bf16.mxu0 0
        %712 = vmatmul.mubr.bf16.gmra.mrb[0].mxu0 %v570
        %v713 = vpop.f32.mrb[0].mxu0
        %v714 = vadd.f32 %v555, %v713
        %v715 = vpop.f32.mrb[0].mxu0
        %v716 = vadd.f32 %v559, %v715
        %v717 = vpop.f32.mrb[0].mxu0
        %v718 = vadd.f32 %v555, %v717
        %v719 = vpop.f32.mrb[0].mxu0
        %v720 = vadd.f32 %v559, %v719
        %721 = vmatprep.mubr.bf16.mxu0 0
        %722 = vmatmul.mubr.bf16.gmra.mrb[0].mxu0 %v573
        %v723 = vpop.f32.mrb[0].mxu0
        %v724 = vadd.f32 %v555, %v723
        %v725 = vpop.f32.mrb[0].mxu0
        %v726 = vadd.f32 %v559, %v725
        %v727 = vpop.f32.mrb[0].mxu0
        %v728 = vadd.f32 %v555, %v727
        %v729 = vpop.f32.mrb[0].mxu0
        %v730 = vadd.f32 %v559, %v729
        %731 = vmatprep.mubr.bf16.mxu0 0
        %732 = vmatmul.mubr.bf16.gmra.mrb[0].mxu0 %v576
        %v733 = vpop.f32.mrb[0].mxu0
        %v734 = vadd.f32 %v555, %v733
        %v735 = vpop.f32.mrb[0].mxu0
        %v736 = vadd.f32 %v559, %v735
        %v737 = vpop.f32.mrb[0].mxu0
        %v738 = vadd.f32 %v555, %v737
        %v739 = vpop.f32.mrb[0].mxu0
        %v740 = vadd.f32 %v559, %v739
        %741 = vmatprep.mubr.bf16.mxu0 0
        %742 = vmatmul.mubr.bf16.gmra.mrb[0].mxu0 %v579
        %v743 = vpop.f32.mrb[0].mxu0
        %v744 = vadd.f32 %v555, %v743
        %v745 = vpop.f32.mrb[0].mxu0
        %v746 = vadd.f32 %v559, %v745
        %v747 = vpop.f32.mrb[0].mxu0
        %v748 = vadd.f32 %v555, %v747
        %v749 = vpop.f32.mrb[0].mxu0
        %v750 = vadd.f32 %v559, %v749
        %751 = vmatprep.mubr.bf16.mxu0 0
        %752 = vmatmul.mubr.bf16.gmra.mrb[0].mxu0 %v582
        %v753 = vpop.f32.mrb[0].mxu0
        %v754 = vadd.f32 %v555, %v753
        %v755 = vpop.f32.mrb[0].mxu0
        %v756 = vadd.f32 %v559, %v755
        %v757 = vpop.f32.mrb[0].mxu0
        %v758 = vadd.f32 %v555, %v757
        %v759 = vpop.f32.mrb[0].mxu0
        %v760 = vadd.f32 %v559, %v759
        %761 = vmatprep.mubr.bf16.mxu0 0
        %762 = vmatmul.mubr.bf16.gmra.mrb[0].mxu0 %v585
        %v763 = vpop.f32.mrb[0].mxu0
        %v764 = vadd.f32 %v555, %v763
        %v765 = vpop.f32.mrb[0].mxu0
        %v766 = vadd.f32 %v559, %v765
        %v767 = vpop.f32.mrb[0].mxu0
        %v768 = vadd.f32 %v555, %v767
        %v769 = vpop.f32.mrb[0].mxu0
        %v770 = vadd.f32 %v559, %v769
        %771 = vmatprep.mubr.bf16.mxu0 0
        %772 = vmatmul.mubr.bf16.gmra.mrb[0].mxu0 %v588
        %v773 = vpop.f32.mrb[0].mxu0
        %v774 = vadd.f32 %v555, %v773
        %v775 = vpop.f32.mrb[0].mxu0
        %v776 = vadd.f32 %v559, %v775
        %v777 = vpop.f32.mrb[0].mxu0
        %v778 = vadd.f32 %v555, %v777
        %v779 = vpop.f32.mrb[0].mxu0
        %v780 = vadd.f32 %v559, %v779
        %781 = vmatprep.mubr.bf16.mxu0 0
        %782 = vmatmul.mubr.bf16.gmra.mrb[0].mxu0 %v591
        %v783 = vpop.f32.mrb[0].mxu0
        %v784 = vadd.f32 %v555, %v783
        %v785 = vpop.f32.mrb[0].mxu0
        %v786 = vadd.f32 %v559, %v785
        %v787 = vpop.f32.mrb[0].mxu0
        %v788 = vadd.f32 %v555, %v787
        %v789 = vpop.f32.mrb[0].mxu0
        %v790 = vadd.f32 %v559, %v789
        %791 = vmatprep.mubr.bf16.mxu0 0
        %792 = vmatmul.mubr.bf16.gmra.mrb[0].mxu0 %v594
        %v793 = vpop.f32.mrb[0].mxu0
        %v794 = vadd.f32 %v555, %v793
        %v795 = vpop.f32.mrb[0].mxu0
        %v796 = vadd.f32 %v559, %v795
        %v797 = vpop.f32.mrb[0].mxu0
        %v798 = vadd.f32 %v555, %v797
        %v799 = vpop.f32.mrb[0].mxu0
        %v800 = vadd.f32 %v559, %v799
        %801 = vmatprep.mubr.bf16.mxu0 0
        %802 = vmatmul.mubr.bf16.gmra.mrb[0].mxu0 %v597
        %v803 = vpop.f32.mrb[0].mxu0
        %v804 = vadd.f32 %v555, %v803
        %v805 = vpop.f32.mrb[0].mxu0
        %v806 = vadd.f32 %v559, %v805
        %v807 = vpop.f32.mrb[0].mxu0
        %v808 = vadd.f32 %v555, %v807
        %v809 = vpop.f32.mrb[0].mxu0
        %v810 = vadd.f32 %v559, %v809
        %811 = vmatprep.mubr.bf16.mxu0 0
        %812 = vmatmul.mubr.bf16.gmra.mrb[0].mxu0 %v600
        %v813 = vpop.f32.mrb[0].mxu0
        %v814 = vadd.f32 %v555, %v813
        %v815 = vpop.f32.mrb[0].mxu0
        %v816 = vadd.f32 %v559, %v815
        %v817 = vpop.f32.mrb[0].mxu0
        %v818 = vadd.f32 %v555, %v817
        %v819 = vpop.f32.mrb[0].mxu0
        %v820 = vadd.f32 %v559, %v819
        %821 = vmatprep.mubr.bf16.mxu0 0
        %822 = vmatmul.mubr.bf16.gmra.mrb[0].mxu0 %v603
        %v823 = vpop.f32.mrb[0].mxu0
        %v824 = vadd.f32 %v555, %v823
        %v825 = vpop.f32.mrb[0].mxu0
        %v826 = vadd.f32 %v559, %v825
        %v827 = vpop.f32.mrb[0].mxu0
        %v828 = vadd.f32 %v555, %v827
        %v829 = vpop.f32.mrb[0].mxu0
        %v830 = vadd.f32 %v559, %v829
        %831 = vmatprep.mubr.bf16.mxu0 0
        %832 = vmatmul.mubr.bf16.gmra.mrb[0].mxu0 %v606
        %v833 = vpop.f32.mrb[0].mxu0
        %v834 = vadd.f32 %v555, %v833
        %v835 = vpop.f32.mrb[0].mxu0
        %v836 = vadd.f32 %v559, %v835
        %v837 = vpop.f32.mrb[0].mxu0
        %v838 = vadd.f32 %v555, %v837
        %v839 = vpop.f32.mrb[0].mxu0
        %v840 = vadd.f32 %v559, %v839
        %841 = vmatprep.mubr.bf16.mxu0 0
        %842 = vmatmul.mubr.bf16.gmra.mrb[0].mxu0 %v609
        %v843 = vpop.f32.mrb[0].mxu0
        %v844 = vadd.f32 %v555, %v843
        %v845 = vpop.f32.mrb[0].mxu0
        %v846 = vadd.f32 %v559, %v845
        %v847 = vpop.f32.mrb[0].mxu0
        %v848 = vadd.f32 %v555, %v847
        %v849 = vpop.f32.mrb[0].mxu0
        %v850 = vadd.f32 %v559, %v849
        %851 = vmatprep.mubr.bf16.mxu0 0
        %852 = vmatmul.mubr.bf16.gmra.mrb[0].mxu0 %v612
        %v853 = vpop.f32.mrb[0].mxu0
        %v854 = vadd.f32 %v555, %v853
        %v855 = vpop.f32.mrb[0].mxu0
        %v856 = vadd.f32 %v559, %v855
        %v857 = vpop.f32.mrb[0].mxu0
        %v858 = vadd.f32 %v555, %v857
        %v859 = vpop.f32.mrb[0].mxu0
        %v860 = vadd.f32 %v559, %v859
        %861 = vmatprep.mubr.bf16.mxu0 0
        %862 = vmatmul.mubr.bf16.gmra.mrb[0].mxu0 %v615
        %v863 = vpop.f32.mrb[0].mxu0
        %v864 = vadd.f32 %v555, %v863
        %v865 = vpop.f32.mrb[0].mxu0
        %v866 = vadd.f32 %v559, %v865
        %v867 = vpop.f32.mrb[0].mxu0
        %v868 = vadd.f32 %v555, %v867
        %v869 = vpop.f32.mrb[0].mxu0
        %v870 = vadd.f32 %v559, %v869
        %871 = vmatprep.mubr.bf16.mxu0 0
        %872 = vmatmul.mubr.bf16.gmra.mrb[0].mxu0 %v618
        %v873 = vpop.f32.mrb[0].mxu0
        %v874 = vadd.f32 %v555, %v873
        %v875 = vpop.f32.mrb[0].mxu0
        %v876 = vadd.f32 %v559, %v875
        %v877 = vpop.f32.mrb[0].mxu0
        %v878 = vadd.f32 %v555, %v877
        %v879 = vpop.f32.mrb[0].mxu0
        %v880 = vadd.f32 %v559, %v879
        %881 = vmatprep.mubr.bf16.mxu0 0
        %882 = vmatmul.mubr.bf16.gmra.mrb[0].mxu0 %v621
        %v883 = vpop.f32.mrb[0].mxu0
        %v884 = vadd.f32 %v555, %v883
        %v885 = vpop.f32.mrb[0].mxu0
        %v886 = vadd.f32 %v559, %v885
        %v887 = vpop.f32.mrb[0].mxu0
        %v888 = vadd.f32 %v555, %v887
        %v889 = vpop.f32.mrb[0].mxu0
        %v890 = vadd.f32 %v559, %v889
        %891 = vmatprep.mubr.bf16.mxu0 0
        %892 = vmatmul.mubr.bf16.gmra.mrb[0].mxu0 %v624
        %v893 = vpop.f32.mrb[0].mxu0
        %v894 = vadd.f32 %v555, %v893
        %v895 = vpop.f32.mrb[0].mxu0
        %v896 = vadd.f32 %v559, %v895
        %v897 = vpop.f32.mrb[0].mxu0
        %v898 = vadd.f32 %v555, %v897
        %v899 = vpop.f32.mrb[0].mxu0
        %v900 = vadd.f32 %v559, %v899
        %901 = vmatprep.mubr.bf16.mxu0 0
        %902 = vmatmul.mubr.bf16.gmra.mrb[0].mxu0 %v627
        %v903 = vpop.f32.mrb[0].mxu0
        %v904 = vadd.f32 %v555, %v903
        %v905 = vpop.f32.mrb[0].mxu0
        %v906 = vadd.f32 %v559, %v905
        %v907 = vpop.f32.mrb[0].mxu0
        %v908 = vadd.f32 %v555, %v907
        %v909 = vpop.f32.mrb[0].mxu0
        %v910 = vadd.f32 %v559, %v909
        %911 = vmatprep.mubr.bf16.mxu0 0
        %912 = vmatmul.mubr.bf16.gmra.mrb[0].mxu0 %v630
        %v913 = vpop.f32.mrb[0].mxu0
        %v914 = vadd.f32 %v555, %v913
        %v915 = vpop.f32.mrb[0].mxu0
        %v916 = vadd.f32 %v559, %v915
        %v917 = vpop.f32.mrb[0].mxu0
        %v918 = vadd.f32 %v555, %v917
        %v919 = vpop.f32.mrb[0].mxu0
        %v920 = vadd.f32 %v559, %v919
        %921 = vmatprep.mubr.bf16.mxu0 0
        %922 = vmatmul.mubr.bf16.gmra.mrb[0].mxu0 %v633
        %v923 = vpop.f32.mrb[0].mxu0
        %v924 = vadd.f32 %v555, %v923
        %v925 = vpop.f32.mrb[0].mxu0
        %v926 = vadd.f32 %v559, %v925
        %v927 = vpop.f32.mrb[0].mxu0
        %v928 = vadd.f32 %v555, %v927
        %v929 = vpop.f32.mrb[0].mxu0
        %v930 = vadd.f32 %v559, %v929
        %931 = vmatprep.mubr.bf16.mxu0 0
        %932 = vmatmul.mubr.bf16.gmra.mrb[0].mxu0 %v636
        %v933 = vpop.f32.mrb[0].mxu0
        %v934 = vadd.f32 %v555, %v933
        %v935 = vpop.f32.mrb[0].mxu0
        %v936 = vadd.f32 %v559, %v935
        %v937 = vpop.f32.mrb[0].mxu0
        %v938 = vadd.f32 %v555, %v937
        %v939 = vpop.f32.mrb[0].mxu0
        %v940 = vadd.f32 %v559, %v939
        %941 = vmatprep.mubr.bf16.mxu0 0
        %942 = vmatmul.mubr.bf16.gmra.mrb[0].mxu0 %v639
        %v943 = vpop.f32.mrb[0].mxu0
        %v944 = vadd.f32 %v555, %v943
        %v945 = vpop.f32.mrb[0].mxu0
        %v946 = vadd.f32 %v559, %v945
        %v947 = vpop.f32.mrb[0].mxu0
        %v948 = vadd.f32 %v555, %v947
        %v949 = vpop.f32.mrb[0].mxu0
        %v950 = vadd.f32 %v559, %v949
        %951 = vmatprep.mubr.bf16.mxu0 0
        %952 = vmatmul.mubr.bf16.gmra.mrb[0].mxu0 %v642
        %v953 = vpop.f32.mrb[0].mxu0
        %v954 = vadd.f32 %v555, %v953
        %v955 = vpop.f32.mrb[0].mxu0
        %v956 = vadd.f32 %v559, %v955
        %v957 = vpop.f32.mrb[0].mxu0
        %v958 = vadd.f32 %v555, %v957
        %v959 = vpop.f32.mrb[0].mxu0
        %v960 = vadd.f32 %v559, %v959
        %961 = vmatprep.mubr.bf16.mxu0 0
        %962 = vmatmul.mubr.bf16.gmra.mrb[0].mxu0 %v645
        %v963 = vpop.f32.mrb[0].mxu0
        %v964 = vadd.f32 %v555, %v963
        %v965 = vpop.f32.mrb[0].mxu0
        %v966 = vadd.f32 %v559, %v965
        %v967 = vpop.f32.mrb[0].mxu0
        %v968 = vadd.f32 %v555, %v967
        %v969 = vpop.f32.mrb[0].mxu0
        %v970 = vadd.f32 %v559, %v969
        %971 = vmatprep.mubr.bf16.mxu0 0
        %972 = vmatmul.mubr.bf16.gmra.mrb[0].mxu0 %v648
        %v973 = vpop.f32.mrb[0].mxu0
        %v974 = vadd.f32 %v555, %v973
        %v975 = vpop.f32.mrb[0].mxu0
        %v976 = vadd.f32 %v559, %v975
        %v977 = vpop.f32.mrb[0].mxu0
        %v978 = vadd.f32 %v555, %v977
        %v979 = vpop.f32.mrb[0].mxu0
        %v980 = vadd.f32 %v559, %v979
        %981 = vmatprep.mubr.bf16.mxu0 0
        %982 = vmatmul.mubr.bf16.gmra.mrb[0].mxu0 %v651
        %v983 = vpop.f32.mrb[0].mxu0
        %v984 = vadd.f32 %v555, %v983
        %v985 = vpop.f32.mrb[0].mxu0
        %v986 = vadd.f32 %v559, %v985
        %v987 = vpop.f32.mrb[0].mxu0
        %v988 = vadd.f32 %v555, %v987
        %v989 = vpop.f32.mrb[0].mxu0
        %v990 = vadd.f32 %v559, %v989
        %991 = vmatprep.mubr.bf16.mxu0 0
        %992 = vmatmul.mubr.bf16.gmra.mrb[0].mxu0 %v654
        %v993 = vpop.f32.mrb[0].mxu0
        %v994 = vadd.f32 %v555, %v993
        %v995 = vpop.f32.mrb[0].mxu0
        %v996 = vadd.f32 %v559, %v995
        %v997 = vpop.f32.mrb[0].mxu0
        %v998 = vadd.f32 %v555, %v997
        %v999 = vpop.f32.mrb[0].mxu0
        %v1000 = vadd.f32 %v559, %v999
        %1001 = vmatprep.mubr.bf16.mxu0 0
        %1002 = vmatmul.mubr.bf16.gmra.mrb[0].mxu0 %v657
        %v1003 = vpop.f32.mrb[0].mxu0
        %v1004 = vadd.f32 %v555, %v1003
        %v1005 = vpop.f32.mrb[0].mxu0
        %v1006 = vadd.f32 %v559, %v1005
        %v1007 = vpop.f32.mrb[0].mxu0
        %v1008 = vadd.f32 %v555, %v1007
        %v1009 = vpop.f32.mrb[0].mxu0
        %v1010 = vadd.f32 %v559, %v1009
        %1011 = vdwg.mxu0
        %v1012 = vmax.f32 %v694, 0.0
        %v1013 = vmax.f32 %v696, 0.0
        %v1014 = vmax.f32 %v698, 0.0
        %v1015 = vmax.f32 %v700, 0.0
        %v1016 = vmax.f32 %v704, 0.0
        %v1017 = vmax.f32 %v706, 0.0
        %v1018 = vmax.f32 %v708, 0.0
        %v1019 = vmax.f32 %v710, 0.0
        %v1020 = vmax.f32 %v714, 0.0
        %v1021 = vmax.f32 %v716, 0.0
        %v1022 = vmax.f32 %v718, 0.0
        %v1023 = vmax.f32 %v720, 0.0
        %v1024 = vmax.f32 %v724, 0.0
        %v1025 = vmax.f32 %v726, 0.0
        %v1026 = vmax.f32 %v728, 0.0
        %v1027 = vmax.f32 %v730, 0.0
        %v1028 = vmax.f32 %v734, 0.0
        %v1029 = vmax.f32 %v736, 0.0
        %v1030 = vmax.f32 %v738, 0.0
        %v1031 = vmax.f32 %v740, 0.0
        %v1032 = vmax.f32 %v744, 0.0
        %v1033 = vmax.f32 %v746, 0.0
        %v1034 = vmax.f32 %v748, 0.0
        %v1035 = vmax.f32 %v750, 0.0
        %v1036 = vmax.f32 %v754, 0.0
        %v1037 = vmax.f32 %v756, 0.0
        %v1038 = vmax.f32 %v758, 0.0
        %v1039 = vmax.f32 %v760, 0.0
        %v1040 = vmax.f32 %v764, 0.0
        %v1041 = vmax.f32 %v766, 0.0
        %v1042 = vmax.f32 %v768, 0.0
        %v1043 = vmax.f32 %v770, 0.0
        %v1044 = vmax.f32 %v774, 0.0
        %v1045 = vmax.f32 %v776, 0.0
        %v1046 = vmax.f32 %v778, 0.0
        %v1047 = vmax.f32 %v780, 0.0
        %v1048 = vmax.f32 %v784, 0.0
        %v1049 = vmax.f32 %v786, 0.0
        %v1050 = vmax.f32 %v788, 0.0
        %v1051 = vmax.f32 %v790, 0.0
        %v1052 = vmax.f32 %v794, 0.0
        %v1053 = vmax.f32 %v796, 0.0
        %v1054 = vmax.f32 %v798, 0.0
        %v1055 = vmax.f32 %v800, 0.0
        %v1056 = vmax.f32 %v804, 0.0
        %v1057 = vmax.f32 %v806, 0.0
        %v1058 = vmax.f32 %v808, 0.0
        %v1059 = vmax.f32 %v810, 0.0
        %v1060 = vmax.f32 %v814, 0.0
        %v1061 = vmax.f32 %v816, 0.0
        %v1062 = vmax.f32 %v818, 0.0
        %v1063 = vmax.f32 %v820, 0.0
        %v1064 = vmax.f32 %v824, 0.0
        %v1065 = vmax.f32 %v826, 0.0
        %v1066 = vmax.f32 %v828, 0.0
        %v1067 = vmax.f32 %v830, 0.0
        %v1068 = vmax.f32 %v834, 0.0
        %v1069 = vmax.f32 %v836, 0.0
        %v1070 = vmax.f32 %v838, 0.0
        %v1071 = vmax.f32 %v840, 0.0
        %v1072 = vmax.f32 %v844, 0.0
        %v1073 = vmax.f32 %v846, 0.0
        %v1074 = vmax.f32 %v848, 0.0
        %v1075 = vmax.f32 %v850, 0.0
        %v1076 = vmax.f32 %v854, 0.0
        %v1077 = vmax.f32 %v856, 0.0
        %v1078 = vmax.f32 %v858, 0.0
        %v1079 = vmax.f32 %v860, 0.0
        %v1080 = vmax.f32 %v864, 0.0
        %v1081 = vmax.f32 %v866, 0.0
        %v1082 = vmax.f32 %v868, 0.0
        %v1083 = vmax.f32 %v870, 0.0
        %v1084 = vmax.f32 %v874, 0.0
        %v1085 = vmax.f32 %v876, 0.0
        %v1086 = vmax.f32 %v878, 0.0
        %v1087 = vmax.f32 %v880, 0.0
        %v1088 = vmax.f32 %v884, 0.0
        %v1089 = vmax.f32 %v886, 0.0
        %v1090 = vmax.f32 %v888, 0.0
        %v1091 = vmax.f32 %v890, 0.0
        %v1092 = vmax.f32 %v894, 0.0
        %v1093 = vmax.f32 %v896, 0.0
        %v1094 = vmax.f32 %v898, 0.0
        %v1095 = vmax.f32 %v900, 0.0
        %v1096 = vmax.f32 %v904, 0.0
        %v1097 = vmax.f32 %v906, 0.0
        %v1098 = vmax.f32 %v908, 0.0
        %v1099 = vmax.f32 %v910, 0.0
        %v1100 = vmax.f32 %v914, 0.0
        %v1101 = vmax.f32 %v916, 0.0
        %v1102 = vmax.f32 %v918, 0.0
        %v1103 = vmax.f32 %v920, 0.0
        %v1104 = vmax.f32 %v924, 0.0
        %v1105 = vmax.f32 %v926, 0.0
        %v1106 = vmax.f32 %v928, 0.0
        %v1107 = vmax.f32 %v930, 0.0
        %v1108 = vmax.f32 %v934, 0.0
        %v1109 = vmax.f32 %v936, 0.0
        %v1110 = vmax.f32 %v938, 0.0
        %v1111 = vmax.f32 %v940, 0.0
        %v1112 = vmax.f32 %v944, 0.0
        %v1113 = vmax.f32 %v946, 0.0
        %v1114 = vmax.f32 %v948, 0.0
        %v1115 = vmax.f32 %v950, 0.0
        %v1116 = vmax.f32 %v954, 0.0
        %v1117 = vmax.f32 %v956, 0.0
        %v1118 = vmax.f32 %v958, 0.0
        %v1119 = vmax.f32 %v960, 0.0
        %v1120 = vmax.f32 %v964, 0.0
        %v1121 = vmax.f32 %v966, 0.0
        %v1122 = vmax.f32 %v968, 0.0
        %v1123 = vmax.f32 %v970, 0.0
        %v1124 = vmax.f32 %v974, 0.0
        %v1125 = vmax.f32 %v976, 0.0
        %v1126 = vmax.f32 %v978, 0.0
        %v1127 = vmax.f32 %v980, 0.0
        %v1128 = vmax.f32 %v984, 0.0
        %v1129 = vmax.f32 %v986, 0.0
        %v1130 = vmax.f32 %v988, 0.0
        %v1131 = vmax.f32 %v990, 0.0
        %v1132 = vmax.f32 %v994, 0.0
        %v1133 = vmax.f32 %v996, 0.0
        %v1134 = vmax.f32 %v998, 0.0
        %v1135 = vmax.f32 %v1000, 0.0
        %v1136 = vmax.f32 %v1004, 0.0
        %v1137 = vmax.f32 %v1006, 0.0
        %v1138 = vmax.f32 %v1008, 0.0
        %v1139 = vmax.f32 %v1010, 0.0
        %v1140 = vpack.c.bf16 %v1014, %v1012
        %v1141 = vpack.c.bf16 %v1015, %v1013
        %v1142 = vpack.c.bf16 %v1018, %v1016
        %v1143 = vpack.c.bf16 %v1019, %v1017
        %v1144 = vpack.c.bf16 %v1022, %v1020
        %v1145 = vpack.c.bf16 %v1023, %v1021
        %v1146 = vpack.c.bf16 %v1026, %v1024
        %v1147 = vpack.c.bf16 %v1027, %v1025
        %v1148 = vpack.c.bf16 %v1030, %v1028
        %v1149 = vpack.c.bf16 %v1031, %v1029
        %v1150 = vpack.c.bf16 %v1034, %v1032
        %v1151 = vpack.c.bf16 %v1035, %v1033
        %v1152 = vpack.c.bf16 %v1038, %v1036
        %v1153 = vpack.c.bf16 %v1039, %v1037
        %v1154 = vpack.c.bf16 %v1042, %v1040
        %v1155 = vpack.c.bf16 %v1043, %v1041
        %v1156 = vpack.c.bf16 %v1046, %v1044
        %v1157 = vpack.c.bf16 %v1047, %v1045
        %v1158 = vpack.c.bf16 %v1050, %v1048
        %v1159 = vpack.c.bf16 %v1051, %v1049
        %v1160 = vpack.c.bf16 %v1054, %v1052
        %v1161 = vpack.c.bf16 %v1055, %v1053
        %v1162 = vpack.c.bf16 %v1058, %v1056
        %v1163 = vpack.c.bf16 %v1059, %v1057
        %v1164 = vpack.c.bf16 %v1062, %v1060
        %v1165 = vpack.c.bf16 %v1063, %v1061
        %v1166 = vpack.c.bf16 %v1066, %v1064
        %v1167 = vpack.c.bf16 %v1067, %v1065
        %v1168 = vpack.c.bf16 %v1070, %v1068
        %v1169 = vpack.c.bf16 %v1071, %v1069
        %v1170 = vpack.c.bf16 %v1074, %v1072
        %v1171 = vpack.c.bf16 %v1075, %v1073
        %v1172 = vpack.c.bf16 %v1078, %v1076
        %v1173 = vpack.c.bf16 %v1079, %v1077
        %v1174 = vpack.c.bf16 %v1082, %v1080
        %v1175 = vpack.c.bf16 %v1083, %v1081
        %v1176 = vpack.c.bf16 %v1086, %v1084
        %v1177 = vpack.c.bf16 %v1087, %v1085
        %v1178 = vpack.c.bf16 %v1090, %v1088
        %v1179 = vpack.c.bf16 %v1091, %v1089
        %v1180 = vpack.c.bf16 %v1094, %v1092
        %v1181 = vpack.c.bf16 %v1095, %v1093
        %v1182 = vpack.c.bf16 %v1098, %v1096
        %v1183 = vpack.c.bf16 %v1099, %v1097
        %v1184 = vpack.c.bf16 %v1102, %v1100
        %v1185 = vpack.c.bf16 %v1103, %v1101
        %v1186 = vpack.c.bf16 %v1106, %v1104
        %v1187 = vpack.c.bf16 %v1107, %v1105
        %v1188 = vpack.c.bf16 %v1110, %v1108
        %v1189 = vpack.c.bf16 %v1111, %v1109
        %v1190 = vpack.c.bf16 %v1114, %v1112
        %v1191 = vpack.c.bf16 %v1115, %v1113
        %v1192 = vpack.c.bf16 %v1118, %v1116
        %v1193 = vpack.c.bf16 %v1119, %v1117
        %v1194 = vpack.c.bf16 %v1122, %v1120
        %v1195 = vpack.c.bf16 %v1123, %v1121
        %v1196 = vpack.c.bf16 %v1126, %v1124
        %v1197 = vpack.c.bf16 %v1127, %v1125
        %v1198 = vpack.c.bf16 %v1130, %v1128
        %v1199 = vpack.c.bf16 %v1131, %v1129
        %v1200 = vpack.c.bf16 %v1134, %v1132
        %v1201 = vpack.c.bf16 %v1135, %v1133
        %v1202 = vpack.c.bf16 %v1138, %v1136
        %v1203 = vpack.c.bf16 %v1139, %v1137
        %v1204 = vld [vmem:[%s4] sm:$0xff]
        %v1205 = vld [vmem:[%s4 + $0x8] sm:$0xff]
        %v1206 = vld [vmem:[%s4 + $0x10] sm:$0xff]
        %v1207 = vld [vmem:[%s4 + $0x18] sm:$0xff]
        %v1208 = vld [vmem:[%s4 + $0x20] sm:$0xff]
        %v1209 = vld [vmem:[%s4 + $0x28] sm:$0xff]
        %v1210 = vld [vmem:[%s4 + $0x30] sm:$0xff]
        %v1211 = vld [vmem:[%s4 + $0x38] sm:$0xff]
        %v1212 = vld [vmem:[%s4 + $0x40] sm:$0xff]
        %v1213 = vld [vmem:[%s4 + $0x48] sm:$0xff]
        %v1214 = vld [vmem:[%s4 + $0x50] sm:$0xff]
        %v1215 = vld [vmem:[%s4 + $0x58] sm:$0xff]
        %v1216 = vld [vmem:[%s4 + $0x60] sm:$0xff]
        %v1217 = vld [vmem:[%s4 + $0x68] sm:$0xff]
        %v1218 = vld [vmem:[%s4 + $0x70] sm:$0xff]
        %v1219 = vld [vmem:[%s4 + $0x78] sm:$0xff]
        %v1220 = vld [vmem:[%s4 + $0x80] sm:$0xff]
        %v1221 = vld [vmem:[%s4 + $0x88] sm:$0xff]
        %v1222 = vld [vmem:[%s4 + $0x90] sm:$0xff]
        %v1223 = vld [vmem:[%s4 + $0x98] sm:$0xff]
        %v1224 = vld [vmem:[%s4 + $0xa0] sm:$0xff]
        %v1225 = vld [vmem:[%s4 + $0xa8] sm:$0xff]
        %v1226 = vld [vmem:[%s4 + $0xb0] sm:$0xff]
        %v1227 = vld [vmem:[%s4 + $0xb8] sm:$0xff]
        %v1228 = vld [vmem:[%s4 + $0xc0] sm:$0xff]
        %v1229 = vld [vmem:[%s4 + $0xc8] sm:$0xff]
        %v1230 = vld [vmem:[%s4 + $0xd0] sm:$0xff]
        %v1231 = vld [vmem:[%s4 + $0xd8] sm:$0xff]
        %v1232 = vld [vmem:[%s4 + $0xe0] sm:$0xff]
        %v1233 = vld [vmem:[%s4 + $0xe8] sm:$0xff]
        %v1234 = vld [vmem:[%s4 + $0xf0] sm:$0xff]
        %v1235 = vld [vmem:[%s4 + $0xf8] sm:$0xff]
        %v1236 = vld [vmem:[%s4 + $0x100] sm:$0xff]
        %v1237 = vld [vmem:[%s4 + $0x108] sm:$0xff]
        %v1238 = vld [vmem:[%s4 + $0x110] sm:$0xff]
        %v1239 = vld [vmem:[%s4 + $0x118] sm:$0xff]
        %v1240 = vld [vmem:[%s4 + $0x120] sm:$0xff]
        %v1241 = vld [vmem:[%s4 + $0x128] sm:$0xff]
        %v1242 = vld [vmem:[%s4 + $0x130] sm:$0xff]
        %v1243 = vld [vmem:[%s4 + $0x138] sm:$0xff]
        %v1244 = vld [vmem:[%s4 + $0x140] sm:$0xff]
        %v1245 = vld [vmem:[%s4 + $0x148] sm:$0xff]
        %v1246 = vld [vmem:[%s4 + $0x150] sm:$0xff]
        %v1247 = vld [vmem:[%s4 + $0x158] sm:$0xff]
        %v1248 = vld [vmem:[%s4 + $0x160] sm:$0xff]
        %v1249 = vld [vmem:[%s4 + $0x168] sm:$0xff]
        %v1250 = vld [vmem:[%s4 + $0x170] sm:$0xff]
        %v1251 = vld [vmem:[%s4 + $0x178] sm:$0xff]
        %v1252 = vld [vmem:[%s4 + $0x180] sm:$0xff]
        %v1253 = vld [vmem:[%s4 + $0x188] sm:$0xff]
        %v1254 = vld [vmem:[%s4 + $0x190] sm:$0xff]
        %v1255 = vld [vmem:[%s4 + $0x198] sm:$0xff]
        %v1256 = vld [vmem:[%s4 + $0x1a0] sm:$0xff]
        %v1257 = vld [vmem:[%s4 + $0x1a8] sm:$0xff]
        %v1258 = vld [vmem:[%s4 + $0x1b0] sm:$0xff]
        %v1259 = vld [vmem:[%s4 + $0x1b8] sm:$0xff]
        %v1260 = vld [vmem:[%s4 + $0x1c0] sm:$0xff]
        %v1261 = vld [vmem:[%s4 + $0x1c8] sm:$0xff]
        %v1262 = vld [vmem:[%s4 + $0x1d0] sm:$0xff]
        %v1263 = vld [vmem:[%s4 + $0x1d8] sm:$0xff]
        %v1264 = vld [vmem:[%s4 + $0x1e0] sm:$0xff]
        %v1265 = vld [vmem:[%s4 + $0x1e8] sm:$0xff]
        %v1266 = vld [vmem:[%s4 + $0x1f0] sm:$0xff]
        %v1267 = vld [vmem:[%s4 + $0x1f8] sm:$0xff]
        %v1268 = vpack.c.bf16 %v1206, %v1204
        %v1269 = vpack.c.bf16 %v1207, %v1205
        %v1270 = vpack.c.bf16 %v1210, %v1208
        %v1271 = vpack.c.bf16 %v1211, %v1209
        %v1272 = vpack.c.bf16 %v1214, %v1212
        %v1273 = vpack.c.bf16 %v1215, %v1213
        %v1274 = vpack.c.bf16 %v1218, %v1216
        %v1275 = vpack.c.bf16 %v1219, %v1217
        %v1276 = vpack.c.bf16 %v1222, %v1220
        %v1277 = vpack.c.bf16 %v1223, %v1221
        %v1278 = vpack.c.bf16 %v1226, %v1224
        %v1279 = vpack.c.bf16 %v1227, %v1225
        %v1280 = vpack.c.bf16 %v1230, %v1228
        %v1281 = vpack.c.bf16 %v1231, %v1229
        %v1282 = vpack.c.bf16 %v1234, %v1232
        %v1283 = vpack.c.bf16 %v1235, %v1233
        %v1284 = vpack.c.bf16 %v1238, %v1236
        %v1285 = vpack.c.bf16 %v1239, %v1237
        %v1286 = vpack.c.bf16 %v1242, %v1240
        %v1287 = vpack.c.bf16 %v1243, %v1241
        %v1288 = vpack.c.bf16 %v1246, %v1244
        %v1289 = vpack.c.bf16 %v1247, %v1245
        %v1290 = vpack.c.bf16 %v1250, %v1248
        %v1291 = vpack.c.bf16 %v1251, %v1249
        %v1292 = vpack.c.bf16 %v1254, %v1252
        %v1293 = vpack.c.bf16 %v1255, %v1253
        %v1294 = vpack.c.bf16 %v1258, %v1256
        %v1295 = vpack.c.bf16 %v1259, %v1257
        %v1296 = vpack.c.bf16 %v1262, %v1260
        %v1297 = vpack.c.bf16 %v1263, %v1261
        %v1298 = vpack.c.bf16 %v1266, %v1264
        %v1299 = vpack.c.bf16 %v1267, %v1265
        %v1300 = vld [vmem:[%s5] sm:$0x3]
        %v1302 = vlaneseq
        %v1303 = vshrl.u32 %v1302, 7
        %v1304 = vsub.s32 0, %v1303
        %v1305 = vrot.slane %v1300, %v1304
        %v1306 = vlaneseq
        %v1307 = vshrl.u32 %v1306, 7
        %v1308 = vsub.s32 1, %v1307
        %v1309 = vrot.slane %v1300, %v1308
        %1312 = vmatprep.subr.bf16.mxu0 %v1269
        %1313 = vmatpush1.bf16.msra.mxu0 %v1268
        %1314 = vmatprep.subr.bf16.mxu0 %v1271
        %1315 = vmatpush1.bf16.msra.mxu0 %v1270
        %1316 = vmatprep.subr.bf16.mxu0 %v1273
        %1317 = vmatpush1.bf16.msra.mxu0 %v1272
        %1318 = vmatprep.subr.bf16.mxu0 %v1275
        %1319 = vmatpush1.bf16.msra.mxu0 %v1274
        %1320 = vmatprep.subr.bf16.mxu0 %v1277
        %1321 = vmatpush1.bf16.msra.mxu0 %v1276
        %1322 = vmatprep.subr.bf16.mxu0 %v1279
        %1323 = vmatpush1.bf16.msra.mxu0 %v1278
        %1324 = vmatprep.subr.bf16.mxu0 %v1281
        %1325 = vmatpush1.bf16.msra.mxu0 %v1280
        %1326 = vmatprep.subr.bf16.mxu0 %v1283
        %1327 = vmatpush1.bf16.msra.mxu0 %v1282
        %1328 = vmatprep.subr.bf16.mxu0 %v1285
        %1329 = vmatpush1.bf16.msra.mxu0 %v1284
        %1330 = vmatprep.subr.bf16.mxu0 %v1287
        %1331 = vmatpush1.bf16.msra.mxu0 %v1286
        %1332 = vmatprep.subr.bf16.mxu0 %v1289
        %1333 = vmatpush1.bf16.msra.mxu0 %v1288
        %1334 = vmatprep.subr.bf16.mxu0 %v1291
        %1335 = vmatpush1.bf16.msra.mxu0 %v1290
        %1336 = vmatprep.subr.bf16.mxu0 %v1293
        %1337 = vmatpush1.bf16.msra.mxu0 %v1292
        %1338 = vmatprep.subr.bf16.mxu0 %v1295
        %1339 = vmatpush1.bf16.msra.mxu0 %v1294
        %1340 = vmatprep.subr.bf16.mxu0 %v1297
        %1341 = vmatpush1.bf16.msra.mxu0 %v1296
        %1342 = vmatprep.subr.bf16.mxu0 %v1299
        %1343 = vmatpush1.bf16.msra.mxu0 %v1298
        %1344 = vmatprep.mubr.bf16.mxu0 %v1141
        %1345 = vmatmul.mubr.bf16.gmra.mrb[0].mxu0 %v1140
        %v1346 = vpop.f32.mrb[0].mxu0
        %v1347 = vadd.f32 %v1305, %v1346
        %v1348 = vpop.f32.mrb[0].mxu0
        %v1349 = vadd.f32 %v1309, %v1348
        %v1350 = vpop.f32.mrb[0].mxu0
        %v1351 = vadd.f32 %v1305, %v1350
        %v1352 = vpop.f32.mrb[0].mxu0
        %v1353 = vadd.f32 %v1309, %v1352
        %1354 = vmatprep.mubr.bf16.mxu0 %v1143
        %1355 = vmatmul.mubr.bf16.gmra.mrb[0].mxu0 %v1142
        %v1356 = vpop.f32.mrb[0].mxu0
        %v1357 = vadd.f32 %v1305, %v1356
        %v1358 = vpop.f32.mrb[0].mxu0
        %v1359 = vadd.f32 %v1309, %v1358
        %v1360 = vpop.f32.mrb[0].mxu0
        %v1361 = vadd.f32 %v1305, %v1360
        %v1362 = vpop.f32.mrb[0].mxu0
        %v1363 = vadd.f32 %v1309, %v1362
        %1364 = vmatprep.mubr.bf16.mxu0 %v1145
        %1365 = vmatmul.mubr.bf16.gmra.mrb[0].mxu0 %v1144
        %v1366 = vpop.f32.mrb[0].mxu0
        %v1367 = vadd.f32 %v1305, %v1366
        %v1368 = vpop.f32.mrb[0].mxu0
        %v1369 = vadd.f32 %v1309, %v1368
        %v1370 = vpop.f32.mrb[0].mxu0
        %v1371 = vadd.f32 %v1305, %v1370
        %v1372 = vpop.f32.mrb[0].mxu0
        %v1373 = vadd.f32 %v1309, %v1372
        %1374 = vmatprep.mubr.bf16.mxu0 %v1147
        %1375 = vmatmul.mubr.bf16.gmra.mrb[0].mxu0 %v1146
        %v1376 = vpop.f32.mrb[0].mxu0
        %v1377 = vadd.f32 %v1305, %v1376
        %v1378 = vpop.f32.mrb[0].mxu0
        %v1379 = vadd.f32 %v1309, %v1378
        %v1380 = vpop.f32.mrb[0].mxu0
        %v1381 = vadd.f32 %v1305, %v1380
        %v1382 = vpop.f32.mrb[0].mxu0
        %v1383 = vadd.f32 %v1309, %v1382
        %1384 = vmatprep.mubr.bf16.mxu0 %v1149
        %1385 = vmatmul.mubr.bf16.gmra.mrb[0].mxu0 %v1148
        %v1386 = vpop.f32.mrb[0].mxu0
        %v1387 = vadd.f32 %v1305, %v1386
        %v1388 = vpop.f32.mrb[0].mxu0
        %v1389 = vadd.f32 %v1309, %v1388
        %v1390 = vpop.f32.mrb[0].mxu0
        %v1391 = vadd.f32 %v1305, %v1390
        %v1392 = vpop.f32.mrb[0].mxu0
        %v1393 = vadd.f32 %v1309, %v1392
        %1394 = vmatprep.mubr.bf16.mxu0 %v1151
        %1395 = vmatmul.mubr.bf16.gmra.mrb[0].mxu0 %v1150
        %v1396 = vpop.f32.mrb[0].mxu0
        %v1397 = vadd.f32 %v1305, %v1396
        %v1398 = vpop.f32.mrb[0].mxu0
        %v1399 = vadd.f32 %v1309, %v1398
        %v1400 = vpop.f32.mrb[0].mxu0
        %v1401 = vadd.f32 %v1305, %v1400
        %v1402 = vpop.f32.mrb[0].mxu0
        %v1403 = vadd.f32 %v1309, %v1402
        %1404 = vmatprep.mubr.bf16.mxu0 %v1153
        %1405 = vmatmul.mubr.bf16.gmra.mrb[0].mxu0 %v1152
        %v1406 = vpop.f32.mrb[0].mxu0
        %v1407 = vadd.f32 %v1305, %v1406
        %v1408 = vpop.f32.mrb[0].mxu0
        %v1409 = vadd.f32 %v1309, %v1408
        %v1410 = vpop.f32.mrb[0].mxu0
        %v1411 = vadd.f32 %v1305, %v1410
        %v1412 = vpop.f32.mrb[0].mxu0
        %v1413 = vadd.f32 %v1309, %v1412
        %1414 = vmatprep.mubr.bf16.mxu0 %v1155
        %1415 = vmatmul.mubr.bf16.gmra.mrb[0].mxu0 %v1154
        %v1416 = vpop.f32.mrb[0].mxu0
        %v1417 = vadd.f32 %v1305, %v1416
        %v1418 = vpop.f32.mrb[0].mxu0
        %v1419 = vadd.f32 %v1309, %v1418
        %v1420 = vpop.f32.mrb[0].mxu0
        %v1421 = vadd.f32 %v1305, %v1420
        %v1422 = vpop.f32.mrb[0].mxu0
        %v1423 = vadd.f32 %v1309, %v1422
        %1424 = vmatprep.mubr.bf16.mxu0 %v1157
        %1425 = vmatmul.mubr.bf16.gmra.mrb[0].mxu0 %v1156
        %v1426 = vpop.f32.mrb[0].mxu0
        %v1427 = vadd.f32 %v1305, %v1426
        %v1428 = vpop.f32.mrb[0].mxu0
        %v1429 = vadd.f32 %v1309, %v1428
        %v1430 = vpop.f32.mrb[0].mxu0
        %v1431 = vadd.f32 %v1305, %v1430
        %v1432 = vpop.f32.mrb[0].mxu0
        %v1433 = vadd.f32 %v1309, %v1432
        %1434 = vmatprep.mubr.bf16.mxu0 %v1159
        %1435 = vmatmul.mubr.bf16.gmra.mrb[0].mxu0 %v1158
        %v1436 = vpop.f32.mrb[0].mxu0
        %v1437 = vadd.f32 %v1305, %v1436
        %v1438 = vpop.f32.mrb[0].mxu0
        %v1439 = vadd.f32 %v1309, %v1438
        %v1440 = vpop.f32.mrb[0].mxu0
        %v1441 = vadd.f32 %v1305, %v1440
        %v1442 = vpop.f32.mrb[0].mxu0
        %v1443 = vadd.f32 %v1309, %v1442
        %1444 = vmatprep.mubr.bf16.mxu0 %v1161
        %1445 = vmatmul.mubr.bf16.gmra.mrb[0].mxu0 %v1160
        %v1446 = vpop.f32.mrb[0].mxu0
        %v1447 = vadd.f32 %v1305, %v1446
        %v1448 = vpop.f32.mrb[0].mxu0
        %v1449 = vadd.f32 %v1309, %v1448
        %v1450 = vpop.f32.mrb[0].mxu0
        %v1451 = vadd.f32 %v1305, %v1450
        %v1452 = vpop.f32.mrb[0].mxu0
        %v1453 = vadd.f32 %v1309, %v1452
        %1454 = vmatprep.mubr.bf16.mxu0 %v1163
        %1455 = vmatmul.mubr.bf16.gmra.mrb[0].mxu0 %v1162
        %v1456 = vpop.f32.mrb[0].mxu0
        %v1457 = vadd.f32 %v1305, %v1456
        %v1458 = vpop.f32.mrb[0].mxu0
        %v1459 = vadd.f32 %v1309, %v1458
        %v1460 = vpop.f32.mrb[0].mxu0
        %v1461 = vadd.f32 %v1305, %v1460
        %v1462 = vpop.f32.mrb[0].mxu0
        %v1463 = vadd.f32 %v1309, %v1462
        %1464 = vmatprep.mubr.bf16.mxu0 %v1165
        %1465 = vmatmul.mubr.bf16.gmra.mrb[0].mxu0 %v1164
        %v1466 = vpop.f32.mrb[0].mxu0
        %v1467 = vadd.f32 %v1305, %v1466
        %v1468 = vpop.f32.mrb[0].mxu0
        %v1469 = vadd.f32 %v1309, %v1468
        %v1470 = vpop.f32.mrb[0].mxu0
        %v1471 = vadd.f32 %v1305, %v1470
        %v1472 = vpop.f32.mrb[0].mxu0
        %v1473 = vadd.f32 %v1309, %v1472
        %1474 = vmatprep.mubr.bf16.mxu0 %v1167
        %1475 = vmatmul.mubr.bf16.gmra.mrb[0].mxu0 %v1166
        %v1476 = vpop.f32.mrb[0].mxu0
        %v1477 = vadd.f32 %v1305, %v1476
        %v1478 = vpop.f32.mrb[0].mxu0
        %v1479 = vadd.f32 %v1309, %v1478
        %v1480 = vpop.f32.mrb[0].mxu0
        %v1481 = vadd.f32 %v1305, %v1480
        %v1482 = vpop.f32.mrb[0].mxu0
        %v1483 = vadd.f32 %v1309, %v1482
        %1484 = vmatprep.mubr.bf16.mxu0 %v1169
        %1485 = vmatmul.mubr.bf16.gmra.mrb[0].mxu0 %v1168
        %v1486 = vpop.f32.mrb[0].mxu0
        %v1487 = vadd.f32 %v1305, %v1486
        %v1488 = vpop.f32.mrb[0].mxu0
        %v1489 = vadd.f32 %v1309, %v1488
        %v1490 = vpop.f32.mrb[0].mxu0
        %v1491 = vadd.f32 %v1305, %v1490
        %v1492 = vpop.f32.mrb[0].mxu0
        %v1493 = vadd.f32 %v1309, %v1492
        %1494 = vmatprep.mubr.bf16.mxu0 %v1171
        %1495 = vmatmul.mubr.bf16.gmra.mrb[0].mxu0 %v1170
        %v1496 = vpop.f32.mrb[0].mxu0
        %v1497 = vadd.f32 %v1305, %v1496
        %v1498 = vpop.f32.mrb[0].mxu0
        %v1499 = vadd.f32 %v1309, %v1498
        %v1500 = vpop.f32.mrb[0].mxu0
        %v1501 = vadd.f32 %v1305, %v1500
        %v1502 = vpop.f32.mrb[0].mxu0
        %v1503 = vadd.f32 %v1309, %v1502
        %1504 = vmatprep.mubr.bf16.mxu0 %v1173
        %1505 = vmatmul.mubr.bf16.gmra.mrb[0].mxu0 %v1172
        %v1506 = vpop.f32.mrb[0].mxu0
        %v1507 = vadd.f32 %v1305, %v1506
        %v1508 = vpop.f32.mrb[0].mxu0
        %v1509 = vadd.f32 %v1309, %v1508
        %v1510 = vpop.f32.mrb[0].mxu0
        %v1511 = vadd.f32 %v1305, %v1510
        %v1512 = vpop.f32.mrb[0].mxu0
        %v1513 = vadd.f32 %v1309, %v1512
        %1514 = vmatprep.mubr.bf16.mxu0 %v1175
        %1515 = vmatmul.mubr.bf16.gmra.mrb[0].mxu0 %v1174
        %v1516 = vpop.f32.mrb[0].mxu0
        %v1517 = vadd.f32 %v1305, %v1516
        %v1518 = vpop.f32.mrb[0].mxu0
        %v1519 = vadd.f32 %v1309, %v1518
        %v1520 = vpop.f32.mrb[0].mxu0
        %v1521 = vadd.f32 %v1305, %v1520
        %v1522 = vpop.f32.mrb[0].mxu0
        %v1523 = vadd.f32 %v1309, %v1522
        %1524 = vmatprep.mubr.bf16.mxu0 %v1177
        %1525 = vmatmul.mubr.bf16.gmra.mrb[0].mxu0 %v1176
        %v1526 = vpop.f32.mrb[0].mxu0
        %v1527 = vadd.f32 %v1305, %v1526
        %v1528 = vpop.f32.mrb[0].mxu0
        %v1529 = vadd.f32 %v1309, %v1528
        %v1530 = vpop.f32.mrb[0].mxu0
        %v1531 = vadd.f32 %v1305, %v1530
        %v1532 = vpop.f32.mrb[0].mxu0
        %v1533 = vadd.f32 %v1309, %v1532
        %1534 = vmatprep.mubr.bf16.mxu0 %v1179
        %1535 = vmatmul.mubr.bf16.gmra.mrb[0].mxu0 %v1178
        %v1536 = vpop.f32.mrb[0].mxu0
        %v1537 = vadd.f32 %v1305, %v1536
        %v1538 = vpop.f32.mrb[0].mxu0
        %v1539 = vadd.f32 %v1309, %v1538
        %v1540 = vpop.f32.mrb[0].mxu0
        %v1541 = vadd.f32 %v1305, %v1540
        %v1542 = vpop.f32.mrb[0].mxu0
        %v1543 = vadd.f32 %v1309, %v1542
        %1544 = vmatprep.mubr.bf16.mxu0 %v1181
        %1545 = vmatmul.mubr.bf16.gmra.mrb[0].mxu0 %v1180
        %v1546 = vpop.f32.mrb[0].mxu0
        %v1547 = vadd.f32 %v1305, %v1546
        %v1548 = vpop.f32.mrb[0].mxu0
        %v1549 = vadd.f32 %v1309, %v1548
        %v1550 = vpop.f32.mrb[0].mxu0
        %v1551 = vadd.f32 %v1305, %v1550
        %v1552 = vpop.f32.mrb[0].mxu0
        %v1553 = vadd.f32 %v1309, %v1552
        %1554 = vmatprep.mubr.bf16.mxu0 %v1183
        %1555 = vmatmul.mubr.bf16.gmra.mrb[0].mxu0 %v1182
        %v1556 = vpop.f32.mrb[0].mxu0
        %v1557 = vadd.f32 %v1305, %v1556
        %v1558 = vpop.f32.mrb[0].mxu0
        %v1559 = vadd.f32 %v1309, %v1558
        %v1560 = vpop.f32.mrb[0].mxu0
        %v1561 = vadd.f32 %v1305, %v1560
        %v1562 = vpop.f32.mrb[0].mxu0
        %v1563 = vadd.f32 %v1309, %v1562
        %1564 = vmatprep.mubr.bf16.mxu0 %v1185
        %1565 = vmatmul.mubr.bf16.gmra.mrb[0].mxu0 %v1184
        %v1566 = vpop.f32.mrb[0].mxu0
        %v1567 = vadd.f32 %v1305, %v1566
        %v1568 = vpop.f32.mrb[0].mxu0
        %v1569 = vadd.f32 %v1309, %v1568
        %v1570 = vpop.f32.mrb[0].mxu0
        %v1571 = vadd.f32 %v1305, %v1570
        %v1572 = vpop.f32.mrb[0].mxu0
        %v1573 = vadd.f32 %v1309, %v1572
        %1574 = vmatprep.mubr.bf16.mxu0 %v1187
        %1575 = vmatmul.mubr.bf16.gmra.mrb[0].mxu0 %v1186
        %v1576 = vpop.f32.mrb[0].mxu0
        %v1577 = vadd.f32 %v1305, %v1576
        %v1578 = vpop.f32.mrb[0].mxu0
        %v1579 = vadd.f32 %v1309, %v1578
        %v1580 = vpop.f32.mrb[0].mxu0
        %v1581 = vadd.f32 %v1305, %v1580
        %v1582 = vpop.f32.mrb[0].mxu0
        %v1583 = vadd.f32 %v1309, %v1582
        %1584 = vmatprep.mubr.bf16.mxu0 %v1189
        %1585 = vmatmul.mubr.bf16.gmra.mrb[0].mxu0 %v1188
        %v1586 = vpop.f32.mrb[0].mxu0
        %v1587 = vadd.f32 %v1305, %v1586
        %v1588 = vpop.f32.mrb[0].mxu0
        %v1589 = vadd.f32 %v1309, %v1588
        %v1590 = vpop.f32.mrb[0].mxu0
        %v1591 = vadd.f32 %v1305, %v1590
        %v1592 = vpop.f32.mrb[0].mxu0
        %v1593 = vadd.f32 %v1309, %v1592
        %1594 = vmatprep.mubr.bf16.mxu0 %v1191
        %1595 = vmatmul.mubr.bf16.gmra.mrb[0].mxu0 %v1190
        %v1596 = vpop.f32.mrb[0].mxu0
        %v1597 = vadd.f32 %v1305, %v1596
        %v1598 = vpop.f32.mrb[0].mxu0
        %v1599 = vadd.f32 %v1309, %v1598
        %v1600 = vpop.f32.mrb[0].mxu0
        %v1601 = vadd.f32 %v1305, %v1600
        %v1602 = vpop.f32.mrb[0].mxu0
        %v1603 = vadd.f32 %v1309, %v1602
        %1604 = vmatprep.mubr.bf16.mxu0 %v1193
        %1605 = vmatmul.mubr.bf16.gmra.mrb[0].mxu0 %v1192
        %v1606 = vpop.f32.mrb[0].mxu0
        %v1607 = vadd.f32 %v1305, %v1606
        %v1608 = vpop.f32.mrb[0].mxu0
        %v1609 = vadd.f32 %v1309, %v1608
        %v1610 = vpop.f32.mrb[0].mxu0
        %v1611 = vadd.f32 %v1305, %v1610
        %v1612 = vpop.f32.mrb[0].mxu0
        %v1613 = vadd.f32 %v1309, %v1612
        %1614 = vmatprep.mubr.bf16.mxu0 %v1195
        %1615 = vmatmul.mubr.bf16.gmra.mrb[0].mxu0 %v1194
        %v1616 = vpop.f32.mrb[0].mxu0
        %v1617 = vadd.f32 %v1305, %v1616
        %v1618 = vpop.f32.mrb[0].mxu0
        %v1619 = vadd.f32 %v1309, %v1618
        %v1620 = vpop.f32.mrb[0].mxu0
        %v1621 = vadd.f32 %v1305, %v1620
        %v1622 = vpop.f32.mrb[0].mxu0
        %v1623 = vadd.f32 %v1309, %v1622
        %1624 = vmatprep.mubr.bf16.mxu0 %v1197
        %1625 = vmatmul.mubr.bf16.gmra.mrb[0].mxu0 %v1196
        %v1626 = vpop.f32.mrb[0].mxu0
        %v1627 = vadd.f32 %v1305, %v1626
        %v1628 = vpop.f32.mrb[0].mxu0
        %v1629 = vadd.f32 %v1309, %v1628
        %v1630 = vpop.f32.mrb[0].mxu0
        %v1631 = vadd.f32 %v1305, %v1630
        %v1632 = vpop.f32.mrb[0].mxu0
        %v1633 = vadd.f32 %v1309, %v1632
        %1634 = vmatprep.mubr.bf16.mxu0 %v1199
        %1635 = vmatmul.mubr.bf16.gmra.mrb[0].mxu0 %v1198
        %v1636 = vpop.f32.mrb[0].mxu0
        %v1637 = vadd.f32 %v1305, %v1636
        %v1638 = vpop.f32.mrb[0].mxu0
        %v1639 = vadd.f32 %v1309, %v1638
        %v1640 = vpop.f32.mrb[0].mxu0
        %v1641 = vadd.f32 %v1305, %v1640
        %v1642 = vpop.f32.mrb[0].mxu0
        %v1643 = vadd.f32 %v1309, %v1642
        %1644 = vmatprep.mubr.bf16.mxu0 %v1201
        %1645 = vmatmul.mubr.bf16.gmra.mrb[0].mxu0 %v1200
        %v1646 = vpop.f32.mrb[0].mxu0
        %v1647 = vadd.f32 %v1305, %v1646
        %v1648 = vpop.f32.mrb[0].mxu0
        %v1649 = vadd.f32 %v1309, %v1648
        %v1650 = vpop.f32.mrb[0].mxu0
        %v1651 = vadd.f32 %v1305, %v1650
        %v1652 = vpop.f32.mrb[0].mxu0
        %v1653 = vadd.f32 %v1309, %v1652
        %1654 = vmatprep.mubr.bf16.mxu0 %v1203
        %1655 = vmatmul.mubr.bf16.gmra.mrb[0].mxu0 %v1202
        %v1656 = vpop.f32.mrb[0].mxu0
        %v1657 = vadd.f32 %v1305, %v1656
        %v1658 = vpop.f32.mrb[0].mxu0
        %v1659 = vadd.f32 %v1309, %v1658
        %v1660 = vpop.f32.mrb[0].mxu0
        %v1661 = vadd.f32 %v1305, %v1660
        %v1662 = vpop.f32.mrb[0].mxu0
        %v1663 = vadd.f32 %v1309, %v1662
        %1664 = vdwg.mxu0
        %v1665 = vmax.f32 %v1347, 0.0
        %v1666 = vmax.f32 %v1349, 0.0
        %v1667 = vmax.f32 %v1351, 0.0
        %v1668 = vmax.f32 %v1353, 0.0
        %v1669 = vmax.f32 %v1357, 0.0
        %v1670 = vmax.f32 %v1359, 0.0
        %v1671 = vmax.f32 %v1361, 0.0
        %v1672 = vmax.f32 %v1363, 0.0
        %v1673 = vmax.f32 %v1367, 0.0
        %v1674 = vmax.f32 %v1369, 0.0
        %v1675 = vmax.f32 %v1371, 0.0
        %v1676 = vmax.f32 %v1373, 0.0
        %v1677 = vmax.f32 %v1377, 0.0
        %v1678 = vmax.f32 %v1379, 0.0
        %v1679 = vmax.f32 %v1381, 0.0
        %v1680 = vmax.f32 %v1383, 0.0
        %v1681 = vmax.f32 %v1387, 0.0
        %v1682 = vmax.f32 %v1389, 0.0
        %v1683 = vmax.f32 %v1391, 0.0
        %v1684 = vmax.f32 %v1393, 0.0
        %v1685 = vmax.f32 %v1397, 0.0
        %v1686 = vmax.f32 %v1399, 0.0
        %v1687 = vmax.f32 %v1401, 0.0
        %v1688 = vmax.f32 %v1403, 0.0
        %v1689 = vmax.f32 %v1407, 0.0
        %v1690 = vmax.f32 %v1409, 0.0
        %v1691 = vmax.f32 %v1411, 0.0
        %v1692 = vmax.f32 %v1413, 0.0
        %v1693 = vmax.f32 %v1417, 0.0
        %v1694 = vmax.f32 %v1419, 0.0
        %v1695 = vmax.f32 %v1421, 0.0
        %v1696 = vmax.f32 %v1423, 0.0
        %v1697 = vmax.f32 %v1427, 0.0
        %v1698 = vmax.f32 %v1429, 0.0
        %v1699 = vmax.f32 %v1431, 0.0
        %v1700 = vmax.f32 %v1433, 0.0
        %v1701 = vmax.f32 %v1437, 0.0
        %v1702 = vmax.f32 %v1439, 0.0
        %v1703 = vmax.f32 %v1441, 0.0
        %v1704 = vmax.f32 %v1443, 0.0
        %v1705 = vmax.f32 %v1447, 0.0
        %v1706 = vmax.f32 %v1449, 0.0
        %v1707 = vmax.f32 %v1451, 0.0
        %v1708 = vmax.f32 %v1453, 0.0
        %v1709 = vmax.f32 %v1457, 0.0
        %v1710 = vmax.f32 %v1459, 0.0
        %v1711 = vmax.f32 %v1461, 0.0
        %v1712 = vmax.f32 %v1463, 0.0
        %v1713 = vmax.f32 %v1467, 0.0
        %v1714 = vmax.f32 %v1469, 0.0
        %v1715 = vmax.f32 %v1471, 0.0
        %v1716 = vmax.f32 %v1473, 0.0
        %v1717 = vmax.f32 %v1477, 0.0
        %v1718 = vmax.f32 %v1479, 0.0
        %v1719 = vmax.f32 %v1481, 0.0
        %v1720 = vmax.f32 %v1483, 0.0
        %v1721 = vmax.f32 %v1487, 0.0
        %v1722 = vmax.f32 %v1489, 0.0
        %v1723 = vmax.f32 %v1491, 0.0
        %v1724 = vmax.f32 %v1493, 0.0
        %v1725 = vmax.f32 %v1497, 0.0
        %v1726 = vmax.f32 %v1499, 0.0
        %v1727 = vmax.f32 %v1501, 0.0
        %v1728 = vmax.f32 %v1503, 0.0
        %v1729 = vmax.f32 %v1507, 0.0
        %v1730 = vmax.f32 %v1509, 0.0
        %v1731 = vmax.f32 %v1511, 0.0
        %v1732 = vmax.f32 %v1513, 0.0
        %v1733 = vmax.f32 %v1517, 0.0
        %v1734 = vmax.f32 %v1519, 0.0
        %v1735 = vmax.f32 %v1521, 0.0
        %v1736 = vmax.f32 %v1523, 0.0
        %v1737 = vmax.f32 %v1527, 0.0
        %v1738 = vmax.f32 %v1529, 0.0
        %v1739 = vmax.f32 %v1531, 0.0
        %v1740 = vmax.f32 %v1533, 0.0
        %v1741 = vmax.f32 %v1537, 0.0
        %v1742 = vmax.f32 %v1539, 0.0
        %v1743 = vmax.f32 %v1541, 0.0
        %v1744 = vmax.f32 %v1543, 0.0
        %v1745 = vmax.f32 %v1547, 0.0
        %v1746 = vmax.f32 %v1549, 0.0
        %v1747 = vmax.f32 %v1551, 0.0
        %v1748 = vmax.f32 %v1553, 0.0
        %v1749 = vmax.f32 %v1557, 0.0
        %v1750 = vmax.f32 %v1559, 0.0
        %v1751 = vmax.f32 %v1561, 0.0
        %v1752 = vmax.f32 %v1563, 0.0
        %v1753 = vmax.f32 %v1567, 0.0
        %v1754 = vmax.f32 %v1569, 0.0
        %v1755 = vmax.f32 %v1571, 0.0
        %v1756 = vmax.f32 %v1573, 0.0
        %v1757 = vmax.f32 %v1577, 0.0
        %v1758 = vmax.f32 %v1579, 0.0
        %v1759 = vmax.f32 %v1581, 0.0
        %v1760 = vmax.f32 %v1583, 0.0
        %v1761 = vmax.f32 %v1587, 0.0
        %v1762 = vmax.f32 %v1589, 0.0
        %v1763 = vmax.f32 %v1591, 0.0
        %v1764 = vmax.f32 %v1593, 0.0
        %v1765 = vmax.f32 %v1597, 0.0
        %v1766 = vmax.f32 %v1599, 0.0
        %v1767 = vmax.f32 %v1601, 0.0
        %v1768 = vmax.f32 %v1603, 0.0
        %v1769 = vmax.f32 %v1607, 0.0
        %v1770 = vmax.f32 %v1609, 0.0
        %v1771 = vmax.f32 %v1611, 0.0
        %v1772 = vmax.f32 %v1613, 0.0
        %v1773 = vmax.f32 %v1617, 0.0
        %v1774 = vmax.f32 %v1619, 0.0
        %v1775 = vmax.f32 %v1621, 0.0
        %v1776 = vmax.f32 %v1623, 0.0
        %v1777 = vmax.f32 %v1627, 0.0
        %v1778 = vmax.f32 %v1629, 0.0
        %v1779 = vmax.f32 %v1631, 0.0
        %v1780 = vmax.f32 %v1633, 0.0
        %v1781 = vmax.f32 %v1637, 0.0
        %v1782 = vmax.f32 %v1639, 0.0
        %v1783 = vmax.f32 %v1641, 0.0
        %v1784 = vmax.f32 %v1643, 0.0
        %v1785 = vmax.f32 %v1647, 0.0
        %v1786 = vmax.f32 %v1649, 0.0
        %v1787 = vmax.f32 %v1651, 0.0
        %v1788 = vmax.f32 %v1653, 0.0
        %v1789 = vmax.f32 %v1657, 0.0
        %v1790 = vmax.f32 %v1659, 0.0
        %v1791 = vmax.f32 %v1661, 0.0
        %v1792 = vmax.f32 %v1663, 0.0
        %v1793 = vpack.c.bf16 %v1667, %v1665
        %v1794 = vpack.c.bf16 %v1668, %v1666
        %v1795 = vpack.c.bf16 %v1671, %v1669
        %v1796 = vpack.c.bf16 %v1672, %v1670
        %v1797 = vpack.c.bf16 %v1675, %v1673
        %v1798 = vpack.c.bf16 %v1676, %v1674
        %v1799 = vpack.c.bf16 %v1679, %v1677
        %v1800 = vpack.c.bf16 %v1680, %v1678
        %v1801 = vpack.c.bf16 %v1683, %v1681
        %v1802 = vpack.c.bf16 %v1684, %v1682
        %v1803 = vpack.c.bf16 %v1687, %v1685
        %v1804 = vpack.c.bf16 %v1688, %v1686
        %v1805 = vpack.c.bf16 %v1691, %v1689
        %v1806 = vpack.c.bf16 %v1692, %v1690
        %v1807 = vpack.c.bf16 %v1695, %v1693
        %v1808 = vpack.c.bf16 %v1696, %v1694
        %v1809 = vpack.c.bf16 %v1699, %v1697
        %v1810 = vpack.c.bf16 %v1700, %v1698
        %v1811 = vpack.c.bf16 %v1703, %v1701
        %v1812 = vpack.c.bf16 %v1704, %v1702
        %v1813 = vpack.c.bf16 %v1707, %v1705
        %v1814 = vpack.c.bf16 %v1708, %v1706
        %v1815 = vpack.c.bf16 %v1711, %v1709
        %v1816 = vpack.c.bf16 %v1712, %v1710
        %v1817 = vpack.c.bf16 %v1715, %v1713
        %v1818 = vpack.c.bf16 %v1716, %v1714
        %v1819 = vpack.c.bf16 %v1719, %v1717
        %v1820 = vpack.c.bf16 %v1720, %v1718
        %v1821 = vpack.c.bf16 %v1723, %v1721
        %v1822 = vpack.c.bf16 %v1724, %v1722
        %v1823 = vpack.c.bf16 %v1727, %v1725
        %v1824 = vpack.c.bf16 %v1728, %v1726
        %v1825 = vpack.c.bf16 %v1731, %v1729
        %v1826 = vpack.c.bf16 %v1732, %v1730
        %v1827 = vpack.c.bf16 %v1735, %v1733
        %v1828 = vpack.c.bf16 %v1736, %v1734
        %v1829 = vpack.c.bf16 %v1739, %v1737
        %v1830 = vpack.c.bf16 %v1740, %v1738
        %v1831 = vpack.c.bf16 %v1743, %v1741
        %v1832 = vpack.c.bf16 %v1744, %v1742
        %v1833 = vpack.c.bf16 %v1747, %v1745
        %v1834 = vpack.c.bf16 %v1748, %v1746
        %v1835 = vpack.c.bf16 %v1751, %v1749
        %v1836 = vpack.c.bf16 %v1752, %v1750
        %v1837 = vpack.c.bf16 %v1755, %v1753
        %v1838 = vpack.c.bf16 %v1756, %v1754
        %v1839 = vpack.c.bf16 %v1759, %v1757
        %v1840 = vpack.c.bf16 %v1760, %v1758
        %v1841 = vpack.c.bf16 %v1763, %v1761
        %v1842 = vpack.c.bf16 %v1764, %v1762
        %v1843 = vpack.c.bf16 %v1767, %v1765
        %v1844 = vpack.c.bf16 %v1768, %v1766
        %v1845 = vpack.c.bf16 %v1771, %v1769
        %v1846 = vpack.c.bf16 %v1772, %v1770
        %v1847 = vpack.c.bf16 %v1775, %v1773
        %v1848 = vpack.c.bf16 %v1776, %v1774
        %v1849 = vpack.c.bf16 %v1779, %v1777
        %v1850 = vpack.c.bf16 %v1780, %v1778
        %v1851 = vpack.c.bf16 %v1783, %v1781
        %v1852 = vpack.c.bf16 %v1784, %v1782
        %v1853 = vpack.c.bf16 %v1787, %v1785
        %v1854 = vpack.c.bf16 %v1788, %v1786
        %v1855 = vpack.c.bf16 %v1791, %v1789
        %v1856 = vpack.c.bf16 %v1792, %v1790
        %v1857 = vld [vmem:[%s6] sm:$0xff]
        %v1858 = vld [vmem:[%s6 + $0x8] sm:$0xff]
        %v1859 = vld [vmem:[%s6 + $0x10] sm:$0xff]
        %v1860 = vld [vmem:[%s6 + $0x18] sm:$0xff]
        %v1861 = vld [vmem:[%s6 + $0x20] sm:$0xff]
        %v1862 = vld [vmem:[%s6 + $0x28] sm:$0xff]
        %v1863 = vld [vmem:[%s6 + $0x30] sm:$0xff]
        %v1864 = vld [vmem:[%s6 + $0x38] sm:$0xff]
        %v1865 = vld [vmem:[%s6 + $0x40] sm:$0xff]
        %v1866 = vld [vmem:[%s6 + $0x48] sm:$0xff]
        %v1867 = vld [vmem:[%s6 + $0x50] sm:$0xff]
        %v1868 = vld [vmem:[%s6 + $0x58] sm:$0xff]
        %v1869 = vld [vmem:[%s6 + $0x60] sm:$0xff]
        %v1870 = vld [vmem:[%s6 + $0x68] sm:$0xff]
        %v1871 = vld [vmem:[%s6 + $0x70] sm:$0xff]
        %v1872 = vld [vmem:[%s6 + $0x78] sm:$0xff]
        %v1873 = vld [vmem:[%s6 + $0x80] sm:$0xff]
        %v1874 = vld [vmem:[%s6 + $0x88] sm:$0xff]
        %v1875 = vld [vmem:[%s6 + $0x90] sm:$0xff]
        %v1876 = vld [vmem:[%s6 + $0x98] sm:$0xff]
        %v1877 = vld [vmem:[%s6 + $0xa0] sm:$0xff]
        %v1878 = vld [vmem:[%s6 + $0xa8] sm:$0xff]
        %v1879 = vld [vmem:[%s6 + $0xb0] sm:$0xff]
        %v1880 = vld [vmem:[%s6 + $0xb8] sm:$0xff]
        %v1881 = vld [vmem:[%s6 + $0xc0] sm:$0xff]
        %v1882 = vld [vmem:[%s6 + $0xc8] sm:$0xff]
        %v1883 = vld [vmem:[%s6 + $0xd0] sm:$0xff]
        %v1884 = vld [vmem:[%s6 + $0xd8] sm:$0xff]
        %v1885 = vld [vmem:[%s6 + $0xe0] sm:$0xff]
        %v1886 = vld [vmem:[%s6 + $0xe8] sm:$0xff]
        %v1887 = vld [vmem:[%s6 + $0xf0] sm:$0xff]
        %v1888 = vld [vmem:[%s6 + $0xf8] sm:$0xff]
        %v1889 = vld [vmem:[%s6 + $0x100] sm:$0xff]
        %v1890 = vld [vmem:[%s6 + $0x108] sm:$0xff]
        %v1891 = vld [vmem:[%s6 + $0x110] sm:$0xff]
        %v1892 = vld [vmem:[%s6 + $0x118] sm:$0xff]
        %v1893 = vld [vmem:[%s6 + $0x120] sm:$0xff]
        %v1894 = vld [vmem:[%s6 + $0x128] sm:$0xff]
        %v1895 = vld [vmem:[%s6 + $0x130] sm:$0xff]
        %v1896 = vld [vmem:[%s6 + $0x138] sm:$0xff]
        %v1897 = vld [vmem:[%s6 + $0x140] sm:$0xff]
        %v1898 = vld [vmem:[%s6 + $0x148] sm:$0xff]
        %v1899 = vld [vmem:[%s6 + $0x150] sm:$0xff]
        %v1900 = vld [vmem:[%s6 + $0x158] sm:$0xff]
        %v1901 = vld [vmem:[%s6 + $0x160] sm:$0xff]
        %v1902 = vld [vmem:[%s6 + $0x168] sm:$0xff]
        %v1903 = vld [vmem:[%s6 + $0x170] sm:$0xff]
        %v1904 = vld [vmem:[%s6 + $0x178] sm:$0xff]
        %v1905 = vld [vmem:[%s6 + $0x180] sm:$0xff]
        %v1906 = vld [vmem:[%s6 + $0x188] sm:$0xff]
        %v1907 = vld [vmem:[%s6 + $0x190] sm:$0xff]
        %v1908 = vld [vmem:[%s6 + $0x198] sm:$0xff]
        %v1909 = vld [vmem:[%s6 + $0x1a0] sm:$0xff]
        %v1910 = vld [vmem:[%s6 + $0x1a8] sm:$0xff]
        %v1911 = vld [vmem:[%s6 + $0x1b0] sm:$0xff]
        %v1912 = vld [vmem:[%s6 + $0x1b8] sm:$0xff]
        %v1913 = vld [vmem:[%s6 + $0x1c0] sm:$0xff]
        %v1914 = vld [vmem:[%s6 + $0x1c8] sm:$0xff]
        %v1915 = vld [vmem:[%s6 + $0x1d0] sm:$0xff]
        %v1916 = vld [vmem:[%s6 + $0x1d8] sm:$0xff]
        %v1917 = vld [vmem:[%s6 + $0x1e0] sm:$0xff]
        %v1918 = vld [vmem:[%s6 + $0x1e8] sm:$0xff]
        %v1919 = vld [vmem:[%s6 + $0x1f0] sm:$0xff]
        %v1920 = vld [vmem:[%s6 + $0x1f8] sm:$0xff]
        %v1921 = vpack.c.bf16 %v1859, %v1857
        %v1922 = vpack.c.bf16 %v1860, %v1858
        %v1923 = vpack.c.bf16 %v1863, %v1861
        %v1924 = vpack.c.bf16 %v1864, %v1862
        %v1925 = vpack.c.bf16 %v1867, %v1865
        %v1926 = vpack.c.bf16 %v1868, %v1866
        %v1927 = vpack.c.bf16 %v1871, %v1869
        %v1928 = vpack.c.bf16 %v1872, %v1870
        %v1929 = vpack.c.bf16 %v1875, %v1873
        %v1930 = vpack.c.bf16 %v1876, %v1874
        %v1931 = vpack.c.bf16 %v1879, %v1877
        %v1932 = vpack.c.bf16 %v1880, %v1878
        %v1933 = vpack.c.bf16 %v1883, %v1881
        %v1934 = vpack.c.bf16 %v1884, %v1882
        %v1935 = vpack.c.bf16 %v1887, %v1885
        %v1936 = vpack.c.bf16 %v1888, %v1886
        %v1937 = vpack.c.bf16 %v1891, %v1889
        %v1938 = vpack.c.bf16 %v1892, %v1890
        %v1939 = vpack.c.bf16 %v1895, %v1893
        %v1940 = vpack.c.bf16 %v1896, %v1894
        %v1941 = vpack.c.bf16 %v1899, %v1897
        %v1942 = vpack.c.bf16 %v1900, %v1898
        %v1943 = vpack.c.bf16 %v1903, %v1901
        %v1944 = vpack.c.bf16 %v1904, %v1902
        %v1945 = vpack.c.bf16 %v1907, %v1905
        %v1946 = vpack.c.bf16 %v1908, %v1906
        %v1947 = vpack.c.bf16 %v1911, %v1909
        %v1948 = vpack.c.bf16 %v1912, %v1910
        %v1949 = vpack.c.bf16 %v1915, %v1913
        %v1950 = vpack.c.bf16 %v1916, %v1914
        %v1951 = vpack.c.bf16 %v1919, %v1917
        %v1952 = vpack.c.bf16 %v1920, %v1918
        %v1953 = vld [vmem:[%s7] sm:$0x3]
        %v1955 = vlaneseq
        %v1956 = vshrl.u32 %v1955, 7
        %v1957 = vsub.s32 0, %v1956
        %v1958 = vrot.slane %v1953, %v1957
        %v1959 = vlaneseq
        %v1960 = vshrl.u32 %v1959, 7
        %v1961 = vsub.s32 1, %v1960
        %v1962 = vrot.slane %v1953, %v1961
        %1965 = vmatprep.subr.bf16.mxu0 %v1922
        %1966 = vmatpush1.bf16.msra.mxu0 %v1921
        %1967 = vmatprep.subr.bf16.mxu0 %v1924
        %1968 = vmatpush1.bf16.msra.mxu0 %v1923
        %1969 = vmatprep.subr.bf16.mxu0 %v1926
        %1970 = vmatpush1.bf16.msra.mxu0 %v1925
        %1971 = vmatprep.subr.bf16.mxu0 %v1928
        %1972 = vmatpush1.bf16.msra.mxu0 %v1927
        %1973 = vmatprep.subr.bf16.mxu0 %v1930
        %1974 = vmatpush1.bf16.msra.mxu0 %v1929
        %1975 = vmatprep.subr.bf16.mxu0 %v1932
        %1976 = vmatpush1.bf16.msra.mxu0 %v1931
        %1977 = vmatprep.subr.bf16.mxu0 %v1934
        %1978 = vmatpush1.bf16.msra.mxu0 %v1933
        %1979 = vmatprep.subr.bf16.mxu0 %v1936
        %1980 = vmatpush1.bf16.msra.mxu0 %v1935
        %1981 = vmatprep.subr.bf16.mxu0 %v1938
        %1982 = vmatpush1.bf16.msra.mxu0 %v1937
        %1983 = vmatprep.subr.bf16.mxu0 %v1940
        %1984 = vmatpush1.bf16.msra.mxu0 %v1939
        %1985 = vmatprep.subr.bf16.mxu0 %v1942
        %1986 = vmatpush1.bf16.msra.mxu0 %v1941
        %1987 = vmatprep.subr.bf16.mxu0 %v1944
        %1988 = vmatpush1.bf16.msra.mxu0 %v1943
        %1989 = vmatprep.subr.bf16.mxu0 %v1946
        %1990 = vmatpush1.bf16.msra.mxu0 %v1945
        %1991 = vmatprep.subr.bf16.mxu0 %v1948
        %1992 = vmatpush1.bf16.msra.mxu0 %v1947
        %1993 = vmatprep.subr.bf16.mxu0 %v1950
        %1994 = vmatpush1.bf16.msra.mxu0 %v1949
        %1995 = vmatprep.subr.bf16.mxu0 %v1952
        %1996 = vmatpush1.bf16.msra.mxu0 %v1951
        %1997 = vmatprep.mubr.bf16.mxu0 %v1794
        %1998 = vmatmul.mubr.bf16.gmra.mrb[0].mxu0 %v1793
        %v1999 = vpop.f32.mrb[0].mxu0
        %v2000 = vadd.f32 %v1958, %v1999
        %v2001 = vpop.f32.mrb[0].mxu0
        %v2002 = vadd.f32 %v1962, %v2001
        %v2003 = vpop.f32.mrb[0].mxu0
        %v2004 = vadd.f32 %v1958, %v2003
        %v2005 = vpop.f32.mrb[0].mxu0
        %v2006 = vadd.f32 %v1962, %v2005
        %2007 = vmatprep.mubr.bf16.mxu0 %v1796
        %2008 = vmatmul.mubr.bf16.gmra.mrb[0].mxu0 %v1795
        %v2009 = vpop.f32.mrb[0].mxu0
        %v2010 = vadd.f32 %v1958, %v2009
        %v2011 = vpop.f32.mrb[0].mxu0
        %v2012 = vadd.f32 %v1962, %v2011
        %v2013 = vpop.f32.mrb[0].mxu0
        %v2014 = vadd.f32 %v1958, %v2013
        %v2015 = vpop.f32.mrb[0].mxu0
        %v2016 = vadd.f32 %v1962, %v2015
        %2017 = vmatprep.mubr.bf16.mxu0 %v1798
        %2018 = vmatmul.mubr.bf16.gmra.mrb[0].mxu0 %v1797
        %v2019 = vpop.f32.mrb[0].mxu0
        %v2020 = vadd.f32 %v1958, %v2019
        %v2021 = vpop.f32.mrb[0].mxu0
        %v2022 = vadd.f32 %v1962, %v2021
        %v2023 = vpop.f32.mrb[0].mxu0
        %v2024 = vadd.f32 %v1958, %v2023
        %v2025 = vpop.f32.mrb[0].mxu0
        %v2026 = vadd.f32 %v1962, %v2025
        %2027 = vmatprep.mubr.bf16.mxu0 %v1800
        %2028 = vmatmul.mubr.bf16.gmra.mrb[0].mxu0 %v1799
        %v2029 = vpop.f32.mrb[0].mxu0
        %v2030 = vadd.f32 %v1958, %v2029
        %v2031 = vpop.f32.mrb[0].mxu0
        %v2032 = vadd.f32 %v1962, %v2031
        %v2033 = vpop.f32.mrb[0].mxu0
        %v2034 = vadd.f32 %v1958, %v2033
        %v2035 = vpop.f32.mrb[0].mxu0
        %v2036 = vadd.f32 %v1962, %v2035
        %2037 = vmatprep.mubr.bf16.mxu0 %v1802
        %2038 = vmatmul.mubr.bf16.gmra.mrb[0].mxu0 %v1801
        %v2039 = vpop.f32.mrb[0].mxu0
        %v2040 = vadd.f32 %v1958, %v2039
        %v2041 = vpop.f32.mrb[0].mxu0
        %v2042 = vadd.f32 %v1962, %v2041
        %v2043 = vpop.f32.mrb[0].mxu0
        %v2044 = vadd.f32 %v1958, %v2043
        %v2045 = vpop.f32.mrb[0].mxu0
        %v2046 = vadd.f32 %v1962, %v2045
        %2047 = vmatprep.mubr.bf16.mxu0 %v1804
        %2048 = vmatmul.mubr.bf16.gmra.mrb[0].mxu0 %v1803
        %v2049 = vpop.f32.mrb[0].mxu0
        %v2050 = vadd.f32 %v1958, %v2049
        %v2051 = vpop.f32.mrb[0].mxu0
        %v2052 = vadd.f32 %v1962, %v2051
        %v2053 = vpop.f32.mrb[0].mxu0
        %v2054 = vadd.f32 %v1958, %v2053
        %v2055 = vpop.f32.mrb[0].mxu0
        %v2056 = vadd.f32 %v1962, %v2055
        %2057 = vmatprep.mubr.bf16.mxu0 %v1806
        %2058 = vmatmul.mubr.bf16.gmra.mrb[0].mxu0 %v1805
        %v2059 = vpop.f32.mrb[0].mxu0
        %v2060 = vadd.f32 %v1958, %v2059
        %v2061 = vpop.f32.mrb[0].mxu0
        %v2062 = vadd.f32 %v1962, %v2061
        %v2063 = vpop.f32.mrb[0].mxu0
        %v2064 = vadd.f32 %v1958, %v2063
        %v2065 = vpop.f32.mrb[0].mxu0
        %v2066 = vadd.f32 %v1962, %v2065
        %2067 = vmatprep.mubr.bf16.mxu0 %v1808
        %2068 = vmatmul.mubr.bf16.gmra.mrb[0].mxu0 %v1807
        %v2069 = vpop.f32.mrb[0].mxu0
        %v2070 = vadd.f32 %v1958, %v2069
        %v2071 = vpop.f32.mrb[0].mxu0
        %v2072 = vadd.f32 %v1962, %v2071
        %v2073 = vpop.f32.mrb[0].mxu0
        %v2074 = vadd.f32 %v1958, %v2073
        %v2075 = vpop.f32.mrb[0].mxu0
        %v2076 = vadd.f32 %v1962, %v2075
        %2077 = vmatprep.mubr.bf16.mxu0 %v1810
        %2078 = vmatmul.mubr.bf16.gmra.mrb[0].mxu0 %v1809
        %v2079 = vpop.f32.mrb[0].mxu0
        %v2080 = vadd.f32 %v1958, %v2079
        %v2081 = vpop.f32.mrb[0].mxu0
        %v2082 = vadd.f32 %v1962, %v2081
        %v2083 = vpop.f32.mrb[0].mxu0
        %v2084 = vadd.f32 %v1958, %v2083
        %v2085 = vpop.f32.mrb[0].mxu0
        %v2086 = vadd.f32 %v1962, %v2085
        %2087 = vmatprep.mubr.bf16.mxu0 %v1812
        %2088 = vmatmul.mubr.bf16.gmra.mrb[0].mxu0 %v1811
        %v2089 = vpop.f32.mrb[0].mxu0
        %v2090 = vadd.f32 %v1958, %v2089
        %v2091 = vpop.f32.mrb[0].mxu0
        %v2092 = vadd.f32 %v1962, %v2091
        %v2093 = vpop.f32.mrb[0].mxu0
        %v2094 = vadd.f32 %v1958, %v2093
        %v2095 = vpop.f32.mrb[0].mxu0
        %v2096 = vadd.f32 %v1962, %v2095
        %2097 = vmatprep.mubr.bf16.mxu0 %v1814
        %2098 = vmatmul.mubr.bf16.gmra.mrb[0].mxu0 %v1813
        %v2099 = vpop.f32.mrb[0].mxu0
        %v2100 = vadd.f32 %v1958, %v2099
        %v2101 = vpop.f32.mrb[0].mxu0
        %v2102 = vadd.f32 %v1962, %v2101
        %v2103 = vpop.f32.mrb[0].mxu0
        %v2104 = vadd.f32 %v1958, %v2103
        %v2105 = vpop.f32.mrb[0].mxu0
        %v2106 = vadd.f32 %v1962, %v2105
        %2107 = vmatprep.mubr.bf16.mxu0 %v1816
        %2108 = vmatmul.mubr.bf16.gmra.mrb[0].mxu0 %v1815
        %v2109 = vpop.f32.mrb[0].mxu0
        %v2110 = vadd.f32 %v1958, %v2109
        %v2111 = vpop.f32.mrb[0].mxu0
        %v2112 = vadd.f32 %v1962, %v2111
        %v2113 = vpop.f32.mrb[0].mxu0
        %v2114 = vadd.f32 %v1958, %v2113
        %v2115 = vpop.f32.mrb[0].mxu0
        %v2116 = vadd.f32 %v1962, %v2115
        %2117 = vmatprep.mubr.bf16.mxu0 %v1818
        %2118 = vmatmul.mubr.bf16.gmra.mrb[0].mxu0 %v1817
        %v2119 = vpop.f32.mrb[0].mxu0
        %v2120 = vadd.f32 %v1958, %v2119
        %v2121 = vpop.f32.mrb[0].mxu0
        %v2122 = vadd.f32 %v1962, %v2121
        %v2123 = vpop.f32.mrb[0].mxu0
        %v2124 = vadd.f32 %v1958, %v2123
        %v2125 = vpop.f32.mrb[0].mxu0
        %v2126 = vadd.f32 %v1962, %v2125
        %2127 = vmatprep.mubr.bf16.mxu0 %v1820
        %2128 = vmatmul.mubr.bf16.gmra.mrb[0].mxu0 %v1819
        %v2129 = vpop.f32.mrb[0].mxu0
        %v2130 = vadd.f32 %v1958, %v2129
        %v2131 = vpop.f32.mrb[0].mxu0
        %v2132 = vadd.f32 %v1962, %v2131
        %v2133 = vpop.f32.mrb[0].mxu0
        %v2134 = vadd.f32 %v1958, %v2133
        %v2135 = vpop.f32.mrb[0].mxu0
        %v2136 = vadd.f32 %v1962, %v2135
        %2137 = vmatprep.mubr.bf16.mxu0 %v1822
        %2138 = vmatmul.mubr.bf16.gmra.mrb[0].mxu0 %v1821
        %v2139 = vpop.f32.mrb[0].mxu0
        %v2140 = vadd.f32 %v1958, %v2139
        %v2141 = vpop.f32.mrb[0].mxu0
        %v2142 = vadd.f32 %v1962, %v2141
        %v2143 = vpop.f32.mrb[0].mxu0
        %v2144 = vadd.f32 %v1958, %v2143
        %v2145 = vpop.f32.mrb[0].mxu0
        %v2146 = vadd.f32 %v1962, %v2145
        %2147 = vmatprep.mubr.bf16.mxu0 %v1824
        %2148 = vmatmul.mubr.bf16.gmra.mrb[0].mxu0 %v1823
        %v2149 = vpop.f32.mrb[0].mxu0
        %v2150 = vadd.f32 %v1958, %v2149
        %v2151 = vpop.f32.mrb[0].mxu0
        %v2152 = vadd.f32 %v1962, %v2151
        %v2153 = vpop.f32.mrb[0].mxu0
        %v2154 = vadd.f32 %v1958, %v2153
        %v2155 = vpop.f32.mrb[0].mxu0
        %v2156 = vadd.f32 %v1962, %v2155
        %2157 = vmatprep.mubr.bf16.mxu0 %v1826
        %2158 = vmatmul.mubr.bf16.gmra.mrb[0].mxu0 %v1825
        %v2159 = vpop.f32.mrb[0].mxu0
        %v2160 = vadd.f32 %v1958, %v2159
        %v2161 = vpop.f32.mrb[0].mxu0
        %v2162 = vadd.f32 %v1962, %v2161
        %v2163 = vpop.f32.mrb[0].mxu0
        %v2164 = vadd.f32 %v1958, %v2163
        %v2165 = vpop.f32.mrb[0].mxu0
        %v2166 = vadd.f32 %v1962, %v2165
        %2167 = vmatprep.mubr.bf16.mxu0 %v1828
        %2168 = vmatmul.mubr.bf16.gmra.mrb[0].mxu0 %v1827
        %v2169 = vpop.f32.mrb[0].mxu0
        %v2170 = vadd.f32 %v1958, %v2169
        %v2171 = vpop.f32.mrb[0].mxu0
        %v2172 = vadd.f32 %v1962, %v2171
        %v2173 = vpop.f32.mrb[0].mxu0
        %v2174 = vadd.f32 %v1958, %v2173
        %v2175 = vpop.f32.mrb[0].mxu0
        %v2176 = vadd.f32 %v1962, %v2175
        %2177 = vmatprep.mubr.bf16.mxu0 %v1830
        %2178 = vmatmul.mubr.bf16.gmra.mrb[0].mxu0 %v1829
        %v2179 = vpop.f32.mrb[0].mxu0
        %v2180 = vadd.f32 %v1958, %v2179
        %v2181 = vpop.f32.mrb[0].mxu0
        %v2182 = vadd.f32 %v1962, %v2181
        %v2183 = vpop.f32.mrb[0].mxu0
        %v2184 = vadd.f32 %v1958, %v2183
        %v2185 = vpop.f32.mrb[0].mxu0
        %v2186 = vadd.f32 %v1962, %v2185
        %2187 = vmatprep.mubr.bf16.mxu0 %v1832
        %2188 = vmatmul.mubr.bf16.gmra.mrb[0].mxu0 %v1831
        %v2189 = vpop.f32.mrb[0].mxu0
        %v2190 = vadd.f32 %v1958, %v2189
        %v2191 = vpop.f32.mrb[0].mxu0
        %v2192 = vadd.f32 %v1962, %v2191
        %v2193 = vpop.f32.mrb[0].mxu0
        %v2194 = vadd.f32 %v1958, %v2193
        %v2195 = vpop.f32.mrb[0].mxu0
        %v2196 = vadd.f32 %v1962, %v2195
        %2197 = vmatprep.mubr.bf16.mxu0 %v1834
        %2198 = vmatmul.mubr.bf16.gmra.mrb[0].mxu0 %v1833
        %v2199 = vpop.f32.mrb[0].mxu0
        %v2200 = vadd.f32 %v1958, %v2199
        %v2201 = vpop.f32.mrb[0].mxu0
        %v2202 = vadd.f32 %v1962, %v2201
        %v2203 = vpop.f32.mrb[0].mxu0
        %v2204 = vadd.f32 %v1958, %v2203
        %v2205 = vpop.f32.mrb[0].mxu0
        %v2206 = vadd.f32 %v1962, %v2205
        %2207 = vmatprep.mubr.bf16.mxu0 %v1836
        %2208 = vmatmul.mubr.bf16.gmra.mrb[0].mxu0 %v1835
        %v2209 = vpop.f32.mrb[0].mxu0
        %v2210 = vadd.f32 %v1958, %v2209
        %v2211 = vpop.f32.mrb[0].mxu0
        %v2212 = vadd.f32 %v1962, %v2211
        %v2213 = vpop.f32.mrb[0].mxu0
        %v2214 = vadd.f32 %v1958, %v2213
        %v2215 = vpop.f32.mrb[0].mxu0
        %v2216 = vadd.f32 %v1962, %v2215
        %2217 = vmatprep.mubr.bf16.mxu0 %v1838
        %2218 = vmatmul.mubr.bf16.gmra.mrb[0].mxu0 %v1837
        %v2219 = vpop.f32.mrb[0].mxu0
        %v2220 = vadd.f32 %v1958, %v2219
        %v2221 = vpop.f32.mrb[0].mxu0
        %v2222 = vadd.f32 %v1962, %v2221
        %v2223 = vpop.f32.mrb[0].mxu0
        %v2224 = vadd.f32 %v1958, %v2223
        %v2225 = vpop.f32.mrb[0].mxu0
        %v2226 = vadd.f32 %v1962, %v2225
        %2227 = vmatprep.mubr.bf16.mxu0 %v1840
        %2228 = vmatmul.mubr.bf16.gmra.mrb[0].mxu0 %v1839
        %v2229 = vpop.f32.mrb[0].mxu0
        %v2230 = vadd.f32 %v1958, %v2229
        %v2231 = vpop.f32.mrb[0].mxu0
        %v2232 = vadd.f32 %v1962, %v2231
        %v2233 = vpop.f32.mrb[0].mxu0
        %v2234 = vadd.f32 %v1958, %v2233
        %v2235 = vpop.f32.mrb[0].mxu0
        %v2236 = vadd.f32 %v1962, %v2235
        %2237 = vmatprep.mubr.bf16.mxu0 %v1842
        %2238 = vmatmul.mubr.bf16.gmra.mrb[0].mxu0 %v1841
        %v2239 = vpop.f32.mrb[0].mxu0
        %v2240 = vadd.f32 %v1958, %v2239
        %v2241 = vpop.f32.mrb[0].mxu0
        %v2242 = vadd.f32 %v1962, %v2241
        %v2243 = vpop.f32.mrb[0].mxu0
        %v2244 = vadd.f32 %v1958, %v2243
        %v2245 = vpop.f32.mrb[0].mxu0
        %v2246 = vadd.f32 %v1962, %v2245
        %2247 = vmatprep.mubr.bf16.mxu0 %v1844
        %2248 = vmatmul.mubr.bf16.gmra.mrb[0].mxu0 %v1843
        %v2249 = vpop.f32.mrb[0].mxu0
        %v2250 = vadd.f32 %v1958, %v2249
        %v2251 = vpop.f32.mrb[0].mxu0
        %v2252 = vadd.f32 %v1962, %v2251
        %v2253 = vpop.f32.mrb[0].mxu0
        %v2254 = vadd.f32 %v1958, %v2253
        %v2255 = vpop.f32.mrb[0].mxu0
        %v2256 = vadd.f32 %v1962, %v2255
        %2257 = vmatprep.mubr.bf16.mxu0 %v1846
        %2258 = vmatmul.mubr.bf16.gmra.mrb[0].mxu0 %v1845
        %v2259 = vpop.f32.mrb[0].mxu0
        %v2260 = vadd.f32 %v1958, %v2259
        %v2261 = vpop.f32.mrb[0].mxu0
        %v2262 = vadd.f32 %v1962, %v2261
        %v2263 = vpop.f32.mrb[0].mxu0
        %v2264 = vadd.f32 %v1958, %v2263
        %v2265 = vpop.f32.mrb[0].mxu0
        %v2266 = vadd.f32 %v1962, %v2265
        %2267 = vmatprep.mubr.bf16.mxu0 %v1848
        %2268 = vmatmul.mubr.bf16.gmra.mrb[0].mxu0 %v1847
        %v2269 = vpop.f32.mrb[0].mxu0
        %v2270 = vadd.f32 %v1958, %v2269
        %v2271 = vpop.f32.mrb[0].mxu0
        %v2272 = vadd.f32 %v1962, %v2271
        %v2273 = vpop.f32.mrb[0].mxu0
        %v2274 = vadd.f32 %v1958, %v2273
        %v2275 = vpop.f32.mrb[0].mxu0
        %v2276 = vadd.f32 %v1962, %v2275
        %2277 = vmatprep.mubr.bf16.mxu0 %v1850
        %2278 = vmatmul.mubr.bf16.gmra.mrb[0].mxu0 %v1849
        %v2279 = vpop.f32.mrb[0].mxu0
        %v2280 = vadd.f32 %v1958, %v2279
        %v2281 = vpop.f32.mrb[0].mxu0
        %v2282 = vadd.f32 %v1962, %v2281
        %v2283 = vpop.f32.mrb[0].mxu0
        %v2284 = vadd.f32 %v1958, %v2283
        %v2285 = vpop.f32.mrb[0].mxu0
        %v2286 = vadd.f32 %v1962, %v2285
        %2287 = vmatprep.mubr.bf16.mxu0 %v1852
        %2288 = vmatmul.mubr.bf16.gmra.mrb[0].mxu0 %v1851
        %v2289 = vpop.f32.mrb[0].mxu0
        %v2290 = vadd.f32 %v1958, %v2289
        %v2291 = vpop.f32.mrb[0].mxu0
        %v2292 = vadd.f32 %v1962, %v2291
        %v2293 = vpop.f32.mrb[0].mxu0
        %v2294 = vadd.f32 %v1958, %v2293
        %v2295 = vpop.f32.mrb[0].mxu0
        %v2296 = vadd.f32 %v1962, %v2295
        %2297 = vmatprep.mubr.bf16.mxu0 %v1854
        %2298 = vmatmul.mubr.bf16.gmra.mrb[0].mxu0 %v1853
        %v2299 = vpop.f32.mrb[0].mxu0
        %v2300 = vadd.f32 %v1958, %v2299
        %v2301 = vpop.f32.mrb[0].mxu0
        %v2302 = vadd.f32 %v1962, %v2301
        %v2303 = vpop.f32.mrb[0].mxu0
        %v2304 = vadd.f32 %v1958, %v2303
        %v2305 = vpop.f32.mrb[0].mxu0
        %v2306 = vadd.f32 %v1962, %v2305
        %2307 = vmatprep.mubr.bf16.mxu0 %v1856
        %2308 = vmatmul.mubr.bf16.gmra.mrb[0].mxu0 %v1855
        %v2309 = vpop.f32.mrb[0].mxu0
        %v2310 = vadd.f32 %v1958, %v2309
        %v2311 = vpop.f32.mrb[0].mxu0
        %v2312 = vadd.f32 %v1962, %v2311
        %v2313 = vpop.f32.mrb[0].mxu0
        %v2314 = vadd.f32 %v1958, %v2313
        %v2315 = vpop.f32.mrb[0].mxu0
        %v2316 = vadd.f32 %v1962, %v2315
        %2317 = vdwg.mxu0
        %v2318 = vmax.f32 %v2000, 0.0
        %v2319 = vmax.f32 %v2002, 0.0
        %v2320 = vmax.f32 %v2004, 0.0
        %v2321 = vmax.f32 %v2006, 0.0
        %v2322 = vmax.f32 %v2010, 0.0
        %v2323 = vmax.f32 %v2012, 0.0
        %v2324 = vmax.f32 %v2014, 0.0
        %v2325 = vmax.f32 %v2016, 0.0
        %v2326 = vmax.f32 %v2020, 0.0
        %v2327 = vmax.f32 %v2022, 0.0
        %v2328 = vmax.f32 %v2024, 0.0
        %v2329 = vmax.f32 %v2026, 0.0
        %v2330 = vmax.f32 %v2030, 0.0
        %v2331 = vmax.f32 %v2032, 0.0
        %v2332 = vmax.f32 %v2034, 0.0
        %v2333 = vmax.f32 %v2036, 0.0
        %v2334 = vmax.f32 %v2040, 0.0
        %v2335 = vmax.f32 %v2042, 0.0
        %v2336 = vmax.f32 %v2044, 0.0
        %v2337 = vmax.f32 %v2046, 0.0
        %v2338 = vmax.f32 %v2050, 0.0
        %v2339 = vmax.f32 %v2052, 0.0
        %v2340 = vmax.f32 %v2054, 0.0
        %v2341 = vmax.f32 %v2056, 0.0
        %v2342 = vmax.f32 %v2060, 0.0
        %v2343 = vmax.f32 %v2062, 0.0
        %v2344 = vmax.f32 %v2064, 0.0
        %v2345 = vmax.f32 %v2066, 0.0
        %v2346 = vmax.f32 %v2070, 0.0
        %v2347 = vmax.f32 %v2072, 0.0
        %v2348 = vmax.f32 %v2074, 0.0
        %v2349 = vmax.f32 %v2076, 0.0
        %v2350 = vmax.f32 %v2080, 0.0
        %v2351 = vmax.f32 %v2082, 0.0
        %v2352 = vmax.f32 %v2084, 0.0
        %v2353 = vmax.f32 %v2086, 0.0
        %v2354 = vmax.f32 %v2090, 0.0
        %v2355 = vmax.f32 %v2092, 0.0
        %v2356 = vmax.f32 %v2094, 0.0
        %v2357 = vmax.f32 %v2096, 0.0
        %v2358 = vmax.f32 %v2100, 0.0
        %v2359 = vmax.f32 %v2102, 0.0
        %v2360 = vmax.f32 %v2104, 0.0
        %v2361 = vmax.f32 %v2106, 0.0
        %v2362 = vmax.f32 %v2110, 0.0
        %v2363 = vmax.f32 %v2112, 0.0
        %v2364 = vmax.f32 %v2114, 0.0
        %v2365 = vmax.f32 %v2116, 0.0
        %v2366 = vmax.f32 %v2120, 0.0
        %v2367 = vmax.f32 %v2122, 0.0
        %v2368 = vmax.f32 %v2124, 0.0
        %v2369 = vmax.f32 %v2126, 0.0
        %v2370 = vmax.f32 %v2130, 0.0
        %v2371 = vmax.f32 %v2132, 0.0
        %v2372 = vmax.f32 %v2134, 0.0
        %v2373 = vmax.f32 %v2136, 0.0
        %v2374 = vmax.f32 %v2140, 0.0
        %v2375 = vmax.f32 %v2142, 0.0
        %v2376 = vmax.f32 %v2144, 0.0
        %v2377 = vmax.f32 %v2146, 0.0
        %v2378 = vmax.f32 %v2150, 0.0
        %v2379 = vmax.f32 %v2152, 0.0
        %v2380 = vmax.f32 %v2154, 0.0
        %v2381 = vmax.f32 %v2156, 0.0
        %v2382 = vmax.f32 %v2160, 0.0
        %v2383 = vmax.f32 %v2162, 0.0
        %v2384 = vmax.f32 %v2164, 0.0
        %v2385 = vmax.f32 %v2166, 0.0
        %v2386 = vmax.f32 %v2170, 0.0
        %v2387 = vmax.f32 %v2172, 0.0
        %v2388 = vmax.f32 %v2174, 0.0
        %v2389 = vmax.f32 %v2176, 0.0
        %v2390 = vmax.f32 %v2180, 0.0
        %v2391 = vmax.f32 %v2182, 0.0
        %v2392 = vmax.f32 %v2184, 0.0
        %v2393 = vmax.f32 %v2186, 0.0
        %v2394 = vmax.f32 %v2190, 0.0
        %v2395 = vmax.f32 %v2192, 0.0
        %v2396 = vmax.f32 %v2194, 0.0
        %v2397 = vmax.f32 %v2196, 0.0
        %v2398 = vmax.f32 %v2200, 0.0
        %v2399 = vmax.f32 %v2202, 0.0
        %v2400 = vmax.f32 %v2204, 0.0
        %v2401 = vmax.f32 %v2206, 0.0
        %v2402 = vmax.f32 %v2210, 0.0
        %v2403 = vmax.f32 %v2212, 0.0
        %v2404 = vmax.f32 %v2214, 0.0
        %v2405 = vmax.f32 %v2216, 0.0
        %v2406 = vmax.f32 %v2220, 0.0
        %v2407 = vmax.f32 %v2222, 0.0
        %v2408 = vmax.f32 %v2224, 0.0
        %v2409 = vmax.f32 %v2226, 0.0
        %v2410 = vmax.f32 %v2230, 0.0
        %v2411 = vmax.f32 %v2232, 0.0
        %v2412 = vmax.f32 %v2234, 0.0
        %v2413 = vmax.f32 %v2236, 0.0
        %v2414 = vmax.f32 %v2240, 0.0
        %v2415 = vmax.f32 %v2242, 0.0
        %v2416 = vmax.f32 %v2244, 0.0
        %v2417 = vmax.f32 %v2246, 0.0
        %v2418 = vmax.f32 %v2250, 0.0
        %v2419 = vmax.f32 %v2252, 0.0
        %v2420 = vmax.f32 %v2254, 0.0
        %v2421 = vmax.f32 %v2256, 0.0
        %v2422 = vmax.f32 %v2260, 0.0
        %v2423 = vmax.f32 %v2262, 0.0
        %v2424 = vmax.f32 %v2264, 0.0
        %v2425 = vmax.f32 %v2266, 0.0
        %v2426 = vmax.f32 %v2270, 0.0
        %v2427 = vmax.f32 %v2272, 0.0
        %v2428 = vmax.f32 %v2274, 0.0
        %v2429 = vmax.f32 %v2276, 0.0
        %v2430 = vmax.f32 %v2280, 0.0
        %v2431 = vmax.f32 %v2282, 0.0
        %v2432 = vmax.f32 %v2284, 0.0
        %v2433 = vmax.f32 %v2286, 0.0
        %v2434 = vmax.f32 %v2290, 0.0
        %v2435 = vmax.f32 %v2292, 0.0
        %v2436 = vmax.f32 %v2294, 0.0
        %v2437 = vmax.f32 %v2296, 0.0
        %v2438 = vmax.f32 %v2300, 0.0
        %v2439 = vmax.f32 %v2302, 0.0
        %v2440 = vmax.f32 %v2304, 0.0
        %v2441 = vmax.f32 %v2306, 0.0
        %v2442 = vmax.f32 %v2310, 0.0
        %v2443 = vmax.f32 %v2312, 0.0
        %v2444 = vmax.f32 %v2314, 0.0
        %v2445 = vmax.f32 %v2316, 0.0
        %v2446 = vpack.c.bf16 %v2320, %v2318
        %v2447 = vpack.c.bf16 %v2321, %v2319
        %v2448 = vpack.c.bf16 %v2324, %v2322
        %v2449 = vpack.c.bf16 %v2325, %v2323
        %v2450 = vpack.c.bf16 %v2328, %v2326
        %v2451 = vpack.c.bf16 %v2329, %v2327
        %v2452 = vpack.c.bf16 %v2332, %v2330
        %v2453 = vpack.c.bf16 %v2333, %v2331
        %v2454 = vpack.c.bf16 %v2336, %v2334
        %v2455 = vpack.c.bf16 %v2337, %v2335
        %v2456 = vpack.c.bf16 %v2340, %v2338
        %v2457 = vpack.c.bf16 %v2341, %v2339
        %v2458 = vpack.c.bf16 %v2344, %v2342
        %v2459 = vpack.c.bf16 %v2345, %v2343
        %v2460 = vpack.c.bf16 %v2348, %v2346
        %v2461 = vpack.c.bf16 %v2349, %v2347
        %v2462 = vpack.c.bf16 %v2352, %v2350
        %v2463 = vpack.c.bf16 %v2353, %v2351
        %v2464 = vpack.c.bf16 %v2356, %v2354
        %v2465 = vpack.c.bf16 %v2357, %v2355
        %v2466 = vpack.c.bf16 %v2360, %v2358
        %v2467 = vpack.c.bf16 %v2361, %v2359
        %v2468 = vpack.c.bf16 %v2364, %v2362
        %v2469 = vpack.c.bf16 %v2365, %v2363
        %v2470 = vpack.c.bf16 %v2368, %v2366
        %v2471 = vpack.c.bf16 %v2369, %v2367
        %v2472 = vpack.c.bf16 %v2372, %v2370
        %v2473 = vpack.c.bf16 %v2373, %v2371
        %v2474 = vpack.c.bf16 %v2376, %v2374
        %v2475 = vpack.c.bf16 %v2377, %v2375
        %v2476 = vpack.c.bf16 %v2380, %v2378
        %v2477 = vpack.c.bf16 %v2381, %v2379
        %v2478 = vpack.c.bf16 %v2384, %v2382
        %v2479 = vpack.c.bf16 %v2385, %v2383
        %v2480 = vpack.c.bf16 %v2388, %v2386
        %v2481 = vpack.c.bf16 %v2389, %v2387
        %v2482 = vpack.c.bf16 %v2392, %v2390
        %v2483 = vpack.c.bf16 %v2393, %v2391
        %v2484 = vpack.c.bf16 %v2396, %v2394
        %v2485 = vpack.c.bf16 %v2397, %v2395
        %v2486 = vpack.c.bf16 %v2400, %v2398
        %v2487 = vpack.c.bf16 %v2401, %v2399
        %v2488 = vpack.c.bf16 %v2404, %v2402
        %v2489 = vpack.c.bf16 %v2405, %v2403
        %v2490 = vpack.c.bf16 %v2408, %v2406
        %v2491 = vpack.c.bf16 %v2409, %v2407
        %v2492 = vpack.c.bf16 %v2412, %v2410
        %v2493 = vpack.c.bf16 %v2413, %v2411
        %v2494 = vpack.c.bf16 %v2416, %v2414
        %v2495 = vpack.c.bf16 %v2417, %v2415
        %v2496 = vpack.c.bf16 %v2420, %v2418
        %v2497 = vpack.c.bf16 %v2421, %v2419
        %v2498 = vpack.c.bf16 %v2424, %v2422
        %v2499 = vpack.c.bf16 %v2425, %v2423
        %v2500 = vpack.c.bf16 %v2428, %v2426
        %v2501 = vpack.c.bf16 %v2429, %v2427
        %v2502 = vpack.c.bf16 %v2432, %v2430
        %v2503 = vpack.c.bf16 %v2433, %v2431
        %v2504 = vpack.c.bf16 %v2436, %v2434
        %v2505 = vpack.c.bf16 %v2437, %v2435
        %v2506 = vpack.c.bf16 %v2440, %v2438
        %v2507 = vpack.c.bf16 %v2441, %v2439
        %v2508 = vpack.c.bf16 %v2444, %v2442
        %v2509 = vpack.c.bf16 %v2445, %v2443
        %v2510 = vld [vmem:[#allocation3] sm:$0xff]
        %v2511 = vld [vmem:[#allocation3 + $0x8] sm:$0xff]
        %v2512 = vld [vmem:[#allocation3 + $0x10] sm:$0xff]
        %v2513 = vld [vmem:[#allocation3 + $0x18] sm:$0xff]
        %v2514 = vld [vmem:[#allocation3 + $0x20] sm:$0xff]
        %v2515 = vld [vmem:[#allocation3 + $0x28] sm:$0xff]
        %v2516 = vld [vmem:[#allocation3 + $0x30] sm:$0xff]
        %v2517 = vld [vmem:[#allocation3 + $0x38] sm:$0xff]
        %v2518 = vld [vmem:[#allocation3 + $0x40] sm:$0xff]
        %v2519 = vld [vmem:[#allocation3 + $0x48] sm:$0xff]
        %v2520 = vld [vmem:[#allocation3 + $0x50] sm:$0xff]
        %v2521 = vld [vmem:[#allocation3 + $0x58] sm:$0xff]
        %v2522 = vld [vmem:[#allocation3 + $0x60] sm:$0xff]
        %v2523 = vld [vmem:[#allocation3 + $0x68] sm:$0xff]
        %v2524 = vld [vmem:[#allocation3 + $0x70] sm:$0xff]
        %v2525 = vld [vmem:[#allocation3 + $0x78] sm:$0xff]
        %v2526 = vld [vmem:[#allocation3 + $0x80] sm:$0xff]
        %v2527 = vld [vmem:[#allocation3 + $0x88] sm:$0xff]
        %v2528 = vld [vmem:[#allocation3 + $0x90] sm:$0xff]
        %v2529 = vld [vmem:[#allocation3 + $0x98] sm:$0xff]
        %v2530 = vld [vmem:[#allocation3 + $0xa0] sm:$0xff]
        %v2531 = vld [vmem:[#allocation3 + $0xa8] sm:$0xff]
        %v2532 = vld [vmem:[#allocation3 + $0xb0] sm:$0xff]
        %v2533 = vld [vmem:[#allocation3 + $0xb8] sm:$0xff]
        %v2534 = vld [vmem:[#allocation3 + $0xc0] sm:$0xff]
        %v2535 = vld [vmem:[#allocation3 + $0xc8] sm:$0xff]
        %v2536 = vld [vmem:[#allocation3 + $0xd0] sm:$0xff]
        %v2537 = vld [vmem:[#allocation3 + $0xd8] sm:$0xff]
        %v2538 = vld [vmem:[#allocation3 + $0xe0] sm:$0xff]
        %v2539 = vld [vmem:[#allocation3 + $0xe8] sm:$0xff]
        %v2540 = vld [vmem:[#allocation3 + $0xf0] sm:$0xff]
        %v2541 = vld [vmem:[#allocation3 + $0xf8] sm:$0xff]
        %v2542 = vld [vmem:[#allocation3 + $0x100] sm:$0xff]
        %v2543 = vld [vmem:[#allocation3 + $0x108] sm:$0xff]
        %v2544 = vld [vmem:[#allocation3 + $0x110] sm:$0xff]
        %v2545 = vld [vmem:[#allocation3 + $0x118] sm:$0xff]
        %v2546 = vld [vmem:[#allocation3 + $0x120] sm:$0xff]
        %v2547 = vld [vmem:[#allocation3 + $0x128] sm:$0xff]
        %v2548 = vld [vmem:[#allocation3 + $0x130] sm:$0xff]
        %v2549 = vld [vmem:[#allocation3 + $0x138] sm:$0xff]
        %v2550 = vld [vmem:[#allocation3 + $0x140] sm:$0xff]
        %v2551 = vld [vmem:[#allocation3 + $0x148] sm:$0xff]
        %v2552 = vld [vmem:[#allocation3 + $0x150] sm:$0xff]
        %v2553 = vld [vmem:[#allocation3 + $0x158] sm:$0xff]
        %v2554 = vld [vmem:[#allocation3 + $0x160] sm:$0xff]
        %v2555 = vld [vmem:[#allocation3 + $0x168] sm:$0xff]
        %v2556 = vld [vmem:[#allocation3 + $0x170] sm:$0xff]
        %v2557 = vld [vmem:[#allocation3 + $0x178] sm:$0xff]
        %v2558 = vld [vmem:[#allocation3 + $0x180] sm:$0xff]
        %v2559 = vld [vmem:[#allocation3 + $0x188] sm:$0xff]
        %v2560 = vld [vmem:[#allocation3 + $0x190] sm:$0xff]
        %v2561 = vld [vmem:[#allocation3 + $0x198] sm:$0xff]
        %v2562 = vld [vmem:[#allocation3 + $0x1a0] sm:$0xff]
        %v2563 = vld [vmem:[#allocation3 + $0x1a8] sm:$0xff]
        %v2564 = vld [vmem:[#allocation3 + $0x1b0] sm:$0xff]
        %v2565 = vld [vmem:[#allocation3 + $0x1b8] sm:$0xff]
        %v2566 = vld [vmem:[#allocation3 + $0x1c0] sm:$0xff]
        %v2567 = vld [vmem:[#allocation3 + $0x1c8] sm:$0xff]
        %v2568 = vld [vmem:[#allocation3 + $0x1d0] sm:$0xff]
        %v2569 = vld [vmem:[#allocation3 + $0x1d8] sm:$0xff]
        %v2570 = vld [vmem:[#allocation3 + $0x1e0] sm:$0xff]
        %v2571 = vld [vmem:[#allocation3 + $0x1e8] sm:$0xff]
        %v2572 = vld [vmem:[#allocation3 + $0x1f0] sm:$0xff]
        %v2573 = vld [vmem:[#allocation3 + $0x1f8] sm:$0xff]
        %v2574 = vpack.c.bf16 %v2512, %v2510
        %v2575 = vpack.c.bf16 %v2513, %v2511
        %v2576 = vpack.c.bf16 %v2516, %v2514
        %v2577 = vpack.c.bf16 %v2517, %v2515
        %v2578 = vpack.c.bf16 %v2520, %v2518
        %v2579 = vpack.c.bf16 %v2521, %v2519
        %v2580 = vpack.c.bf16 %v2524, %v2522
        %v2581 = vpack.c.bf16 %v2525, %v2523
        %v2582 = vpack.c.bf16 %v2528, %v2526
        %v2583 = vpack.c.bf16 %v2529, %v2527
        %v2584 = vpack.c.bf16 %v2532, %v2530
        %v2585 = vpack.c.bf16 %v2533, %v2531
        %v2586 = vpack.c.bf16 %v2536, %v2534
        %v2587 = vpack.c.bf16 %v2537, %v2535
        %v2588 = vpack.c.bf16 %v2540, %v2538
        %v2589 = vpack.c.bf16 %v2541, %v2539
        %v2590 = vpack.c.bf16 %v2544, %v2542
        %v2591 = vpack.c.bf16 %v2545, %v2543
        %v2592 = vpack.c.bf16 %v2548, %v2546
        %v2593 = vpack.c.bf16 %v2549, %v2547
        %v2594 = vpack.c.bf16 %v2552, %v2550
        %v2595 = vpack.c.bf16 %v2553, %v2551
        %v2596 = vpack.c.bf16 %v2556, %v2554
        %v2597 = vpack.c.bf16 %v2557, %v2555
        %v2598 = vpack.c.bf16 %v2560, %v2558
        %v2599 = vpack.c.bf16 %v2561, %v2559
        %v2600 = vpack.c.bf16 %v2564, %v2562
        %v2601 = vpack.c.bf16 %v2565, %v2563
        %v2602 = vpack.c.bf16 %v2568, %v2566
        %v2603 = vpack.c.bf16 %v2569, %v2567
        %v2604 = vpack.c.bf16 %v2572, %v2570
        %v2605 = vpack.c.bf16 %v2573, %v2571
        %v2606 = vld [vmem:[%s9] sm:$0x3]
        %v2608 = vlaneseq
        %v2609 = vshrl.u32 %v2608, 7
        %v2610 = vsub.s32 0, %v2609
        %v2611 = vrot.slane %v2606, %v2610
        %v2612 = vlaneseq
        %v2613 = vshrl.u32 %v2612, 7
        %v2614 = vsub.s32 1, %v2613
        %v2615 = vrot.slane %v2606, %v2614
        %2618 = vmatprep.subr.bf16.mxu0 %v2575
        %2619 = vmatpush1.bf16.msra.mxu0 %v2574
        %2620 = vmatprep.subr.bf16.mxu0 %v2577
        %2621 = vmatpush1.bf16.msra.mxu0 %v2576
        %2622 = vmatprep.subr.bf16.mxu0 %v2579
        %2623 = vmatpush1.bf16.msra.mxu0 %v2578
        %2624 = vmatprep.subr.bf16.mxu0 %v2581
        %2625 = vmatpush1.bf16.msra.mxu0 %v2580
        %2626 = vmatprep.subr.bf16.mxu0 %v2583
        %2627 = vmatpush1.bf16.msra.mxu0 %v2582
        %2628 = vmatprep.subr.bf16.mxu0 %v2585
        %2629 = vmatpush1.bf16.msra.mxu0 %v2584
        %2630 = vmatprep.subr.bf16.mxu0 %v2587
        %2631 = vmatpush1.bf16.msra.mxu0 %v2586
        %2632 = vmatprep.subr.bf16.mxu0 %v2589
        %2633 = vmatpush1.bf16.msra.mxu0 %v2588
        %2634 = vmatprep.subr.bf16.mxu0 %v2591
        %2635 = vmatpush1.bf16.msra.mxu0 %v2590
        %2636 = vmatprep.subr.bf16.mxu0 %v2593
        %2637 = vmatpush1.bf16.msra.mxu0 %v2592
        %2638 = vmatprep.subr.bf16.mxu0 %v2595
        %2639 = vmatpush1.bf16.msra.mxu0 %v2594
        %2640 = vmatprep.subr.bf16.mxu0 %v2597
        %2641 = vmatpush1.bf16.msra.mxu0 %v2596
        %2642 = vmatprep.subr.bf16.mxu0 %v2599
        %2643 = vmatpush1.bf16.msra.mxu0 %v2598
        %2644 = vmatprep.subr.bf16.mxu0 %v2601
        %2645 = vmatpush1.bf16.msra.mxu0 %v2600
        %2646 = vmatprep.subr.bf16.mxu0 %v2603
        %2647 = vmatpush1.bf16.msra.mxu0 %v2602
        %2648 = vmatprep.subr.bf16.mxu0 %v2605
        %2649 = vmatpush1.bf16.msra.mxu0 %v2604
        %2650 = vmatprep.mubr.bf16.mxu0 %v2447
        %2651 = vmatmul.mubr.bf16.gmra.mrb[0].mxu0 %v2446
        %v2652 = vpop.f32.mrb[0].mxu0
        %v2653 = vadd.f32 %v2611, %v2652
        %v2654 = vpop.f32.mrb[0].mxu0
        %v2655 = vadd.f32 %v2615, %v2654
        %v2656 = vpop.f32.mrb[0].mxu0
        %v2657 = vadd.f32 %v2611, %v2656
        %v2658 = vpop.f32.mrb[0].mxu0
        %v2659 = vadd.f32 %v2615, %v2658
        %2660 = vmatprep.mubr.bf16.mxu0 %v2449
        %2661 = vmatmul.mubr.bf16.gmra.mrb[0].mxu0 %v2448
        %v2662 = vpop.f32.mrb[0].mxu0
        %v2663 = vadd.f32 %v2611, %v2662
        %v2664 = vpop.f32.mrb[0].mxu0
        %v2665 = vadd.f32 %v2615, %v2664
        %v2666 = vpop.f32.mrb[0].mxu0
        %v2667 = vadd.f32 %v2611, %v2666
        %v2668 = vpop.f32.mrb[0].mxu0
        %v2669 = vadd.f32 %v2615, %v2668
        %2670 = vmatprep.mubr.bf16.mxu0 %v2451
        %2671 = vmatmul.mubr.bf16.gmra.mrb[0].mxu0 %v2450
        %v2672 = vpop.f32.mrb[0].mxu0
        %v2673 = vadd.f32 %v2611, %v2672
        %v2674 = vpop.f32.mrb[0].mxu0
        %v2675 = vadd.f32 %v2615, %v2674
        %v2676 = vpop.f32.mrb[0].mxu0
        %v2677 = vadd.f32 %v2611, %v2676
        %v2678 = vpop.f32.mrb[0].mxu0
        %v2679 = vadd.f32 %v2615, %v2678
        %2680 = vmatprep.mubr.bf16.mxu0 %v2453
        %2681 = vmatmul.mubr.bf16.gmra.mrb[0].mxu0 %v2452
        %v2682 = vpop.f32.mrb[0].mxu0
        %v2683 = vadd.f32 %v2611, %v2682
        %v2684 = vpop.f32.mrb[0].mxu0
        %v2685 = vadd.f32 %v2615, %v2684
        %v2686 = vpop.f32.mrb[0].mxu0
        %v2687 = vadd.f32 %v2611, %v2686
        %v2688 = vpop.f32.mrb[0].mxu0
        %v2689 = vadd.f32 %v2615, %v2688
        %2690 = vmatprep.mubr.bf16.mxu0 %v2455
        %2691 = vmatmul.mubr.bf16.gmra.mrb[0].mxu0 %v2454
        %v2692 = vpop.f32.mrb[0].mxu0
        %v2693 = vadd.f32 %v2611, %v2692
        %v2694 = vpop.f32.mrb[0].mxu0
        %v2695 = vadd.f32 %v2615, %v2694
        %v2696 = vpop.f32.mrb[0].mxu0
        %v2697 = vadd.f32 %v2611, %v2696
        %v2698 = vpop.f32.mrb[0].mxu0
        %v2699 = vadd.f32 %v2615, %v2698
        %2700 = vmatprep.mubr.bf16.mxu0 %v2457
        %2701 = vmatmul.mubr.bf16.gmra.mrb[0].mxu0 %v2456
        %v2702 = vpop.f32.mrb[0].mxu0
        %v2703 = vadd.f32 %v2611, %v2702
        %v2704 = vpop.f32.mrb[0].mxu0
        %v2705 = vadd.f32 %v2615, %v2704
        %v2706 = vpop.f32.mrb[0].mxu0
        %v2707 = vadd.f32 %v2611, %v2706
        %v2708 = vpop.f32.mrb[0].mxu0
        %v2709 = vadd.f32 %v2615, %v2708
        %2710 = vmatprep.mubr.bf16.mxu0 %v2459
        %2711 = vmatmul.mubr.bf16.gmra.mrb[0].mxu0 %v2458
        %v2712 = vpop.f32.mrb[0].mxu0
        %v2713 = vadd.f32 %v2611, %v2712
        %v2714 = vpop.f32.mrb[0].mxu0
        %v2715 = vadd.f32 %v2615, %v2714
        %v2716 = vpop.f32.mrb[0].mxu0
        %v2717 = vadd.f32 %v2611, %v2716
        %v2718 = vpop.f32.mrb[0].mxu0
        %v2719 = vadd.f32 %v2615, %v2718
        %2720 = vmatprep.mubr.bf16.mxu0 %v2461
        %2721 = vmatmul.mubr.bf16.gmra.mrb[0].mxu0 %v2460
        %v2722 = vpop.f32.mrb[0].mxu0
        %v2723 = vadd.f32 %v2611, %v2722
        %v2724 = vpop.f32.mrb[0].mxu0
        %v2725 = vadd.f32 %v2615, %v2724
        %v2726 = vpop.f32.mrb[0].mxu0
        %v2727 = vadd.f32 %v2611, %v2726
        %v2728 = vpop.f32.mrb[0].mxu0
        %v2729 = vadd.f32 %v2615, %v2728
        %2730 = vmatprep.mubr.bf16.mxu0 %v2463
        %2731 = vmatmul.mubr.bf16.gmra.mrb[0].mxu0 %v2462
        %v2732 = vpop.f32.mrb[0].mxu0
        %v2733 = vadd.f32 %v2611, %v2732
        %v2734 = vpop.f32.mrb[0].mxu0
        %v2735 = vadd.f32 %v2615, %v2734
        %v2736 = vpop.f32.mrb[0].mxu0
        %v2737 = vadd.f32 %v2611, %v2736
        %v2738 = vpop.f32.mrb[0].mxu0
        %v2739 = vadd.f32 %v2615, %v2738
        %2740 = vmatprep.mubr.bf16.mxu0 %v2465
        %2741 = vmatmul.mubr.bf16.gmra.mrb[0].mxu0 %v2464
        %v2742 = vpop.f32.mrb[0].mxu0
        %v2743 = vadd.f32 %v2611, %v2742
        %v2744 = vpop.f32.mrb[0].mxu0
        %v2745 = vadd.f32 %v2615, %v2744
        %v2746 = vpop.f32.mrb[0].mxu0
        %v2747 = vadd.f32 %v2611, %v2746
        %v2748 = vpop.f32.mrb[0].mxu0
        %v2749 = vadd.f32 %v2615, %v2748
        %2750 = vmatprep.mubr.bf16.mxu0 %v2467
        %2751 = vmatmul.mubr.bf16.gmra.mrb[0].mxu0 %v2466
        %v2752 = vpop.f32.mrb[0].mxu0
        %v2753 = vadd.f32 %v2611, %v2752
        %v2754 = vpop.f32.mrb[0].mxu0
        %v2755 = vadd.f32 %v2615, %v2754
        %v2756 = vpop.f32.mrb[0].mxu0
        %v2757 = vadd.f32 %v2611, %v2756
        %v2758 = vpop.f32.mrb[0].mxu0
        %v2759 = vadd.f32 %v2615, %v2758
        %2760 = vmatprep.mubr.bf16.mxu0 %v2469
        %2761 = vmatmul.mubr.bf16.gmra.mrb[0].mxu0 %v2468
        %v2762 = vpop.f32.mrb[0].mxu0
        %v2763 = vadd.f32 %v2611, %v2762
        %v2764 = vpop.f32.mrb[0].mxu0
        %v2765 = vadd.f32 %v2615, %v2764
        %v2766 = vpop.f32.mrb[0].mxu0
        %v2767 = vadd.f32 %v2611, %v2766
        %v2768 = vpop.f32.mrb[0].mxu0
        %v2769 = vadd.f32 %v2615, %v2768
        %2770 = vmatprep.mubr.bf16.mxu0 %v2471
        %2771 = vmatmul.mubr.bf16.gmra.mrb[0].mxu0 %v2470
        %v2772 = vpop.f32.mrb[0].mxu0
        %v2773 = vadd.f32 %v2611, %v2772
        %v2774 = vpop.f32.mrb[0].mxu0
        %v2775 = vadd.f32 %v2615, %v2774
        %v2776 = vpop.f32.mrb[0].mxu0
        %v2777 = vadd.f32 %v2611, %v2776
        %v2778 = vpop.f32.mrb[0].mxu0
        %v2779 = vadd.f32 %v2615, %v2778
        %2780 = vmatprep.mubr.bf16.mxu0 %v2473
        %2781 = vmatmul.mubr.bf16.gmra.mrb[0].mxu0 %v2472
        %v2782 = vpop.f32.mrb[0].mxu0
        %v2783 = vadd.f32 %v2611, %v2782
        %v2784 = vpop.f32.mrb[0].mxu0
        %v2785 = vadd.f32 %v2615, %v2784
        %v2786 = vpop.f32.mrb[0].mxu0
        %v2787 = vadd.f32 %v2611, %v2786
        %v2788 = vpop.f32.mrb[0].mxu0
        %v2789 = vadd.f32 %v2615, %v2788
        %2790 = vmatprep.mubr.bf16.mxu0 %v2475
        %2791 = vmatmul.mubr.bf16.gmra.mrb[0].mxu0 %v2474
        %v2792 = vpop.f32.mrb[0].mxu0
        %v2793 = vadd.f32 %v2611, %v2792
        %v2794 = vpop.f32.mrb[0].mxu0
        %v2795 = vadd.f32 %v2615, %v2794
        %v2796 = vpop.f32.mrb[0].mxu0
        %v2797 = vadd.f32 %v2611, %v2796
        %v2798 = vpop.f32.mrb[0].mxu0
        %v2799 = vadd.f32 %v2615, %v2798
        %2800 = vmatprep.mubr.bf16.mxu0 %v2477
        %2801 = vmatmul.mubr.bf16.gmra.mrb[0].mxu0 %v2476
        %v2802 = vpop.f32.mrb[0].mxu0
        %v2803 = vadd.f32 %v2611, %v2802
        %v2804 = vpop.f32.mrb[0].mxu0
        %v2805 = vadd.f32 %v2615, %v2804
        %v2806 = vpop.f32.mrb[0].mxu0
        %v2807 = vadd.f32 %v2611, %v2806
        %v2808 = vpop.f32.mrb[0].mxu0
        %v2809 = vadd.f32 %v2615, %v2808
        %2810 = vmatprep.mubr.bf16.mxu0 %v2479
        %2811 = vmatmul.mubr.bf16.gmra.mrb[0].mxu0 %v2478
        %v2812 = vpop.f32.mrb[0].mxu0
        %v2813 = vadd.f32 %v2611, %v2812
        %v2814 = vpop.f32.mrb[0].mxu0
        %v2815 = vadd.f32 %v2615, %v2814
        %v2816 = vpop.f32.mrb[0].mxu0
        %v2817 = vadd.f32 %v2611, %v2816
        %v2818 = vpop.f32.mrb[0].mxu0
        %v2819 = vadd.f32 %v2615, %v2818
        %2820 = vmatprep.mubr.bf16.mxu0 %v2481
        %2821 = vmatmul.mubr.bf16.gmra.mrb[0].mxu0 %v2480
        %v2822 = vpop.f32.mrb[0].mxu0
        %v2823 = vadd.f32 %v2611, %v2822
        %v2824 = vpop.f32.mrb[0].mxu0
        %v2825 = vadd.f32 %v2615, %v2824
        %v2826 = vpop.f32.mrb[0].mxu0
        %v2827 = vadd.f32 %v2611, %v2826
        %v2828 = vpop.f32.mrb[0].mxu0
        %v2829 = vadd.f32 %v2615, %v2828
        %2830 = vmatprep.mubr.bf16.mxu0 %v2483
        %2831 = vmatmul.mubr.bf16.gmra.mrb[0].mxu0 %v2482
        %v2832 = vpop.f32.mrb[0].mxu0
        %v2833 = vadd.f32 %v2611, %v2832
        %v2834 = vpop.f32.mrb[0].mxu0
        %v2835 = vadd.f32 %v2615, %v2834
        %v2836 = vpop.f32.mrb[0].mxu0
        %v2837 = vadd.f32 %v2611, %v2836
        %v2838 = vpop.f32.mrb[0].mxu0
        %v2839 = vadd.f32 %v2615, %v2838
        %2840 = vmatprep.mubr.bf16.mxu0 %v2485
        %2841 = vmatmul.mubr.bf16.gmra.mrb[0].mxu0 %v2484
        %v2842 = vpop.f32.mrb[0].mxu0
        %v2843 = vadd.f32 %v2611, %v2842
        %v2844 = vpop.f32.mrb[0].mxu0
        %v2845 = vadd.f32 %v2615, %v2844
        %v2846 = vpop.f32.mrb[0].mxu0
        %v2847 = vadd.f32 %v2611, %v2846
        %v2848 = vpop.f32.mrb[0].mxu0
        %v2849 = vadd.f32 %v2615, %v2848
        %2850 = vmatprep.mubr.bf16.mxu0 %v2487
        %2851 = vmatmul.mubr.bf16.gmra.mrb[0].mxu0 %v2486
        %v2852 = vpop.f32.mrb[0].mxu0
        %v2853 = vadd.f32 %v2611, %v2852
        %v2854 = vpop.f32.mrb[0].mxu0
        %v2855 = vadd.f32 %v2615, %v2854
        %v2856 = vpop.f32.mrb[0].mxu0
        %v2857 = vadd.f32 %v2611, %v2856
        %v2858 = vpop.f32.mrb[0].mxu0
        %v2859 = vadd.f32 %v2615, %v2858
        %2860 = vmatprep.mubr.bf16.mxu0 %v2489
        %2861 = vmatmul.mubr.bf16.gmra.mrb[0].mxu0 %v2488
        %v2862 = vpop.f32.mrb[0].mxu0
        %v2863 = vadd.f32 %v2611, %v2862
        %v2864 = vpop.f32.mrb[0].mxu0
        %v2865 = vadd.f32 %v2615, %v2864
        %v2866 = vpop.f32.mrb[0].mxu0
        %v2867 = vadd.f32 %v2611, %v2866
        %v2868 = vpop.f32.mrb[0].mxu0
        %v2869 = vadd.f32 %v2615, %v2868
        %2870 = vmatprep.mubr.bf16.mxu0 %v2491
        %2871 = vmatmul.mubr.bf16.gmra.mrb[0].mxu0 %v2490
        %v2872 = vpop.f32.mrb[0].mxu0
        %v2873 = vadd.f32 %v2611, %v2872
        %v2874 = vpop.f32.mrb[0].mxu0
        %v2875 = vadd.f32 %v2615, %v2874
        %v2876 = vpop.f32.mrb[0].mxu0
        %v2877 = vadd.f32 %v2611, %v2876
        %v2878 = vpop.f32.mrb[0].mxu0
        %v2879 = vadd.f32 %v2615, %v2878
        %2880 = vmatprep.mubr.bf16.mxu0 %v2493
        %2881 = vmatmul.mubr.bf16.gmra.mrb[0].mxu0 %v2492
        %v2882 = vpop.f32.mrb[0].mxu0
        %v2883 = vadd.f32 %v2611, %v2882
        %v2884 = vpop.f32.mrb[0].mxu0
        %v2885 = vadd.f32 %v2615, %v2884
        %v2886 = vpop.f32.mrb[0].mxu0
        %v2887 = vadd.f32 %v2611, %v2886
        %v2888 = vpop.f32.mrb[0].mxu0
        %v2889 = vadd.f32 %v2615, %v2888
        %2890 = vmatprep.mubr.bf16.mxu0 %v2495
        %2891 = vmatmul.mubr.bf16.gmra.mrb[0].mxu0 %v2494
        %v2892 = vpop.f32.mrb[0].mxu0
        %v2893 = vadd.f32 %v2611, %v2892
        %v2894 = vpop.f32.mrb[0].mxu0
        %v2895 = vadd.f32 %v2615, %v2894
        %v2896 = vpop.f32.mrb[0].mxu0
        %v2897 = vadd.f32 %v2611, %v2896
        %v2898 = vpop.f32.mrb[0].mxu0
        %v2899 = vadd.f32 %v2615, %v2898
        %2900 = vmatprep.mubr.bf16.mxu0 %v2497
        %2901 = vmatmul.mubr.bf16.gmra.mrb[0].mxu0 %v2496
        %v2902 = vpop.f32.mrb[0].mxu0
        %v2903 = vadd.f32 %v2611, %v2902
        %v2904 = vpop.f32.mrb[0].mxu0
        %v2905 = vadd.f32 %v2615, %v2904
        %v2906 = vpop.f32.mrb[0].mxu0
        %v2907 = vadd.f32 %v2611, %v2906
        %v2908 = vpop.f32.mrb[0].mxu0
        %v2909 = vadd.f32 %v2615, %v2908
        %2910 = vmatprep.mubr.bf16.mxu0 %v2499
        %2911 = vmatmul.mubr.bf16.gmra.mrb[0].mxu0 %v2498
        %v2912 = vpop.f32.mrb[0].mxu0
        %v2913 = vadd.f32 %v2611, %v2912
        %v2914 = vpop.f32.mrb[0].mxu0
        %v2915 = vadd.f32 %v2615, %v2914
        %v2916 = vpop.f32.mrb[0].mxu0
        %v2917 = vadd.f32 %v2611, %v2916
        %v2918 = vpop.f32.mrb[0].mxu0
        %v2919 = vadd.f32 %v2615, %v2918
        %2920 = vmatprep.mubr.bf16.mxu0 %v2501
        %2921 = vmatmul.mubr.bf16.gmra.mrb[0].mxu0 %v2500
        %v2922 = vpop.f32.mrb[0].mxu0
        %v2923 = vadd.f32 %v2611, %v2922
        %v2924 = vpop.f32.mrb[0].mxu0
        %v2925 = vadd.f32 %v2615, %v2924
        %v2926 = vpop.f32.mrb[0].mxu0
        %v2927 = vadd.f32 %v2611, %v2926
        %v2928 = vpop.f32.mrb[0].mxu0
        %v2929 = vadd.f32 %v2615, %v2928
        %2930 = vmatprep.mubr.bf16.mxu0 %v2503
        %2931 = vmatmul.mubr.bf16.gmra.mrb[0].mxu0 %v2502
        %v2932 = vpop.f32.mrb[0].mxu0
        %v2933 = vadd.f32 %v2611, %v2932
        %v2934 = vpop.f32.mrb[0].mxu0
        %v2935 = vadd.f32 %v2615, %v2934
        %v2936 = vpop.f32.mrb[0].mxu0
        %v2937 = vadd.f32 %v2611, %v2936
        %v2938 = vpop.f32.mrb[0].mxu0
        %v2939 = vadd.f32 %v2615, %v2938
        %2940 = vmatprep.mubr.bf16.mxu0 %v2505
        %2941 = vmatmul.mubr.bf16.gmra.mrb[0].mxu0 %v2504
        %v2942 = vpop.f32.mrb[0].mxu0
        %v2943 = vadd.f32 %v2611, %v2942
        %v2944 = vpop.f32.mrb[0].mxu0
        %v2945 = vadd.f32 %v2615, %v2944
        %v2946 = vpop.f32.mrb[0].mxu0
        %v2947 = vadd.f32 %v2611, %v2946
        %v2948 = vpop.f32.mrb[0].mxu0
        %v2949 = vadd.f32 %v2615, %v2948
        %2950 = vmatprep.mubr.bf16.mxu0 %v2507
        %2951 = vmatmul.mubr.bf16.gmra.mrb[0].mxu0 %v2506
        %v2952 = vpop.f32.mrb[0].mxu0
        %v2953 = vadd.f32 %v2611, %v2952
        %v2954 = vpop.f32.mrb[0].mxu0
        %v2955 = vadd.f32 %v2615, %v2954
        %v2956 = vpop.f32.mrb[0].mxu0
        %v2957 = vadd.f32 %v2611, %v2956
        %v2958 = vpop.f32.mrb[0].mxu0
        %v2959 = vadd.f32 %v2615, %v2958
        %2960 = vmatprep.mubr.bf16.mxu0 %v2509
        %2961 = vmatmul.mubr.bf16.gmra.mrb[0].mxu0 %v2508
        %v2962 = vpop.f32.mrb[0].mxu0
        %v2963 = vadd.f32 %v2611, %v2962
        %v2964 = vpop.f32.mrb[0].mxu0
        %v2965 = vadd.f32 %v2615, %v2964
        %v2966 = vpop.f32.mrb[0].mxu0
        %v2967 = vadd.f32 %v2611, %v2966
        %v2968 = vpop.f32.mrb[0].mxu0
        %v2969 = vadd.f32 %v2615, %v2968
        %2970 = vdwg.mxu0
        %v2971 = vmax.f32 %v2653, 0.0
        %v2972 = vmax.f32 %v2655, 0.0
        %v2973 = vmax.f32 %v2657, 0.0
        %v2974 = vmax.f32 %v2659, 0.0
        %v2975 = vmax.f32 %v2663, 0.0
        %v2976 = vmax.f32 %v2665, 0.0
        %v2977 = vmax.f32 %v2667, 0.0
        %v2978 = vmax.f32 %v2669, 0.0
        %v2979 = vmax.f32 %v2673, 0.0
        %v2980 = vmax.f32 %v2675, 0.0
        %v2981 = vmax.f32 %v2677, 0.0
        %v2982 = vmax.f32 %v2679, 0.0
        %v2983 = vmax.f32 %v2683, 0.0
        %v2984 = vmax.f32 %v2685, 0.0
        %v2985 = vmax.f32 %v2687, 0.0
        %v2986 = vmax.f32 %v2689, 0.0
        %v2987 = vmax.f32 %v2693, 0.0
        %v2988 = vmax.f32 %v2695, 0.0
        %v2989 = vmax.f32 %v2697, 0.0
        %v2990 = vmax.f32 %v2699, 0.0
        %v2991 = vmax.f32 %v2703, 0.0
        %v2992 = vmax.f32 %v2705, 0.0
        %v2993 = vmax.f32 %v2707, 0.0
        %v2994 = vmax.f32 %v2709, 0.0
        %v2995 = vmax.f32 %v2713, 0.0
        %v2996 = vmax.f32 %v2715, 0.0
        %v2997 = vmax.f32 %v2717, 0.0
        %v2998 = vmax.f32 %v2719, 0.0
        %v2999 = vmax.f32 %v2723, 0.0
        %v3000 = vmax.f32 %v2725, 0.0
        %v3001 = vmax.f32 %v2727, 0.0
        %v3002 = vmax.f32 %v2729, 0.0
        %v3003 = vmax.f32 %v2733, 0.0
        %v3004 = vmax.f32 %v2735, 0.0
        %v3005 = vmax.f32 %v2737, 0.0
        %v3006 = vmax.f32 %v2739, 0.0
        %v3007 = vmax.f32 %v2743, 0.0
        %v3008 = vmax.f32 %v2745, 0.0
        %v3009 = vmax.f32 %v2747, 0.0
        %v3010 = vmax.f32 %v2749, 0.0
        %v3011 = vmax.f32 %v2753, 0.0
        %v3012 = vmax.f32 %v2755, 0.0
        %v3013 = vmax.f32 %v2757, 0.0
        %v3014 = vmax.f32 %v2759, 0.0
        %v3015 = vmax.f32 %v2763, 0.0
        %v3016 = vmax.f32 %v2765, 0.0
        %v3017 = vmax.f32 %v2767, 0.0
        %v3018 = vmax.f32 %v2769, 0.0
        %v3019 = vmax.f32 %v2773, 0.0
        %v3020 = vmax.f32 %v2775, 0.0
        %v3021 = vmax.f32 %v2777, 0.0
        %v3022 = vmax.f32 %v2779, 0.0
        %v3023 = vmax.f32 %v2783, 0.0
        %v3024 = vmax.f32 %v2785, 0.0
        %v3025 = vmax.f32 %v2787, 0.0
        %v3026 = vmax.f32 %v2789, 0.0
        %v3027 = vmax.f32 %v2793, 0.0
        %v3028 = vmax.f32 %v2795, 0.0
        %v3029 = vmax.f32 %v2797, 0.0
        %v3030 = vmax.f32 %v2799, 0.0
        %v3031 = vmax.f32 %v2803, 0.0
        %v3032 = vmax.f32 %v2805, 0.0
        %v3033 = vmax.f32 %v2807, 0.0
        %v3034 = vmax.f32 %v2809, 0.0
        %v3035 = vmax.f32 %v2813, 0.0
        %v3036 = vmax.f32 %v2815, 0.0
        %v3037 = vmax.f32 %v2817, 0.0
        %v3038 = vmax.f32 %v2819, 0.0
        %v3039 = vmax.f32 %v2823, 0.0
        %v3040 = vmax.f32 %v2825, 0.0
        %v3041 = vmax.f32 %v2827, 0.0
        %v3042 = vmax.f32 %v2829, 0.0
        %v3043 = vmax.f32 %v2833, 0.0
        %v3044 = vmax.f32 %v2835, 0.0
        %v3045 = vmax.f32 %v2837, 0.0
        %v3046 = vmax.f32 %v2839, 0.0
        %v3047 = vmax.f32 %v2843, 0.0
        %v3048 = vmax.f32 %v2845, 0.0
        %v3049 = vmax.f32 %v2847, 0.0
        %v3050 = vmax.f32 %v2849, 0.0
        %v3051 = vmax.f32 %v2853, 0.0
        %v3052 = vmax.f32 %v2855, 0.0
        %v3053 = vmax.f32 %v2857, 0.0
        %v3054 = vmax.f32 %v2859, 0.0
        %v3055 = vmax.f32 %v2863, 0.0
        %v3056 = vmax.f32 %v2865, 0.0
        %v3057 = vmax.f32 %v2867, 0.0
        %v3058 = vmax.f32 %v2869, 0.0
        %v3059 = vmax.f32 %v2873, 0.0
        %v3060 = vmax.f32 %v2875, 0.0
        %v3061 = vmax.f32 %v2877, 0.0
        %v3062 = vmax.f32 %v2879, 0.0
        %v3063 = vmax.f32 %v2883, 0.0
        %v3064 = vmax.f32 %v2885, 0.0
        %v3065 = vmax.f32 %v2887, 0.0
        %v3066 = vmax.f32 %v2889, 0.0
        %v3067 = vmax.f32 %v2893, 0.0
        %v3068 = vmax.f32 %v2895, 0.0
        %v3069 = vmax.f32 %v2897, 0.0
        %v3070 = vmax.f32 %v2899, 0.0
        %v3071 = vmax.f32 %v2903, 0.0
        %v3072 = vmax.f32 %v2905, 0.0
        %v3073 = vmax.f32 %v2907, 0.0
        %v3074 = vmax.f32 %v2909, 0.0
        %v3075 = vmax.f32 %v2913, 0.0
        %v3076 = vmax.f32 %v2915, 0.0
        %v3077 = vmax.f32 %v2917, 0.0
        %v3078 = vmax.f32 %v2919, 0.0
        %v3079 = vmax.f32 %v2923, 0.0
        %v3080 = vmax.f32 %v2925, 0.0
        %v3081 = vmax.f32 %v2927, 0.0
        %v3082 = vmax.f32 %v2929, 0.0
        %v3083 = vmax.f32 %v2933, 0.0
        %v3084 = vmax.f32 %v2935, 0.0
        %v3085 = vmax.f32 %v2937, 0.0
        %v3086 = vmax.f32 %v2939, 0.0
        %v3087 = vmax.f32 %v2943, 0.0
        %v3088 = vmax.f32 %v2945, 0.0
        %v3089 = vmax.f32 %v2947, 0.0
        %v3090 = vmax.f32 %v2949, 0.0
        %v3091 = vmax.f32 %v2953, 0.0
        %v3092 = vmax.f32 %v2955, 0.0
        %v3093 = vmax.f32 %v2957, 0.0
        %v3094 = vmax.f32 %v2959, 0.0
        %v3095 = vmax.f32 %v2963, 0.0
        %v3096 = vmax.f32 %v2965, 0.0
        %v3097 = vmax.f32 %v2967, 0.0
        %v3098 = vmax.f32 %v2969, 0.0
        %v3099 = vpack.c.bf16 %v2973, %v2971
        %v3100 = vpack.c.bf16 %v2974, %v2972
        %v3101 = vpack.c.bf16 %v2977, %v2975
        %v3102 = vpack.c.bf16 %v2978, %v2976
        %v3103 = vpack.c.bf16 %v2981, %v2979
        %v3104 = vpack.c.bf16 %v2982, %v2980
        %v3105 = vpack.c.bf16 %v2985, %v2983
        %v3106 = vpack.c.bf16 %v2986, %v2984
        %v3107 = vpack.c.bf16 %v2989, %v2987
        %v3108 = vpack.c.bf16 %v2990, %v2988
        %v3109 = vpack.c.bf16 %v2993, %v2991
        %v3110 = vpack.c.bf16 %v2994, %v2992
        %v3111 = vpack.c.bf16 %v2997, %v2995
        %v3112 = vpack.c.bf16 %v2998, %v2996
        %v3113 = vpack.c.bf16 %v3001, %v2999
        %v3114 = vpack.c.bf16 %v3002, %v3000
        %v3115 = vpack.c.bf16 %v3005, %v3003
        %v3116 = vpack.c.bf16 %v3006, %v3004
        %v3117 = vpack.c.bf16 %v3009, %v3007
        %v3118 = vpack.c.bf16 %v3010, %v3008
        %v3119 = vpack.c.bf16 %v3013, %v3011
        %v3120 = vpack.c.bf16 %v3014, %v3012
        %v3121 = vpack.c.bf16 %v3017, %v3015
        %v3122 = vpack.c.bf16 %v3018, %v3016
        %v3123 = vpack.c.bf16 %v3021, %v3019
        %v3124 = vpack.c.bf16 %v3022, %v3020
        %v3125 = vpack.c.bf16 %v3025, %v3023
        %v3126 = vpack.c.bf16 %v3026, %v3024
        %v3127 = vpack.c.bf16 %v3029, %v3027
        %v3128 = vpack.c.bf16 %v3030, %v3028
        %v3129 = vpack.c.bf16 %v3033, %v3031
        %v3130 = vpack.c.bf16 %v3034, %v3032
        %v3131 = vpack.c.bf16 %v3037, %v3035
        %v3132 = vpack.c.bf16 %v3038, %v3036
        %v3133 = vpack.c.bf16 %v3041, %v3039
        %v3134 = vpack.c.bf16 %v3042, %v3040
        %v3135 = vpack.c.bf16 %v3045, %v3043
        %v3136 = vpack.c.bf16 %v3046, %v3044
        %v3137 = vpack.c.bf16 %v3049, %v3047
        %v3138 = vpack.c.bf16 %v3050, %v3048
        %v3139 = vpack.c.bf16 %v3053, %v3051
        %v3140 = vpack.c.bf16 %v3054, %v3052
        %v3141 = vpack.c.bf16 %v3057, %v3055
        %v3142 = vpack.c.bf16 %v3058, %v3056
        %v3143 = vpack.c.bf16 %v3061, %v3059
        %v3144 = vpack.c.bf16 %v3062, %v3060
        %v3145 = vpack.c.bf16 %v3065, %v3063
        %v3146 = vpack.c.bf16 %v3066, %v3064
        %v3147 = vpack.c.bf16 %v3069, %v3067
        %v3148 = vpack.c.bf16 %v3070, %v3068
        %v3149 = vpack.c.bf16 %v3073, %v3071
        %v3150 = vpack.c.bf16 %v3074, %v3072
        %v3151 = vpack.c.bf16 %v3077, %v3075
        %v3152 = vpack.c.bf16 %v3078, %v3076
        %v3153 = vpack.c.bf16 %v3081, %v3079
        %v3154 = vpack.c.bf16 %v3082, %v3080
        %v3155 = vpack.c.bf16 %v3085, %v3083
        %v3156 = vpack.c.bf16 %v3086, %v3084
        %v3157 = vpack.c.bf16 %v3089, %v3087
        %v3158 = vpack.c.bf16 %v3090, %v3088
        %v3159 = vpack.c.bf16 %v3093, %v3091
        %v3160 = vpack.c.bf16 %v3094, %v3092
        %v3161 = vpack.c.bf16 %v3097, %v3095
        %v3162 = vpack.c.bf16 %v3098, %v3096
        %v3163 = vld [vmem:[#allocation6] sm:$0xff]
        %v3164 = vld [vmem:[#allocation6 + $0x8] sm:$0xff]
        %v3165 = vld [vmem:[#allocation6 + $0x10] sm:$0xff]
        %v3166 = vld [vmem:[#allocation6 + $0x18] sm:$0xff]
        %v3167 = vld [vmem:[#allocation6 + $0x20] sm:$0xff]
        %v3168 = vld [vmem:[#allocation6 + $0x28] sm:$0xff]
        %v3169 = vld [vmem:[#allocation6 + $0x30] sm:$0xff]
        %v3170 = vld [vmem:[#allocation6 + $0x38] sm:$0xff]
        %v3171 = vld [vmem:[#allocation6 + $0x40] sm:$0xff]
        %v3172 = vld [vmem:[#allocation6 + $0x48] sm:$0xff]
        %v3173 = vld [vmem:[#allocation6 + $0x50] sm:$0xff]
        %v3174 = vld [vmem:[#allocation6 + $0x58] sm:$0xff]
        %v3175 = vld [vmem:[#allocation6 + $0x60] sm:$0xff]
        %v3176 = vld [vmem:[#allocation6 + $0x68] sm:$0xff]
        %v3177 = vld [vmem:[#allocation6 + $0x70] sm:$0xff]
        %v3178 = vld [vmem:[#allocation6 + $0x78] sm:$0xff]
        %v3179 = vld [vmem:[#allocation6 + $0x80] sm:$0xff]
        %v3180 = vld [vmem:[#allocation6 + $0x88] sm:$0xff]
        %v3181 = vld [vmem:[#allocation6 + $0x90] sm:$0xff]
        %v3182 = vld [vmem:[#allocation6 + $0x98] sm:$0xff]
        %v3183 = vld [vmem:[#allocation6 + $0xa0] sm:$0xff]
        %v3184 = vld [vmem:[#allocation6 + $0xa8] sm:$0xff]
        %v3185 = vld [vmem:[#allocation6 + $0xb0] sm:$0xff]
        %v3186 = vld [vmem:[#allocation6 + $0xb8] sm:$0xff]
        %v3187 = vld [vmem:[#allocation6 + $0xc0] sm:$0xff]
        %v3188 = vld [vmem:[#allocation6 + $0xc8] sm:$0xff]
        %v3189 = vld [vmem:[#allocation6 + $0xd0] sm:$0xff]
        %v3190 = vld [vmem:[#allocation6 + $0xd8] sm:$0xff]
        %v3191 = vld [vmem:[#allocation6 + $0xe0] sm:$0xff]
        %v3192 = vld [vmem:[#allocation6 + $0xe8] sm:$0xff]
        %v3193 = vld [vmem:[#allocation6 + $0xf0] sm:$0xff]
        %v3194 = vld [vmem:[#allocation6 + $0xf8] sm:$0xff]
        %v3195 = vpack.c.bf16 %v3164, %v3163
        %v3196 = vpack.c.bf16 %v3166, %v3165
        %v3197 = vpack.c.bf16 %v3168, %v3167
        %v3198 = vpack.c.bf16 %v3170, %v3169
        %v3199 = vpack.c.bf16 %v3172, %v3171
        %v3200 = vpack.c.bf16 %v3174, %v3173
        %v3201 = vpack.c.bf16 %v3176, %v3175
        %v3202 = vpack.c.bf16 %v3178, %v3177
        %v3203 = vpack.c.bf16 %v3180, %v3179
        %v3204 = vpack.c.bf16 %v3182, %v3181
        %v3205 = vpack.c.bf16 %v3184, %v3183
        %v3206 = vpack.c.bf16 %v3186, %v3185
        %v3207 = vpack.c.bf16 %v3188, %v3187
        %v3208 = vpack.c.bf16 %v3190, %v3189
        %v3209 = vpack.c.bf16 %v3192, %v3191
        %v3210 = vpack.c.bf16 %v3194, %v3193
        %v3211 = vld [vmem:[%s11] sm:$0x1]
        %v3213 = vlaneseq
        %v3214 = vshrl.u32 %v3213, 7
        %v3215 = vsub.s32 0, %v3214
        %v3216 = vrot.slane %v3211, %v3215
        %3218 = vmatprep.subr.bf16.mxu0 0
        %3219 = vmatpush1.bf16.msra.mxu0 %v3195
        %3220 = vmatprep.subr.bf16.mxu0 0
        %3221 = vmatpush1.bf16.msra.mxu0 %v3196
        %3222 = vmatprep.subr.bf16.mxu0 0
        %3223 = vmatpush1.bf16.msra.mxu0 %v3197
        %3224 = vmatprep.subr.bf16.mxu0 0
        %3225 = vmatpush1.bf16.msra.mxu0 %v3198
        %3226 = vmatprep.subr.bf16.mxu0 0
        %3227 = vmatpush1.bf16.msra.mxu0 %v3199
        %3228 = vmatprep.subr.bf16.mxu0 0
        %3229 = vmatpush1.bf16.msra.mxu0 %v3200
        %3230 = vmatprep.subr.bf16.mxu0 0
        %3231 = vmatpush1.bf16.msra.mxu0 %v3201
        %3232 = vmatprep.subr.bf16.mxu0 0
        %3233 = vmatpush1.bf16.msra.mxu0 %v3202
        %3234 = vmatprep.subr.bf16.mxu0 0
        %3235 = vmatpush1.bf16.msra.mxu0 %v3203
        %3236 = vmatprep.subr.bf16.mxu0 0
        %3237 = vmatpush1.bf16.msra.mxu0 %v3204
        %3238 = vmatprep.subr.bf16.mxu0 0
        %3239 = vmatpush1.bf16.msra.mxu0 %v3205
        %3240 = vmatprep.subr.bf16.mxu0 0
        %3241 = vmatpush1.bf16.msra.mxu0 %v3206
        %3242 = vmatprep.subr.bf16.mxu0 0
        %3243 = vmatpush1.bf16.msra.mxu0 %v3207
        %3244 = vmatprep.subr.bf16.mxu0 0
        %3245 = vmatpush1.bf16.msra.mxu0 %v3208
        %3246 = vmatprep.subr.bf16.mxu0 0
        %3247 = vmatpush1.bf16.msra.mxu0 %v3209
        %3248 = vmatprep.subr.bf16.mxu0 0
        %3249 = vmatpush1.bf16.msra.mxu0 %v3210
        %3250 = vmatprep.mubr.bf16.mxu0 %v3100
        %3251 = vmatmul.mubr.bf16.gmra.mrb[0].mxu0 %v3099
        %v3252 = vpop.f32.mrb[0].mxu0
        %v3253 = vadd.f32 %v3216, %v3252
        %v3254 = vpop.f32.mrb[0].mxu0
        %v3255 = vpop.f32.mrb[0].mxu0
        %v3256 = vadd.f32 %v3216, %v3255
        %v3257 = vpop.f32.mrb[0].mxu0
        %3258 = vmatprep.mubr.bf16.mxu0 %v3102
        %3259 = vmatmul.mubr.bf16.gmra.mrb[0].mxu0 %v3101
        %v3260 = vpop.f32.mrb[0].mxu0
        %v3261 = vadd.f32 %v3216, %v3260
        %v3262 = vpop.f32.mrb[0].mxu0
        %v3263 = vpop.f32.mrb[0].mxu0
        %v3264 = vadd.f32 %v3216, %v3263
        %v3265 = vpop.f32.mrb[0].mxu0
        %3266 = vmatprep.mubr.bf16.mxu0 %v3104
        %3267 = vmatmul.mubr.bf16.gmra.mrb[0].mxu0 %v3103
        %v3268 = vpop.f32.mrb[0].mxu0
        %v3269 = vadd.f32 %v3216, %v3268
        %v3270 = vpop.f32.mrb[0].mxu0
        %v3271 = vpop.f32.mrb[0].mxu0
        %v3272 = vadd.f32 %v3216, %v3271
        %v3273 = vpop.f32.mrb[0].mxu0
        %3274 = vmatprep.mubr.bf16.mxu0 %v3106
        %3275 = vmatmul.mubr.bf16.gmra.mrb[0].mxu0 %v3105
        %v3276 = vpop.f32.mrb[0].mxu0
        %v3277 = vadd.f32 %v3216, %v3276
        %v3278 = vpop.f32.mrb[0].mxu0
        %v3279 = vpop.f32.mrb[0].mxu0
        %v3280 = vadd.f32 %v3216, %v3279
        %v3281 = vpop.f32.mrb[0].mxu0
        %3282 = vmatprep.mubr.bf16.mxu0 %v3108
        %3283 = vmatmul.mubr.bf16.gmra.mrb[0].mxu0 %v3107
        %v3284 = vpop.f32.mrb[0].mxu0
        %v3285 = vadd.f32 %v3216, %v3284
        %v3286 = vpop.f32.mrb[0].mxu0
        %v3287 = vpop.f32.mrb[0].mxu0
        %v3288 = vadd.f32 %v3216, %v3287
        %v3289 = vpop.f32.mrb[0].mxu0
        %3290 = vmatprep.mubr.bf16.mxu0 %v3110
        %3291 = vmatmul.mubr.bf16.gmra.mrb[0].mxu0 %v3109
        %v3292 = vpop.f32.mrb[0].mxu0
        %v3293 = vadd.f32 %v3216, %v3292
        %v3294 = vpop.f32.mrb[0].mxu0
        %v3295 = vpop.f32.mrb[0].mxu0
        %v3296 = vadd.f32 %v3216, %v3295
        %v3297 = vpop.f32.mrb[0].mxu0
        %3298 = vmatprep.mubr.bf16.mxu0 %v3112
        %3299 = vmatmul.mubr.bf16.gmra.mrb[0].mxu0 %v3111
        %v3300 = vpop.f32.mrb[0].mxu0
        %v3301 = vadd.f32 %v3216, %v3300
        %v3302 = vpop.f32.mrb[0].mxu0
        %v3303 = vpop.f32.mrb[0].mxu0
        %v3304 = vadd.f32 %v3216, %v3303
        %v3305 = vpop.f32.mrb[0].mxu0
        %3306 = vmatprep.mubr.bf16.mxu0 %v3114
        %3307 = vmatmul.mubr.bf16.gmra.mrb[0].mxu0 %v3113
        %v3308 = vpop.f32.mrb[0].mxu0
        %v3309 = vadd.f32 %v3216, %v3308
        %v3310 = vpop.f32.mrb[0].mxu0
        %v3311 = vpop.f32.mrb[0].mxu0
        %v3312 = vadd.f32 %v3216, %v3311
        %v3313 = vpop.f32.mrb[0].mxu0
        %3314 = vmatprep.mubr.bf16.mxu0 %v3116
        %3315 = vmatmul.mubr.bf16.gmra.mrb[0].mxu0 %v3115
        %v3316 = vpop.f32.mrb[0].mxu0
        %v3317 = vadd.f32 %v3216, %v3316
        %v3318 = vpop.f32.mrb[0].mxu0
        %v3319 = vpop.f32.mrb[0].mxu0
        %v3320 = vadd.f32 %v3216, %v3319
        %v3321 = vpop.f32.mrb[0].mxu0
        %3322 = vmatprep.mubr.bf16.mxu0 %v3118
        %3323 = vmatmul.mubr.bf16.gmra.mrb[0].mxu0 %v3117
        %v3324 = vpop.f32.mrb[0].mxu0
        %v3325 = vadd.f32 %v3216, %v3324
        %v3326 = vpop.f32.mrb[0].mxu0
        %v3327 = vpop.f32.mrb[0].mxu0
        %v3328 = vadd.f32 %v3216, %v3327
        %v3329 = vpop.f32.mrb[0].mxu0
        %3330 = vmatprep.mubr.bf16.mxu0 %v3120
        %3331 = vmatmul.mubr.bf16.gmra.mrb[0].mxu0 %v3119
        %v3332 = vpop.f32.mrb[0].mxu0
        %v3333 = vadd.f32 %v3216, %v3332
        %v3334 = vpop.f32.mrb[0].mxu0
        %v3335 = vpop.f32.mrb[0].mxu0
        %v3336 = vadd.f32 %v3216, %v3335
        %v3337 = vpop.f32.mrb[0].mxu0
        %3338 = vmatprep.mubr.bf16.mxu0 %v3122
        %3339 = vmatmul.mubr.bf16.gmra.mrb[0].mxu0 %v3121
        %v3340 = vpop.f32.mrb[0].mxu0
        %v3341 = vadd.f32 %v3216, %v3340
        %v3342 = vpop.f32.mrb[0].mxu0
        %v3343 = vpop.f32.mrb[0].mxu0
        %v3344 = vadd.f32 %v3216, %v3343
        %v3345 = vpop.f32.mrb[0].mxu0
        %3346 = vmatprep.mubr.bf16.mxu0 %v3124
        %3347 = vmatmul.mubr.bf16.gmra.mrb[0].mxu0 %v3123
        %v3348 = vpop.f32.mrb[0].mxu0
        %v3349 = vadd.f32 %v3216, %v3348
        %v3350 = vpop.f32.mrb[0].mxu0
        %v3351 = vpop.f32.mrb[0].mxu0
        %v3352 = vadd.f32 %v3216, %v3351
        %v3353 = vpop.f32.mrb[0].mxu0
        %3354 = vmatprep.mubr.bf16.mxu0 %v3126
        %3355 = vmatmul.mubr.bf16.gmra.mrb[0].mxu0 %v3125
        %v3356 = vpop.f32.mrb[0].mxu0
        %v3357 = vadd.f32 %v3216, %v3356
        %v3358 = vpop.f32.mrb[0].mxu0
        %v3359 = vpop.f32.mrb[0].mxu0
        %v3360 = vadd.f32 %v3216, %v3359
        %v3361 = vpop.f32.mrb[0].mxu0
        %3362 = vmatprep.mubr.bf16.mxu0 %v3128
        %3363 = vmatmul.mubr.bf16.gmra.mrb[0].mxu0 %v3127
        %v3364 = vpop.f32.mrb[0].mxu0
        %v3365 = vadd.f32 %v3216, %v3364
        %v3366 = vpop.f32.mrb[0].mxu0
        %v3367 = vpop.f32.mrb[0].mxu0
        %v3368 = vadd.f32 %v3216, %v3367
        %v3369 = vpop.f32.mrb[0].mxu0
        %3370 = vmatprep.mubr.bf16.mxu0 %v3130
        %3371 = vmatmul.mubr.bf16.gmra.mrb[0].mxu0 %v3129
        %v3372 = vpop.f32.mrb[0].mxu0
        %v3373 = vadd.f32 %v3216, %v3372
        %v3374 = vpop.f32.mrb[0].mxu0
        %v3375 = vpop.f32.mrb[0].mxu0
        %v3376 = vadd.f32 %v3216, %v3375
        %v3377 = vpop.f32.mrb[0].mxu0
        %3378 = vmatprep.mubr.bf16.mxu0 %v3132
        %3379 = vmatmul.mubr.bf16.gmra.mrb[0].mxu0 %v3131
        %v3380 = vpop.f32.mrb[0].mxu0
        %v3381 = vadd.f32 %v3216, %v3380
        %v3382 = vpop.f32.mrb[0].mxu0
        %v3383 = vpop.f32.mrb[0].mxu0
        %v3384 = vadd.f32 %v3216, %v3383
        %v3385 = vpop.f32.mrb[0].mxu0
        %3386 = vmatprep.mubr.bf16.mxu0 %v3134
        %3387 = vmatmul.mubr.bf16.gmra.mrb[0].mxu0 %v3133
        %v3388 = vpop.f32.mrb[0].mxu0
        %v3389 = vadd.f32 %v3216, %v3388
        %v3390 = vpop.f32.mrb[0].mxu0
        %v3391 = vpop.f32.mrb[0].mxu0
        %v3392 = vadd.f32 %v3216, %v3391
        %v3393 = vpop.f32.mrb[0].mxu0
        %3394 = vmatprep.mubr.bf16.mxu0 %v3136
        %3395 = vmatmul.mubr.bf16.gmra.mrb[0].mxu0 %v3135
        %v3396 = vpop.f32.mrb[0].mxu0
        %v3397 = vadd.f32 %v3216, %v3396
        %v3398 = vpop.f32.mrb[0].mxu0
        %v3399 = vpop.f32.mrb[0].mxu0
        %v3400 = vadd.f32 %v3216, %v3399
        %v3401 = vpop.f32.mrb[0].mxu0
        %3402 = vmatprep.mubr.bf16.mxu0 %v3138
        %3403 = vmatmul.mubr.bf16.gmra.mrb[0].mxu0 %v3137
        %v3404 = vpop.f32.mrb[0].mxu0
        %v3405 = vadd.f32 %v3216, %v3404
        %v3406 = vpop.f32.mrb[0].mxu0
        %v3407 = vpop.f32.mrb[0].mxu0
        %v3408 = vadd.f32 %v3216, %v3407
        %v3409 = vpop.f32.mrb[0].mxu0
        %3410 = vmatprep.mubr.bf16.mxu0 %v3140
        %3411 = vmatmul.mubr.bf16.gmra.mrb[0].mxu0 %v3139
        %v3412 = vpop.f32.mrb[0].mxu0
        %v3413 = vadd.f32 %v3216, %v3412
        %v3414 = vpop.f32.mrb[0].mxu0
        %v3415 = vpop.f32.mrb[0].mxu0
        %v3416 = vadd.f32 %v3216, %v3415
        %v3417 = vpop.f32.mrb[0].mxu0
        %3418 = vmatprep.mubr.bf16.mxu0 %v3142
        %3419 = vmatmul.mubr.bf16.gmra.mrb[0].mxu0 %v3141
        %v3420 = vpop.f32.mrb[0].mxu0
        %v3421 = vadd.f32 %v3216, %v3420
        %v3422 = vpop.f32.mrb[0].mxu0
        %v3423 = vpop.f32.mrb[0].mxu0
        %v3424 = vadd.f32 %v3216, %v3423
        %v3425 = vpop.f32.mrb[0].mxu0
        %3426 = vmatprep.mubr.bf16.mxu0 %v3144
        %3427 = vmatmul.mubr.bf16.gmra.mrb[0].mxu0 %v3143
        %v3428 = vpop.f32.mrb[0].mxu0
        %v3429 = vadd.f32 %v3216, %v3428
        %v3430 = vpop.f32.mrb[0].mxu0
        %v3431 = vpop.f32.mrb[0].mxu0
        %v3432 = vadd.f32 %v3216, %v3431
        %v3433 = vpop.f32.mrb[0].mxu0
        %3434 = vmatprep.mubr.bf16.mxu0 %v3146
        %3435 = vmatmul.mubr.bf16.gmra.mrb[0].mxu0 %v3145
        %v3436 = vpop.f32.mrb[0].mxu0
        %v3437 = vadd.f32 %v3216, %v3436
        %v3438 = vpop.f32.mrb[0].mxu0
        %v3439 = vpop.f32.mrb[0].mxu0
        %v3440 = vadd.f32 %v3216, %v3439
        %v3441 = vpop.f32.mrb[0].mxu0
        %3442 = vmatprep.mubr.bf16.mxu0 %v3148
        %3443 = vmatmul.mubr.bf16.gmra.mrb[0].mxu0 %v3147
        %v3444 = vpop.f32.mrb[0].mxu0
        %v3445 = vadd.f32 %v3216, %v3444
        %v3446 = vpop.f32.mrb[0].mxu0
        %v3447 = vpop.f32.mrb[0].mxu0
        %v3448 = vadd.f32 %v3216, %v3447
        %v3449 = vpop.f32.mrb[0].mxu0
        %3450 = vmatprep.mubr.bf16.mxu0 %v3150
        %3451 = vmatmul.mubr.bf16.gmra.mrb[0].mxu0 %v3149
        %v3452 = vpop.f32.mrb[0].mxu0
        %v3453 = vadd.f32 %v3216, %v3452
        %v3454 = vpop.f32.mrb[0].mxu0
        %v3455 = vpop.f32.mrb[0].mxu0
        %v3456 = vadd.f32 %v3216, %v3455
        %v3457 = vpop.f32.mrb[0].mxu0
        %3458 = vmatprep.mubr.bf16.mxu0 %v3152
        %3459 = vmatmul.mubr.bf16.gmra.mrb[0].mxu0 %v3151
        %v3460 = vpop.f32.mrb[0].mxu0
        %v3461 = vadd.f32 %v3216, %v3460
        %v3462 = vpop.f32.mrb[0].mxu0
        %v3463 = vpop.f32.mrb[0].mxu0
        %v3464 = vadd.f32 %v3216, %v3463
        %v3465 = vpop.f32.mrb[0].mxu0
        %3466 = vmatprep.mubr.bf16.mxu0 %v3154
        %3467 = vmatmul.mubr.bf16.gmra.mrb[0].mxu0 %v3153
        %v3468 = vpop.f32.mrb[0].mxu0
        %v3469 = vadd.f32 %v3216, %v3468
        %v3470 = vpop.f32.mrb[0].mxu0
        %v3471 = vpop.f32.mrb[0].mxu0
        %v3472 = vadd.f32 %v3216, %v3471
        %v3473 = vpop.f32.mrb[0].mxu0
        %3474 = vmatprep.mubr.bf16.mxu0 %v3156
        %3475 = vmatmul.mubr.bf16.gmra.mrb[0].mxu0 %v3155
        %v3476 = vpop.f32.mrb[0].mxu0
        %v3477 = vadd.f32 %v3216, %v3476
        %v3478 = vpop.f32.mrb[0].mxu0
        %v3479 = vpop.f32.mrb[0].mxu0
        %v3480 = vadd.f32 %v3216, %v3479
        %v3481 = vpop.f32.mrb[0].mxu0
        %3482 = vmatprep.mubr.bf16.mxu0 %v3158
        %3483 = vmatmul.mubr.bf16.gmra.mrb[0].mxu0 %v3157
        %v3484 = vpop.f32.mrb[0].mxu0
        %v3485 = vadd.f32 %v3216, %v3484
        %v3486 = vpop.f32.mrb[0].mxu0
        %v3487 = vpop.f32.mrb[0].mxu0
        %v3488 = vadd.f32 %v3216, %v3487
        %v3489 = vpop.f32.mrb[0].mxu0
        %3490 = vmatprep.mubr.bf16.mxu0 %v3160
        %3491 = vmatmul.mubr.bf16.gmra.mrb[0].mxu0 %v3159
        %v3492 = vpop.f32.mrb[0].mxu0
        %v3493 = vadd.f32 %v3216, %v3492
        %v3494 = vpop.f32.mrb[0].mxu0
        %v3495 = vpop.f32.mrb[0].mxu0
        %v3496 = vadd.f32 %v3216, %v3495
        %v3497 = vpop.f32.mrb[0].mxu0
        %3498 = vmatprep.mubr.bf16.mxu0 %v3162
        %3499 = vmatmul.mubr.bf16.gmra.mrb[0].mxu0 %v3161
        %v3500 = vpop.f32.mrb[0].mxu0
        %v3501 = vadd.f32 %v3216, %v3500
        %v3502 = vpop.f32.mrb[0].mxu0
        %v3503 = vpop.f32.mrb[0].mxu0
        %v3504 = vadd.f32 %v3216, %v3503
        %v3505 = vpop.f32.mrb[0].mxu0
        %3506 = vdwg.mxu0
        %v3507 = vtanh.pop %v3253
        %v3508 = vtanh.pop %v3256
        %v3509 = vtanh.pop %v3261
        %v3510 = vtanh.pop %v3264
        %v3511 = vtanh.pop %v3269
        %v3512 = vtanh.pop %v3272
        %v3513 = vtanh.pop %v3277
        %v3514 = vtanh.pop %v3280
        %v3515 = vtanh.pop %v3285
        %v3516 = vtanh.pop %v3288
        %v3517 = vtanh.pop %v3293
        %v3518 = vtanh.pop %v3296
        %v3519 = vtanh.pop %v3301
        %v3520 = vtanh.pop %v3304
        %v3521 = vtanh.pop %v3309
        %v3522 = vtanh.pop %v3312
        %v3523 = vtanh.pop %v3317
        %v3524 = vtanh.pop %v3320
        %v3525 = vtanh.pop %v3325
        %v3526 = vtanh.pop %v3328
        %v3527 = vtanh.pop %v3333
        %v3528 = vtanh.pop %v3336
        %v3529 = vtanh.pop %v3341
        %v3530 = vtanh.pop %v3344
        %v3531 = vtanh.pop %v3349
        %v3532 = vtanh.pop %v3352
        %v3533 = vtanh.pop %v3357
        %v3534 = vtanh.pop %v3360
        %v3535 = vtanh.pop %v3365
        %v3536 = vtanh.pop %v3368
        %v3537 = vtanh.pop %v3373
        %v3538 = vtanh.pop %v3376
        %v3539 = vtanh.pop %v3381
        %v3540 = vtanh.pop %v3384
        %v3541 = vtanh.pop %v3389
        %v3542 = vtanh.pop %v3392
        %v3543 = vtanh.pop %v3397
        %v3544 = vtanh.pop %v3400
        %v3545 = vtanh.pop %v3405
        %v3546 = vtanh.pop %v3408
        %v3547 = vtanh.pop %v3413
        %v3548 = vtanh.pop %v3416
        %v3549 = vtanh.pop %v3421
        %v3550 = vtanh.pop %v3424
        %v3551 = vtanh.pop %v3429
        %v3552 = vtanh.pop %v3432
        %v3553 = vtanh.pop %v3437
        %v3554 = vtanh.pop %v3440
        %v3555 = vtanh.pop %v3445
        %v3556 = vtanh.pop %v3448
        %v3557 = vtanh.pop %v3453
        %v3558 = vtanh.pop %v3456
        %v3559 = vtanh.pop %v3461
        %v3560 = vtanh.pop %v3464
        %v3561 = vtanh.pop %v3469
        %v3562 = vtanh.pop %v3472
        %v3563 = vtanh.pop %v3477
        %v3564 = vtanh.pop %v3480
        %v3565 = vtanh.pop %v3485
        %v3566 = vtanh.pop %v3488
        %v3567 = vtanh.pop %v3493
        %v3568 = vtanh.pop %v3496
        %v3569 = vtanh.pop %v3501
        %v3570 = vtanh.pop %v3504
        %v3571 = vstv %s447
        %v3572 = vmul.f32 %v3571, %v3507
        %v3573 = vmul.f32 %v3571, %v3508
        %v3574 = vmul.f32 %v3571, %v3509
        %v3575 = vmul.f32 %v3571, %v3510
        %v3576 = vmul.f32 %v3571, %v3511
        %v3577 = vmul.f32 %v3571, %v3512
        %v3578 = vmul.f32 %v3571, %v3513
        %v3579 = vmul.f32 %v3571, %v3514
        %v3580 = vmul.f32 %v3571, %v3515
        %v3581 = vmul.f32 %v3571, %v3516
        %v3582 = vmul.f32 %v3571, %v3517
        %v3583 = vmul.f32 %v3571, %v3518
        %v3584 = vmul.f32 %v3571, %v3519
        %v3585 = vmul.f32 %v3571, %v3520
        %v3586 = vmul.f32 %v3571, %v3521
        %v3587 = vmul.f32 %v3571, %v3522
        %v3588 = vmul.f32 %v3571, %v3523
        %v3589 = vmul.f32 %v3571, %v3524
        %v3590 = vmul.f32 %v3571, %v3525
        %v3591 = vmul.f32 %v3571, %v3526
        %v3592 = vmul.f32 %v3571, %v3527
        %v3593 = vmul.f32 %v3571, %v3528
        %v3594 = vmul.f32 %v3571, %v3529
        %v3595 = vmul.f32 %v3571, %v3530
        %v3596 = vmul.f32 %v3571, %v3531
        %v3597 = vmul.f32 %v3571, %v3532
        %v3598 = vmul.f32 %v3571, %v3533
        %v3599 = vmul.f32 %v3571, %v3534
        %v3600 = vmul.f32 %v3571, %v3535
        %v3601 = vmul.f32 %v3571, %v3536
        %v3602 = vmul.f32 %v3571, %v3537
        %v3603 = vmul.f32 %v3571, %v3538
        %v3604 = vmul.f32 %v3571, %v3539
        %v3605 = vmul.f32 %v3571, %v3540
        %v3606 = vmul.f32 %v3571, %v3541
        %v3607 = vmul.f32 %v3571, %v3542
        %v3608 = vmul.f32 %v3571, %v3543
        %v3609 = vmul.f32 %v3571, %v3544
        %v3610 = vmul.f32 %v3571, %v3545
        %v3611 = vmul.f32 %v3571, %v3546
        %v3612 = vmul.f32 %v3571, %v3547
        %v3613 = vmul.f32 %v3571, %v3548
        %v3614 = vmul.f32 %v3571, %v3549
        %v3615 = vmul.f32 %v3571, %v3550
        %v3616 = vmul.f32 %v3571, %v3551
        %v3617 = vmul.f32 %v3571, %v3552
        %v3618 = vmul.f32 %v3571, %v3553
        %v3619 = vmul.f32 %v3571, %v3554
        %v3620 = vmul.f32 %v3571, %v3555
        %v3621 = vmul.f32 %v3571, %v3556
        %v3622 = vmul.f32 %v3571, %v3557
        %v3623 = vmul.f32 %v3571, %v3558
        %v3624 = vmul.f32 %v3571, %v3559
        %v3625 = vmul.f32 %v3571, %v3560
        %v3626 = vmul.f32 %v3571, %v3561
        %v3627 = vmul.f32 %v3571, %v3562
        %v3628 = vmul.f32 %v3571, %v3563
        %v3629 = vmul.f32 %v3571, %v3564
        %v3630 = vmul.f32 %v3571, %v3565
        %v3631 = vmul.f32 %v3571, %v3566
        %v3632 = vmul.f32 %v3571, %v3567
        %v3633 = vmul.f32 %v3571, %v3568
        %v3634 = vmul.f32 %v3571, %v3569
        %v3635 = vmul.f32 %v3571, %v3570
        %3636 = vst [vmem:[%s438] sm:$0xff] %v3572
        %3637 = vst [vmem:[%s438 + $0x8] sm:$0xff] %v3573
        %3638 = vst [vmem:[%s438 + $0x10] sm:$0xff] %v3574
        %3639 = vst [vmem:[%s438 + $0x18] sm:$0xff] %v3575
        %3640 = vst [vmem:[%s438 + $0x20] sm:$0xff] %v3576
        %3641 = vst [vmem:[%s438 + $0x28] sm:$0xff] %v3577
        %3642 = vst [vmem:[%s438 + $0x30] sm:$0xff] %v3578
        %3643 = vst [vmem:[%s438 + $0x38] sm:$0xff] %v3579
        %3644 = vst [vmem:[%s438 + $0x40] sm:$0xff] %v3580
        %3645 = vst [vmem:[%s438 + $0x48] sm:$0xff] %v3581
        %3646 = vst [vmem:[%s438 + $0x50] sm:$0xff] %v3582
        %3647 = vst [vmem:[%s438 + $0x58] sm:$0xff] %v3583
        %3648 = vst [vmem:[%s438 + $0x60] sm:$0xff] %v3584
        %3649 = vst [vmem:[%s438 + $0x68] sm:$0xff] %v3585
        %3650 = vst [vmem:[%s438 + $0x70] sm:$0xff] %v3586
        %3651 = vst [vmem:[%s438 + $0x78] sm:$0xff] %v3587
        %3652 = vst [vmem:[%s438 + $0x80] sm:$0xff] %v3588
        %3653 = vst [vmem:[%s438 + $0x88] sm:$0xff] %v3589
        %3654 = vst [vmem:[%s438 + $0x90] sm:$0xff] %v3590
        %3655 = vst [vmem:[%s438 + $0x98] sm:$0xff] %v3591
        %3656 = vst [vmem:[%s438 + $0xa0] sm:$0xff] %v3592
        %3657 = vst [vmem:[%s438 + $0xa8] sm:$0xff] %v3593
        %3658 = vst [vmem:[%s438 + $0xb0] sm:$0xff] %v3594
        %3659 = vst [vmem:[%s438 + $0xb8] sm:$0xff] %v3595
        %3660 = vst [vmem:[%s438 + $0xc0] sm:$0xff] %v3596
        %3661 = vst [vmem:[%s438 + $0xc8] sm:$0xff] %v3597
        %3662 = vst [vmem:[%s438 + $0xd0] sm:$0xff] %v3598
        %3663 = vst [vmem:[%s438 + $0xd8] sm:$0xff] %v3599
        %3664 = vst [vmem:[%s438 + $0xe0] sm:$0xff] %v3600
        %3665 = vst [vmem:[%s438 + $0xe8] sm:$0xff] %v3601
        %3666 = vst [vmem:[%s438 + $0xf0] sm:$0xff] %v3602
        %3667 = vst [vmem:[%s438 + $0xf8] sm:$0xff] %v3603
        %3668 = vst [vmem:[%s438 + $0x100] sm:$0xff] %v3604
        %3669 = vst [vmem:[%s438 + $0x108] sm:$0xff] %v3605
        %3670 = vst [vmem:[%s438 + $0x110] sm:$0xff] %v3606
        %3671 = vst [vmem:[%s438 + $0x118] sm:$0xff] %v3607
        %3672 = vst [vmem:[%s438 + $0x120] sm:$0xff] %v3608
        %3673 = vst [vmem:[%s438 + $0x128] sm:$0xff] %v3609
        %3674 = vst [vmem:[%s438 + $0x130] sm:$0xff] %v3610
        %3675 = vst [vmem:[%s438 + $0x138] sm:$0xff] %v3611
        %3676 = vst [vmem:[%s438 + $0x140] sm:$0xff] %v3612
        %3677 = vst [vmem:[%s438 + $0x148] sm:$0xff] %v3613
        %3678 = vst [vmem:[%s438 + $0x150] sm:$0xff] %v3614
        %3679 = vst [vmem:[%s438 + $0x158] sm:$0xff] %v3615
        %3680 = vst [vmem:[%s438 + $0x160] sm:$0xff] %v3616
        %3681 = vst [vmem:[%s438 + $0x168] sm:$0xff] %v3617
        %3682 = vst [vmem:[%s438 + $0x170] sm:$0xff] %v3618
        %3683 = vst [vmem:[%s438 + $0x178] sm:$0xff] %v3619
        %3684 = vst [vmem:[%s438 + $0x180] sm:$0xff] %v3620
        %3685 = vst [vmem:[%s438 + $0x188] sm:$0xff] %v3621
        %3686 = vst [vmem:[%s438 + $0x190] sm:$0xff] %v3622
        %3687 = vst [vmem:[%s438 + $0x198] sm:$0xff] %v3623
        %3688 = vst [vmem:[%s438 + $0x1a0] sm:$0xff] %v3624
        %3689 = vst [vmem:[%s438 + $0x1a8] sm:$0xff] %v3625
        %3690 = vst [vmem:[%s438 + $0x1b0] sm:$0xff] %v3626
        %3691 = vst [vmem:[%s438 + $0x1b8] sm:$0xff] %v3627
        %3692 = vst [vmem:[%s438 + $0x1c0] sm:$0xff] %v3628
        %3693 = vst [vmem:[%s438 + $0x1c8] sm:$0xff] %v3629
        %3694 = vst [vmem:[%s438 + $0x1d0] sm:$0xff] %v3630
        %3695 = vst [vmem:[%s438 + $0x1d8] sm:$0xff] %v3631
        %3696 = vst [vmem:[%s438 + $0x1e0] sm:$0xff] %v3632
        %3697 = vst [vmem:[%s438 + $0x1e8] sm:$0xff] %v3633
        %3698 = vst [vmem:[%s438 + $0x1f0] sm:$0xff] %v3634
        %3699 = vst [vmem:[%s438 + $0x1f8] sm:$0xff] %v3635
        %s3700 = sand.u32 %s294, 1
        %s3701 = scalar_lea.sflag [#allocation5], %s3700
        %s3702 = sand.u32 %s294, 1
        %s3703 = smul.addr %s3702, 512
        %s3704 = scalar_lea.vmem [#allocation8], %s3703
        // Predicated region
        $region77: #{tpu_custom_call.1} parent=67 // pred_check
          %p3705 = pneg %p304
        $region78: #{tpu_custom_call.1} parent=67 // pred_check_branch
          %3707 = sbr.rel (%p3705) target = $region80
        $region79: #{tpu_custom_call.1} parent=67 // pred_region
          %s3708 = smul.u32 64, %s29
          %s3710 = ssub.s32 8192, 8192
          %3711 = vsyncadd %s3701, %s3710
          %s3712 = smul.addr %s3708, 128
          %s3713 = scalar_lea.hbm %s12, %s3712
          %s3714 = sshll.u32 %s3704, 4
          %s3715 = int_to_ptr.vmem [resolvable:$true] %s3714
          %3720 = dma.vmem_to_hbm [thread:$0]  %s3715, 8192, %s3713, %s3701, 128, 128, 8
        $region80: #{tpu_custom_call.1} parent=67 // pred_fallthru
          _
      $region68: #{tpu_custom_call.1} parent=5 // pred_fallthru
        _
      %p3721 = scmp.le.s32.totalorder 2, %s24
      // Predicated region
      $region81: #{tpu_custom_call.1} parent=5 // pred_check
        %p3722 = pneg %p3721
      $region82: #{tpu_custom_call.1} parent=5 // pred_check_branch
        %3724 = sbr.rel (%p3722) target = $region84
      $region83: #{tpu_custom_call.1} parent=5 // pred_region
        %s3725 = ssub.s32 %s24, 2
        // Predicated region
        $region85: #{tpu_custom_call.1} parent=83 // pred_check
          %p3726 = pneg %p310
        $region86: #{tpu_custom_call.1} parent=83 // pred_check_branch
          %3728 = sbr.rel (%p3726) target = $region88
        $region87: #{tpu_custom_call.1} parent=83 // pred_region
          %s3729 = sand.u32 %s295, 1
          %s3730 = scalar_lea.sflag [#allocation5], %s3729
          %s3731 = sand.u32 %s295, 1
          %s3732 = smul.addr %s3731, 512
          %s3733 = scalar_lea.vmem [#allocation8], %s3732
          %3734 = dma.done %s3730, 8192
        $region88: #{tpu_custom_call.1} parent=83 // pred_fallthru
          _
      $region84: #{tpu_custom_call.1} parent=5 // pred_fallthru
        _
    $region6: #{tpu_custom_call.1} parent=1 // loop_footer
      %s28 = sadd.s32 1, %s24
    $region7: #{tpu_custom_call.1} parent=1 // loop_footer_branch
      %23 = sbr.rel target = $region3
    $region8: #{tpu_custom_call.1} parent=1 // loop_exit
      _
    %3735 = vsyncpa [#allocation4], 1
    %s3736 = scalar_lea.sflag [#allocation4], 1
    %3737 = vsyncpa %s3736, 1
    %3738 = vsyncpa [#allocation7], 1
    %3739 = vsyncpa [#allocation5], 1
    %s3740 = scalar_lea.sflag [#allocation5], 1
    %3741 = vsyncpa %s3740, 1

</llo_original>
